<compile_context>
chip_gen: v5e
topology: v5e:2x2
jax: 0.10.0
libtpu: 0.0.40
codegen_flags: <defaults>
</compile_context>

<pallas_src>
import functools

import jax
import jax.numpy as jnp
from jax import lax
from jax.experimental import pallas as pl
from jax.experimental.pallas import tpu as pltpu


def _rdb_conv_kernel(x_conv_ref, x_pass_ref, w_ref, b_ref, o_ref, *,
                     S, M, Cin, G, N, H, Hp, W):
    """Fused 3x3 conv + bias + ReLU + channel concat, batch folded into M.

    x_conv_ref: (Lf, Cin)      bf16  zero-padded input, spatially flattened
                                     with row stride S (>= W+2, multiple of 16).
    x_pass_ref: (N*H*W, Cin)   f32   original unpadded input, NHWC-flat.
    w_ref:      (9*Cin, G)     bf16  HWIO weights; tap t=(dy*3+dx) occupies
                                     rows [t*Cin, (t+1)*Cin).
    b_ref:      (1, G)         f32
    o_ref:      (N*H*W, Cin+G) f32   dense NHWC-flat output (no junk columns).
    """
    # --- 3x3 conv as 9 aligned matmuls (K = Cin) into 3 f32 accumulators ---
    # accs[dx][b] = sum_dy x_flat[b + dy*S] @ W[dy, dx]
    accs = [None, None, None]
    for dy in range(3):
        lhs = x_conv_ref[dy * S:dy * S + M, :]        # 16-aligned bf16 slice
        for dx in range(3):
            t = dy * 3 + dx
            p = jnp.dot(lhs, w_ref[t * Cin:(t + 1) * Cin, :],
                        preferred_element_type=jnp.float32)
            accs[dx] = p if accs[dx] is None else accs[dx] + p

    # --- fold the dx shifts once, on the f32 accumulators ---
    # conv[b] = accs[0][b] + accs[1][b+1] + accs[2][b+2]
    Mv = M - 2
    conv = accs[0][:Mv, :] + accs[1][1:1 + Mv, :] + accs[2][2:2 + Mv, :]
    conv = jnp.maximum(conv + b_ref[...], 0.0)        # f32 bias + ReLU

    # --- concat: passthrough channels are a straight copy of the input ---
    o_ref[:, :Cin] = x_pass_ref[...]

    # --- drop padding columns in-kernel: aligned (W, G) row-block stores ---
    for n in range(N):
        for h in range(H):
            src = n * Hp * S + h * S                  # multiple of S (>= 16)
            dst = (n * H + h) * W                     # multiple of W
            o_ref[dst:dst + W, Cin:] = conv[src:src + W, :]


def rdb_conv_forward(x_nchw, w_hwio, b):
    """RDB_Conv.forward: NCHW in -> NCHW out of shape (N, Cin + G, H, W)."""
    N, Cin, H, W = x_nchw.shape
    G = w_hwio.shape[-1]
    assert w_hwio.shape[:3] == (3, 3, Cin)
    Hp = H + 2
    S = ((W + 2 + 15) // 16) * 16     # padded row stride, bf16-tile aligned
    Lf = N * Hp * S                   # flat padded length (multiple of 16)
    M = Lf - 2 * S                    # matmul M rows (valid bases + junk cols)
    Ctot = Cin + G

    # Input-side layout plumbing only: NCHW -> NHWC, zero-pad to (Hp, S),
    # flatten spatially, cast the conv operand to bf16 once.
    x_nhwc = jnp.transpose(x_nchw, (0, 2, 3, 1))
    x_conv = jnp.pad(x_nhwc, ((0, 0), (1, 1), (1, S - W - 1), (0, 0)))
    x_conv = x_conv.reshape(Lf, Cin).astype(jnp.bfloat16)
    x_pass = x_nhwc.reshape(N * H * W, Cin)           # f32 passthrough

    w_flat = w_hwio.reshape(9 * Cin, G).astype(jnp.bfloat16)
    b2 = b.reshape(1, G).astype(jnp.float32)

    kernel = functools.partial(_rdb_conv_kernel, S=S, M=M, Cin=Cin, G=G,
                               N=N, H=H, Hp=Hp, W=W)

    cost = pl.CostEstimate(
        flops=2 * N * H * W * 9 * Cin * G,
        transcendentals=0,
        bytes_accessed=(x_conv.size * 2 + x_pass.size * 4 + w_flat.size * 2
                        + b2.size * 4 + N * H * W * Ctot * 4))

    out_flat = pl.pallas_call(
        kernel,
        out_shape=jax.ShapeDtypeStruct((N * H * W, Ctot), x_nchw.dtype),
        grid=(1,),
        in_specs=[
            pl.BlockSpec((Lf, Cin), lambda i: (0, 0)),
            pl.BlockSpec((N * H * W, Cin), lambda i: (0, 0)),
            pl.BlockSpec((9 * Cin, G), lambda i: (0, 0)),
            pl.BlockSpec((1, G), lambda i: (0, 0)),
        ],
        out_specs=pl.BlockSpec((N * H * W, Ctot), lambda i: (0, 0)),
        compiler_params=pltpu.CompilerParams(
            dimension_semantics=("arbitrary",)),
        cost_estimate=cost,
    )(x_conv, x_pass, w_flat, b2)

    # NHWC-flat -> NCHW, only to match the PyTorch contract (a real pipeline
    # would consume the dense (N, H, W, Cin+G) view directly).
    out = out_flat.reshape(N, H, W, Ctot)
    return jnp.transpose(out, (0, 3, 1, 2))


def _reference_forward(x_nchw, w_hwio, b):
    """Pure-JAX reference (same bf16 MXU inputs, f32 accumulation)."""
    y = lax.conv_general_dilated(
        x_nchw.astype(jnp.bfloat16), w_hwio.astype(jnp.bfloat16),
        window_strides=(1, 1), padding="SAME",
        dimension_numbers=("NCHW", "HWIO", "NCHW"),
        preferred_element_type=jnp.float32)
    y = jnp.maximum(y + b[None, :, None, None], 0.0).astype(x_nchw.dtype)
    return jnp.concatenate([x_nchw, y], axis=1)


if __name__ == "__main__":
    key = jax.random.PRNGKey(0)
    kx, kw, kb = jax.random.split(key, 3)

    # Small RDN-like shapes: batch=2, in_channels=64, grow_rate=64, 16x16.
    # (Cin + G = 128 keeps the output store lane-dense.)
    N, C_IN, H, W = 2, 64, 16, 16
    GROW = 64

    x = jax.random.normal(kx, (N, C_IN, H, W), jnp.float32)
    fan_in = C_IN * 9
    w = jax.random.normal(kw, (3, 3, C_IN, GROW), jnp.float32) * (2.0 / fan_in) ** 0.5
    b = jax.random.normal(kb, (GROW,), jnp.float32) * 0.01

    out = jax.jit(rdb_conv_forward)(x, w, b)
    out = jax.block_until_ready(out)

    assert out.shape == (N, C_IN + GROW, H, W), out.shape

    # Passthrough channels must be bit-exact copies of the input.
    assert jnp.array_equal(out[:, :C_IN], x)

    ref = _reference_forward(x, w, b)
    max_err = float(jnp.max(jnp.abs(out - ref)))
    assert jnp.allclose(out, ref, atol=1e-2, rtol=1e-2), max_err

    print("KERNEL_OK")
</pallas_src>

<mosaic_0001>
module attributes {stable_mosaic.version = 11 : i64} {
  func.func @_rdb_conv_kernel(%arg0: i32, %arg1: memref<1152x64xbf16, #tpu.memory_space<vmem>>, %arg2: memref<512x64xf32, #tpu.memory_space<vmem>>, %arg3: memref<576x64xbf16, #tpu.memory_space<vmem>>, %arg4: memref<1x64xf32, #tpu.memory_space<vmem>>, %arg5: memref<512x128xf32, #tpu.memory_space<vmem>>) attributes {dimension_semantics = [#tpu.dimension_semantics<arbitrary>], iteration_bounds = array<i64: 1>, scalar_prefetch = 0 : i64, scratch_operands = 0 : i64, tpu.core_type = #tpu.core_type<tc>, window_params = [{pipeline_mode = #tpu.pipeline_mode<synchronous>, transform_indices = @transform_0, window_bounds = array<i64: 1152, 64>}, {pipeline_mode = #tpu.pipeline_mode<synchronous>, transform_indices = @transform_1, window_bounds = array<i64: 512, 64>}, {pipeline_mode = #tpu.pipeline_mode<synchronous>, transform_indices = @transform_2, window_bounds = array<i64: 576, 64>}, {pipeline_mode = #tpu.pipeline_mode<synchronous>, transform_indices = @transform_3, window_bounds = array<i64: 1, 64>}, {pipeline_mode = #tpu.pipeline_mode<synchronous>, transform_indices = @transform_4, window_bounds = array<i64: 512, 128>}]} {
    %c0 = arith.constant 0 : index
    %c0_0 = arith.constant 0 : index
    %0 = vector.load %arg1[%c0, %c0_0] : memref<1152x64xbf16, #tpu.memory_space<vmem>>, vector<1088x64xbf16>
    %c0_1 = arith.constant 0 : index
    %c0_2 = arith.constant 0 : index
    %1 = vector.load %arg3[%c0_1, %c0_2] : memref<576x64xbf16, #tpu.memory_space<vmem>>, vector<64x64xbf16>
    %cst = arith.constant dense<0.000000e+00> : vector<1088x64xf32>
    %2 = tpu.matmul %0, %1, %cst {dimension_numbers = #tpu.dot_dimension_numbers<[1], [0], [0], [1], [0, 0, 1, 1], [], []>} : vector<1088x64xbf16>, vector<64x64xbf16>, vector<1088x64xf32> -> vector<1088x64xf32>
    %c64 = arith.constant 64 : index
    %c0_3 = arith.constant 0 : index
    %3 = vector.load %arg3[%c64, %c0_3] : memref<576x64xbf16, #tpu.memory_space<vmem>>, vector<64x64xbf16>
    %cst_4 = arith.constant dense<0.000000e+00> : vector<1088x64xf32>
    %4 = tpu.matmul %0, %3, %cst_4 {dimension_numbers = #tpu.dot_dimension_numbers<[1], [0], [0], [1], [0, 0, 1, 1], [], []>} : vector<1088x64xbf16>, vector<64x64xbf16>, vector<1088x64xf32> -> vector<1088x64xf32>
    %c128 = arith.constant 128 : index
    %c0_5 = arith.constant 0 : index
    %5 = vector.load %arg3[%c128, %c0_5] : memref<576x64xbf16, #tpu.memory_space<vmem>>, vector<64x64xbf16>
    %cst_6 = arith.constant dense<0.000000e+00> : vector<1088x64xf32>
    %6 = tpu.matmul %0, %5, %cst_6 {dimension_numbers = #tpu.dot_dimension_numbers<[1], [0], [0], [1], [0, 0, 1, 1], [], []>} : vector<1088x64xbf16>, vector<64x64xbf16>, vector<1088x64xf32> -> vector<1088x64xf32>
    %c32 = arith.constant 32 : index
    %c0_7 = arith.constant 0 : index
    %7 = vector.load %arg1[%c32, %c0_7] : memref<1152x64xbf16, #tpu.memory_space<vmem>>, vector<1088x64xbf16>
    %c192 = arith.constant 192 : index
    %c0_8 = arith.constant 0 : index
    %8 = vector.load %arg3[%c192, %c0_8] : memref<576x64xbf16, #tpu.memory_space<vmem>>, vector<64x64xbf16>
    %cst_9 = arith.constant dense<0.000000e+00> : vector<1088x64xf32>
    %9 = tpu.matmul %7, %8, %cst_9 {dimension_numbers = #tpu.dot_dimension_numbers<[1], [0], [0], [1], [0, 0, 1, 1], [], []>} : vector<1088x64xbf16>, vector<64x64xbf16>, vector<1088x64xf32> -> vector<1088x64xf32>
    %10 = arith.addf %2, %9 : vector<1088x64xf32>
    %c256 = arith.constant 256 : index
    %c0_10 = arith.constant 0 : index
    %11 = vector.load %arg3[%c256, %c0_10] : memref<576x64xbf16, #tpu.memory_space<vmem>>, vector<64x64xbf16>
    %cst_11 = arith.constant dense<0.000000e+00> : vector<1088x64xf32>
    %12 = tpu.matmul %7, %11, %cst_11 {dimension_numbers = #tpu.dot_dimension_numbers<[1], [0], [0], [1], [0, 0, 1, 1], [], []>} : vector<1088x64xbf16>, vector<64x64xbf16>, vector<1088x64xf32> -> vector<1088x64xf32>
    %13 = arith.addf %4, %12 : vector<1088x64xf32>
    %c320 = arith.constant 320 : index
    %c0_12 = arith.constant 0 : index
    %14 = vector.load %arg3[%c320, %c0_12] : memref<576x64xbf16, #tpu.memory_space<vmem>>, vector<64x64xbf16>
    %cst_13 = arith.constant dense<0.000000e+00> : vector<1088x64xf32>
    %15 = tpu.matmul %7, %14, %cst_13 {dimension_numbers = #tpu.dot_dimension_numbers<[1], [0], [0], [1], [0, 0, 1, 1], [], []>} : vector<1088x64xbf16>, vector<64x64xbf16>, vector<1088x64xf32> -> vector<1088x64xf32>
    %16 = arith.addf %6, %15 : vector<1088x64xf32>
    %c64_14 = arith.constant 64 : index
    %c0_15 = arith.constant 0 : index
    %17 = vector.load %arg1[%c64_14, %c0_15] : memref<1152x64xbf16, #tpu.memory_space<vmem>>, vector<1088x64xbf16>
    %c384 = arith.constant 384 : index
    %c0_16 = arith.constant 0 : index
    %18 = vector.load %arg3[%c384, %c0_16] : memref<576x64xbf16, #tpu.memory_space<vmem>>, vector<64x64xbf16>
    %cst_17 = arith.constant dense<0.000000e+00> : vector<1088x64xf32>
    %19 = tpu.matmul %17, %18, %cst_17 {dimension_numbers = #tpu.dot_dimension_numbers<[1], [0], [0], [1], [0, 0, 1, 1], [], []>} : vector<1088x64xbf16>, vector<64x64xbf16>, vector<1088x64xf32> -> vector<1088x64xf32>
    %20 = arith.addf %10, %19 : vector<1088x64xf32>
    %c448 = arith.constant 448 : index
    %c0_18 = arith.constant 0 : index
    %21 = vector.load %arg3[%c448, %c0_18] : memref<576x64xbf16, #tpu.memory_space<vmem>>, vector<64x64xbf16>
    %cst_19 = arith.constant dense<0.000000e+00> : vector<1088x64xf32>
    %22 = tpu.matmul %17, %21, %cst_19 {dimension_numbers = #tpu.dot_dimension_numbers<[1], [0], [0], [1], [0, 0, 1, 1], [], []>} : vector<1088x64xbf16>, vector<64x64xbf16>, vector<1088x64xf32> -> vector<1088x64xf32>
    %23 = arith.addf %13, %22 : vector<1088x64xf32>
    %c512 = arith.constant 512 : index
    %c0_20 = arith.constant 0 : index
    %24 = vector.load %arg3[%c512, %c0_20] : memref<576x64xbf16, #tpu.memory_space<vmem>>, vector<64x64xbf16>
    %cst_21 = arith.constant dense<0.000000e+00> : vector<1088x64xf32>
    %25 = tpu.matmul %17, %24, %cst_21 {dimension_numbers = #tpu.dot_dimension_numbers<[1], [0], [0], [1], [0, 0, 1, 1], [], []>} : vector<1088x64xbf16>, vector<64x64xbf16>, vector<1088x64xf32> -> vector<1088x64xf32>
    %26 = arith.addf %16, %25 : vector<1088x64xf32>
    %27 = vector.extract_strided_slice %20 {offsets = [0, 0], sizes = [1086, 64], strides = [1, 1]} : vector<1088x64xf32> to vector<1086x64xf32>
    %28 = vector.extract_strided_slice %23 {offsets = [1, 0], sizes = [1086, 64], strides = [1, 1]} : vector<1088x64xf32> to vector<1086x64xf32>
    %29 = arith.addf %27, %28 : vector<1086x64xf32>
    %30 = vector.extract_strided_slice %26 {offsets = [2, 0], sizes = [1086, 64], strides = [1, 1]} : vector<1088x64xf32> to vector<1086x64xf32>
    %31 = arith.addf %29, %30 : vector<1086x64xf32>
    %c0_22 = arith.constant 0 : index
    %c0_23 = arith.constant 0 : index
    %32 = vector.load %arg4[%c0_22, %c0_23] : memref<1x64xf32, #tpu.memory_space<vmem>>, vector<1x64xf32>
    %33 = vector.broadcast %32 : vector<1x64xf32> to vector<1086x64xf32>
    %34 = arith.addf %31, %33 : vector<1086x64xf32>
    %cst_24 = arith.constant 0.000000e+00 : f32
    %35 = vector.broadcast %cst_24 : f32 to vector<1086x64xf32>
    %36 = arith.maximumf %34, %35 : vector<1086x64xf32>
    %c0_25 = arith.constant 0 : index
    %c0_26 = arith.constant 0 : index
    %37 = vector.load %arg2[%c0_25, %c0_26] : memref<512x64xf32, #tpu.memory_space<vmem>>, vector<512x64xf32>
    %c0_27 = arith.constant 0 : index
    %c0_28 = arith.constant 0 : index
    %38 = vector.load %arg5[%c0_27, %c0_28] : memref<512x128xf32, #tpu.memory_space<vmem>>, vector<512x64xf32>
    tpu.vector_store %arg5[%c0_27, %c0_28], %37 {strides = array<i32>} : memref<512x128xf32, #tpu.memory_space<vmem>>, vector<512x64xf32>,
    %39 = vector.extract_strided_slice %36 {offsets = [0, 0], sizes = [16, 64], strides = [1, 1]} : vector<1086x64xf32> to vector<16x64xf32>
    %c0_29 = arith.constant 0 : index
    %c64_30 = arith.constant 64 : index
    %40 = vector.load %arg5[%c0_29, %c64_30] : memref<512x128xf32, #tpu.memory_space<vmem>>, vector<16x64xf32>
    tpu.vector_store %arg5[%c0_29, %c64_30], %39 {strides = array<i32>} : memref<512x128xf32, #tpu.memory_space<vmem>>, vector<16x64xf32>,
    %41 = vector.extract_strided_slice %36 {offsets = [32, 0], sizes = [16, 64], strides = [1, 1]} : vector<1086x64xf32> to vector<16x64xf32>
    %c16 = arith.constant 16 : index
    %c64_31 = arith.constant 64 : index
    %42 = vector.load %arg5[%c16, %c64_31] : memref<512x128xf32, #tpu.memory_space<vmem>>, vector<16x64xf32>
    tpu.vector_store %arg5[%c16, %c64_31], %41 {strides = array<i32>} : memref<512x128xf32, #tpu.memory_space<vmem>>, vector<16x64xf32>,
    %43 = vector.extract_strided_slice %36 {offsets = [64, 0], sizes = [16, 64], strides = [1, 1]} : vector<1086x64xf32> to vector<16x64xf32>
    %c32_32 = arith.constant 32 : index
    %c64_33 = arith.constant 64 : index
    %44 = vector.load %arg5[%c32_32, %c64_33] : memref<512x128xf32, #tpu.memory_space<vmem>>, vector<16x64xf32>
    tpu.vector_store %arg5[%c32_32, %c64_33], %43 {strides = array<i32>} : memref<512x128xf32, #tpu.memory_space<vmem>>, vector<16x64xf32>,
    %45 = vector.extract_strided_slice %36 {offsets = [96, 0], sizes = [16, 64], strides = [1, 1]} : vector<1086x64xf32> to vector<16x64xf32>
    %c48 = arith.constant 48 : index
    %c64_34 = arith.constant 64 : index
    %46 = vector.load %arg5[%c48, %c64_34] : memref<512x128xf32, #tpu.memory_space<vmem>>, vector<16x64xf32>
    tpu.vector_store %arg5[%c48, %c64_34], %45 {strides = array<i32>} : memref<512x128xf32, #tpu.memory_space<vmem>>, vector<16x64xf32>,
    %47 = vector.extract_strided_slice %36 {offsets = [128, 0], sizes = [16, 64], strides = [1, 1]} : vector<1086x64xf32> to vector<16x64xf32>
    %c64_35 = arith.constant 64 : index
    %c64_36 = arith.constant 64 : index
    %48 = vector.load %arg5[%c64_35, %c64_36] : memref<512x128xf32, #tpu.memory_space<vmem>>, vector<16x64xf32>
    tpu.vector_store %arg5[%c64_35, %c64_36], %47 {strides = array<i32>} : memref<512x128xf32, #tpu.memory_space<vmem>>, vector<16x64xf32>,
    %49 = vector.extract_strided_slice %36 {offsets = [160, 0], sizes = [16, 64], strides = [1, 1]} : vector<1086x64xf32> to vector<16x64xf32>
    %c80 = arith.constant 80 : index
    %c64_37 = arith.constant 64 : index
    %50 = vector.load %arg5[%c80, %c64_37] : memref<512x128xf32, #tpu.memory_space<vmem>>, vector<16x64xf32>
    tpu.vector_store %arg5[%c80, %c64_37], %49 {strides = array<i32>} : memref<512x128xf32, #tpu.memory_space<vmem>>, vector<16x64xf32>,
    %51 = vector.extract_strided_slice %36 {offsets = [192, 0], sizes = [16, 64], strides = [1, 1]} : vector<1086x64xf32> to vector<16x64xf32>
    %c96 = arith.constant 96 : index
    %c64_38 = arith.constant 64 : index
    %52 = vector.load %arg5[%c96, %c64_38] : memref<512x128xf32, #tpu.memory_space<vmem>>, vector<16x64xf32>
    tpu.vector_store %arg5[%c96, %c64_38], %51 {strides = array<i32>} : memref<512x128xf32, #tpu.memory_space<vmem>>, vector<16x64xf32>,
    %53 = vector.extract_strided_slice %36 {offsets = [224, 0], sizes = [16, 64], strides = [1, 1]} : vector<1086x64xf32> to vector<16x64xf32>
    %c112 = arith.constant 112 : index
    %c64_39 = arith.constant 64 : index
    %54 = vector.load %arg5[%c112, %c64_39] : memref<512x128xf32, #tpu.memory_space<vmem>>, vector<16x64xf32>
    tpu.vector_store %arg5[%c112, %c64_39], %53 {strides = array<i32>} : memref<512x128xf32, #tpu.memory_space<vmem>>, vector<16x64xf32>,
    %55 = vector.extract_strided_slice %36 {offsets = [256, 0], sizes = [16, 64], strides = [1, 1]} : vector<1086x64xf32> to vector<16x64xf32>
    %c128_40 = arith.constant 128 : index
    %c64_41 = arith.constant 64 : index
    %56 = vector.load %arg5[%c128_40, %c64_41] : memref<512x128xf32, #tpu.memory_space<vmem>>, vector<16x64xf32>
    tpu.vector_store %arg5[%c128_40, %c64_41], %55 {strides = array<i32>} : memref<512x128xf32, #tpu.memory_space<vmem>>, vector<16x64xf32>,
    %57 = vector.extract_strided_slice %36 {offsets = [288, 0], sizes = [16, 64], strides = [1, 1]} : vector<1086x64xf32> to vector<16x64xf32>
    %c144 = arith.constant 144 : index
    %c64_42 = arith.constant 64 : index
    %58 = vector.load %arg5[%c144, %c64_42] : memref<512x128xf32, #tpu.memory_space<vmem>>, vector<16x64xf32>
    tpu.vector_store %arg5[%c144, %c64_42], %57 {strides = array<i32>} : memref<512x128xf32, #tpu.memory_space<vmem>>, vector<16x64xf32>,
    %59 = vector.extract_strided_slice %36 {offsets = [320, 0], sizes = [16, 64], strides = [1, 1]} : vector<1086x64xf32> to vector<16x64xf32>
    %c160 = arith.constant 160 : index
    %c64_43 = arith.constant 64 : index
    %60 = vector.load %arg5[%c160, %c64_43] : memref<512x128xf32, #tpu.memory_space<vmem>>, vector<16x64xf32>
    tpu.vector_store %arg5[%c160, %c64_43], %59 {strides = array<i32>} : memref<512x128xf32, #tpu.memory_space<vmem>>, vector<16x64xf32>,
    %61 = vector.extract_strided_slice %36 {offsets = [352, 0], sizes = [16, 64], strides = [1, 1]} : vector<1086x64xf32> to vector<16x64xf32>
    %c176 = arith.constant 176 : index
    %c64_44 = arith.constant 64 : index
    %62 = vector.load %arg5[%c176, %c64_44] : memref<512x128xf32, #tpu.memory_space<vmem>>, vector<16x64xf32>
    tpu.vector_store %arg5[%c176, %c64_44], %61 {strides = array<i32>} : memref<512x128xf32, #tpu.memory_space<vmem>>, vector<16x64xf32>,
    %63 = vector.extract_strided_slice %36 {offsets = [384, 0], sizes = [16, 64], strides = [1, 1]} : vector<1086x64xf32> to vector<16x64xf32>
    %c192_45 = arith.constant 192 : index
    %c64_46 = arith.constant 64 : index
    %64 = vector.load %arg5[%c192_45, %c64_46] : memref<512x128xf32, #tpu.memory_space<vmem>>, vector<16x64xf32>
    tpu.vector_store %arg5[%c192_45, %c64_46], %63 {strides = array<i32>} : memref<512x128xf32, #tpu.memory_space<vmem>>, vector<16x64xf32>,
    %65 = vector.extract_strided_slice %36 {offsets = [416, 0], sizes = [16, 64], strides = [1, 1]} : vector<1086x64xf32> to vector<16x64xf32>
    %c208 = arith.constant 208 : index
    %c64_47 = arith.constant 64 : index
    %66 = vector.load %arg5[%c208, %c64_47] : memref<512x128xf32, #tpu.memory_space<vmem>>, vector<16x64xf32>
    tpu.vector_store %arg5[%c208, %c64_47], %65 {strides = array<i32>} : memref<512x128xf32, #tpu.memory_space<vmem>>, vector<16x64xf32>,
    %67 = vector.extract_strided_slice %36 {offsets = [448, 0], sizes = [16, 64], strides = [1, 1]} : vector<1086x64xf32> to vector<16x64xf32>
    %c224 = arith.constant 224 : index
    %c64_48 = arith.constant 64 : index
    %68 = vector.load %arg5[%c224, %c64_48] : memref<512x128xf32, #tpu.memory_space<vmem>>, vector<16x64xf32>
    tpu.vector_store %arg5[%c224, %c64_48], %67 {strides = array<i32>} : memref<512x128xf32, #tpu.memory_space<vmem>>, vector<16x64xf32>,
    %69 = vector.extract_strided_slice %36 {offsets = [480, 0], sizes = [16, 64], strides = [1, 1]} : vector<1086x64xf32> to vector<16x64xf32>
    %c240 = arith.constant 240 : index
    %c64_49 = arith.constant 64 : index
    %70 = vector.load %arg5[%c240, %c64_49] : memref<512x128xf32, #tpu.memory_space<vmem>>, vector<16x64xf32>
    tpu.vector_store %arg5[%c240, %c64_49], %69 {strides = array<i32>} : memref<512x128xf32, #tpu.memory_space<vmem>>, vector<16x64xf32>,
    %71 = vector.extract_strided_slice %36 {offsets = [576, 0], sizes = [16, 64], strides = [1, 1]} : vector<1086x64xf32> to vector<16x64xf32>
    %c256_50 = arith.constant 256 : index
    %c64_51 = arith.constant 64 : index
    %72 = vector.load %arg5[%c256_50, %c64_51] : memref<512x128xf32, #tpu.memory_space<vmem>>, vector<16x64xf32>
    tpu.vector_store %arg5[%c256_50, %c64_51], %71 {strides = array<i32>} : memref<512x128xf32, #tpu.memory_space<vmem>>, vector<16x64xf32>,
    %73 = vector.extract_strided_slice %36 {offsets = [608, 0], sizes = [16, 64], strides = [1, 1]} : vector<1086x64xf32> to vector<16x64xf32>
    %c272 = arith.constant 272 : index
    %c64_52 = arith.constant 64 : index
    %74 = vector.load %arg5[%c272, %c64_52] : memref<512x128xf32, #tpu.memory_space<vmem>>, vector<16x64xf32>
    tpu.vector_store %arg5[%c272, %c64_52], %73 {strides = array<i32>} : memref<512x128xf32, #tpu.memory_space<vmem>>, vector<16x64xf32>,
    %75 = vector.extract_strided_slice %36 {offsets = [640, 0], sizes = [16, 64], strides = [1, 1]} : vector<1086x64xf32> to vector<16x64xf32>
    %c288 = arith.constant 288 : index
    %c64_53 = arith.constant 64 : index
    %76 = vector.load %arg5[%c288, %c64_53] : memref<512x128xf32, #tpu.memory_space<vmem>>, vector<16x64xf32>
    tpu.vector_store %arg5[%c288, %c64_53], %75 {strides = array<i32>} : memref<512x128xf32, #tpu.memory_space<vmem>>, vector<16x64xf32>,
    %77 = vector.extract_strided_slice %36 {offsets = [672, 0], sizes = [16, 64], strides = [1, 1]} : vector<1086x64xf32> to vector<16x64xf32>
    %c304 = arith.constant 304 : index
    %c64_54 = arith.constant 64 : index
    %78 = vector.load %arg5[%c304, %c64_54] : memref<512x128xf32, #tpu.memory_space<vmem>>, vector<16x64xf32>
    tpu.vector_store %arg5[%c304, %c64_54], %77 {strides = array<i32>} : memref<512x128xf32, #tpu.memory_space<vmem>>, vector<16x64xf32>,
    %79 = vector.extract_strided_slice %36 {offsets = [704, 0], sizes = [16, 64], strides = [1, 1]} : vector<1086x64xf32> to vector<16x64xf32>
    %c320_55 = arith.constant 320 : index
    %c64_56 = arith.constant 64 : index
    %80 = vector.load %arg5[%c320_55, %c64_56] : memref<512x128xf32, #tpu.memory_space<vmem>>, vector<16x64xf32>
    tpu.vector_store %arg5[%c320_55, %c64_56], %79 {strides = array<i32>} : memref<512x128xf32, #tpu.memory_space<vmem>>, vector<16x64xf32>,
    %81 = vector.extract_strided_slice %36 {offsets = [736, 0], sizes = [16, 64], strides = [1, 1]} : vector<1086x64xf32> to vector<16x64xf32>
    %c336 = arith.constant 336 : index
    %c64_57 = arith.constant 64 : index
    %82 = vector.load %arg5[%c336, %c64_57] : memref<512x128xf32, #tpu.memory_space<vmem>>, vector<16x64xf32>
    tpu.vector_store %arg5[%c336, %c64_57], %81 {strides = array<i32>} : memref<512x128xf32, #tpu.memory_space<vmem>>, vector<16x64xf32>,
    %83 = vector.extract_strided_slice %36 {offsets = [768, 0], sizes = [16, 64], strides = [1, 1]} : vector<1086x64xf32> to vector<16x64xf32>
    %c352 = arith.constant 352 : index
    %c64_58 = arith.constant 64 : index
    %84 = vector.load %arg5[%c352, %c64_58] : memref<512x128xf32, #tpu.memory_space<vmem>>, vector<16x64xf32>
    tpu.vector_store %arg5[%c352, %c64_58], %83 {strides = array<i32>} : memref<512x128xf32, #tpu.memory_space<vmem>>, vector<16x64xf32>,
    %85 = vector.extract_strided_slice %36 {offsets = [800, 0], sizes = [16, 64], strides = [1, 1]} : vector<1086x64xf32> to vector<16x64xf32>
    %c368 = arith.constant 368 : index
    %c64_59 = arith.constant 64 : index
    %86 = vector.load %arg5[%c368, %c64_59] : memref<512x128xf32, #tpu.memory_space<vmem>>, vector<16x64xf32>
    tpu.vector_store %arg5[%c368, %c64_59], %85 {strides = array<i32>} : memref<512x128xf32, #tpu.memory_space<vmem>>, vector<16x64xf32>,
    %87 = vector.extract_strided_slice %36 {offsets = [832, 0], sizes = [16, 64], strides = [1, 1]} : vector<1086x64xf32> to vector<16x64xf32>
    %c384_60 = arith.constant 384 : index
    %c64_61 = arith.constant 64 : index
    %88 = vector.load %arg5[%c384_60, %c64_61] : memref<512x128xf32, #tpu.memory_space<vmem>>, vector<16x64xf32>
    tpu.vector_store %arg5[%c384_60, %c64_61], %87 {strides = array<i32>} : memref<512x128xf32, #tpu.memory_space<vmem>>, vector<16x64xf32>,
    %89 = vector.extract_strided_slice %36 {offsets = [864, 0], sizes = [16, 64], strides = [1, 1]} : vector<1086x64xf32> to vector<16x64xf32>
    %c400 = arith.constant 400 : index
    %c64_62 = arith.constant 64 : index
    %90 = vector.load %arg5[%c400, %c64_62] : memref<512x128xf32, #tpu.memory_space<vmem>>, vector<16x64xf32>
    tpu.vector_store %arg5[%c400, %c64_62], %89 {strides = array<i32>} : memref<512x128xf32, #tpu.memory_space<vmem>>, vector<16x64xf32>,
    %91 = vector.extract_strided_slice %36 {offsets = [896, 0], sizes = [16, 64], strides = [1, 1]} : vector<1086x64xf32> to vector<16x64xf32>
    %c416 = arith.constant 416 : index
    %c64_63 = arith.constant 64 : index
    %92 = vector.load %arg5[%c416, %c64_63] : memref<512x128xf32, #tpu.memory_space<vmem>>, vector<16x64xf32>
    tpu.vector_store %arg5[%c416, %c64_63], %91 {strides = array<i32>} : memref<512x128xf32, #tpu.memory_space<vmem>>, vector<16x64xf32>,
    %93 = vector.extract_strided_slice %36 {offsets = [928, 0], sizes = [16, 64], strides = [1, 1]} : vector<1086x64xf32> to vector<16x64xf32>
    %c432 = arith.constant 432 : index
    %c64_64 = arith.constant 64 : index
    %94 = vector.load %arg5[%c432, %c64_64] : memref<512x128xf32, #tpu.memory_space<vmem>>, vector<16x64xf32>
    tpu.vector_store %arg5[%c432, %c64_64], %93 {strides = array<i32>} : memref<512x128xf32, #tpu.memory_space<vmem>>, vector<16x64xf32>,
    %95 = vector.extract_strided_slice %36 {offsets = [960, 0], sizes = [16, 64], strides = [1, 1]} : vector<1086x64xf32> to vector<16x64xf32>
    %c448_65 = arith.constant 448 : index
    %c64_66 = arith.constant 64 : index
    %96 = vector.load %arg5[%c448_65, %c64_66] : memref<512x128xf32, #tpu.memory_space<vmem>>, vector<16x64xf32>
    tpu.vector_store %arg5[%c448_65, %c64_66], %95 {strides = array<i32>} : memref<512x128xf32, #tpu.memory_space<vmem>>, vector<16x64xf32>,
    %97 = vector.extract_strided_slice %36 {offsets = [992, 0], sizes = [16, 64], strides = [1, 1]} : vector<1086x64xf32> to vector<16x64xf32>
    %c464 = arith.constant 464 : index
    %c64_67 = arith.constant 64 : index
    %98 = vector.load %arg5[%c464, %c64_67] : memref<512x128xf32, #tpu.memory_space<vmem>>, vector<16x64xf32>
    tpu.vector_store %arg5[%c464, %c64_67], %97 {strides = array<i32>} : memref<512x128xf32, #tpu.memory_space<vmem>>, vector<16x64xf32>,
    %99 = vector.extract_strided_slice %36 {offsets = [1024, 0], sizes = [16, 64], strides = [1, 1]} : vector<1086x64xf32> to vector<16x64xf32>
    %c480 = arith.constant 480 : index
    %c64_68 = arith.constant 64 : index
    %100 = vector.load %arg5[%c480, %c64_68] : memref<512x128xf32, #tpu.memory_space<vmem>>, vector<16x64xf32>
    tpu.vector_store %arg5[%c480, %c64_68], %99 {strides = array<i32>} : memref<512x128xf32, #tpu.memory_space<vmem>>, vector<16x64xf32>,
    %101 = vector.extract_strided_slice %36 {offsets = [1056, 0], sizes = [16, 64], strides = [1, 1]} : vector<1086x64xf32> to vector<16x64xf32>
    %c496 = arith.constant 496 : index
    %c64_69 = arith.constant 64 : index
    %102 = vector.load %arg5[%c496, %c64_69] : memref<512x128xf32, #tpu.memory_space<vmem>>, vector<16x64xf32>
    tpu.vector_store %arg5[%c496, %c64_69], %101 {strides = array<i32>} : memref<512x128xf32, #tpu.memory_space<vmem>>, vector<16x64xf32>,
    return
  }
  func.func @transform_0(%arg0: i32) -> (i32, i32) {
    %c0_i32 = arith.constant 0 : i32
    %c0_i32_0 = arith.constant 0 : i32
    %c0_i32_1 = arith.constant 0 : i32
    return %c0_i32, %c0_i32_0 : i32, i32
  }
  func.func @transform_1(%arg0: i32) -> (i32, i32) {
    %c0_i32 = arith.constant 0 : i32
    %c0_i32_0 = arith.constant 0 : i32
    %c0_i32_1 = arith.constant 0 : i32
    return %c0_i32, %c0_i32_0 : i32, i32
  }
  func.func @transform_2(%arg0: i32) -> (i32, i32) {
    %c0_i32 = arith.constant 0 : i32
    %c0_i32_0 = arith.constant 0 : i32
    %c0_i32_1 = arith.constant 0 : i32
    return %c0_i32, %c0_i32_0 : i32, i32
  }
  func.func @transform_3(%arg0: i32) -> (i32, i32) {
    %c0_i32 = arith.constant 0 : i32
    %c0_i32_0 = arith.constant 0 : i32
    %c0_i32_1 = arith.constant 0 : i32
    return %c0_i32, %c0_i32_0 : i32, i32
  }
  func.func @transform_4(%arg0: i32) -> (i32, i32) {
    %c0_i32 = arith.constant 0 : i32
    %c0_i32_0 = arith.constant 0 : i32
    %c0_i32_1 = arith.constant 0 : i32
    return %c0_i32, %c0_i32_0 : i32, i32
  }
}

</mosaic_0001>

<llo_original>
// kernel: rdb_conv_forward.1
$region0: #{rdb_conv_forward.1}
  #allocation0 [shape = 'u32[]', space=smem, size = 0x4, offset = 0x4, fixed_abs, tag = 'smem constant byte address 0x4 - core index']
  #allocation1 [shape = 'u32[72,128]{1,0:T(1,128)}', space=vmem, size = 0x9000, scoped, tag = 'internal scratch']
  %s0 = inlined_call_operand.vmem [shape: bf16[1152,64], index: 0, kind: input, shape index: {}]
  %s1 = inlined_call_operand.vmem [shape: f32[512,64], index: 1, kind: input, shape index: {}]
  %s2 = inlined_call_operand.vmem [shape: bf16[576,64], index: 2, kind: input, shape index: {}]
  %s3 = inlined_call_operand.vmem [shape: f32[1,64], index: 3, kind: input, shape index: {}]
  %s4 = inlined_call_operand.hbm [shape: f32[512,128], index: 4, kind: output, shape index: {}]
  %s5 = sld [smem:[#allocation0]]
  $region26: #{rdb_conv_forward.1} parent=0
    _
  %s7 = ssub.s32 1, %s5
  %s8 = scalar_select 0, %s7, %s5
  $region1: #{rdb_conv_forward.1} parent=0
    #allocation2 [shape = 'u8[262144]{0}', space=vmem, size = 0x40000, scoped, tag = 'output window, operand 0, single buffered']
    #allocation3 [shape = 's32[1]{0}', space=sflag, size = 0x4, scoped, tag = 'scoped memory for rdb_conv_forward.1']
    %9 = vsyncpa [#allocation3], 0
    // Predicated region
    $region2: #{rdb_conv_forward.1} parent=1 // pred_check
      _
    $region3: #{rdb_conv_forward.1} parent=1 // pred_check_branch
      %11 = sbr.rel (0) target = $region5
    $region4: #{rdb_conv_forward.1} parent=1 // pred_region
      _
    $region5: #{rdb_conv_forward.1} parent=1 // pred_fallthru
      _
    // Predicated region
    $region6: #{rdb_conv_forward.1} parent=1 // pred_check
      _
    $region7: #{rdb_conv_forward.1} parent=1 // pred_check_branch
      %13 = sbr.rel (0) target = $region9
    $region8: #{rdb_conv_forward.1} parent=1 // pred_region
      _
    $region9: #{rdb_conv_forward.1} parent=1 // pred_fallthru
      _
    // Predicated region
    $region10: #{rdb_conv_forward.1} parent=1 // pred_check
      _
    $region11: #{rdb_conv_forward.1} parent=1 // pred_check_branch
      %15 = sbr.rel (0) target = $region13
    $region12: #{rdb_conv_forward.1} parent=1 // pred_region
      _
    $region13: #{rdb_conv_forward.1} parent=1 // pred_fallthru
      _
    // Predicated region
    $region14: #{rdb_conv_forward.1} parent=1 // pred_check
      _
    $region15: #{rdb_conv_forward.1} parent=1 // pred_check_branch
      %17 = sbr.rel (0) target = $region17
    $region16: #{rdb_conv_forward.1} parent=1 // pred_region
      _
    $region17: #{rdb_conv_forward.1} parent=1 // pred_fallthru
      _
    %v19 = vld [vmem:[%s0] sm:$0xf]
    %v20 = vld [vmem:[%s0 + $0x4] sm:$0xf]
    %v21 = vld [vmem:[%s0 + $0x8] sm:$0xf]
    %v22 = vld [vmem:[%s0 + $0xc] sm:$0xf]
    %v23 = vld [vmem:[%s0 + $0x10] sm:$0xf]
    %v24 = vld [vmem:[%s0 + $0x14] sm:$0xf]
    %v25 = vld [vmem:[%s0 + $0x18] sm:$0xf]
    %v26 = vld [vmem:[%s0 + $0x1c] sm:$0xf]
    %v27 = vld [vmem:[%s0 + $0x20] sm:$0xf]
    %v28 = vld [vmem:[%s0 + $0x24] sm:$0xf]
    %v29 = vld [vmem:[%s0 + $0x28] sm:$0xf]
    %v30 = vld [vmem:[%s0 + $0x2c] sm:$0xf]
    %v31 = vld [vmem:[%s0 + $0x30] sm:$0xf]
    %v32 = vld [vmem:[%s0 + $0x34] sm:$0xf]
    %v33 = vld [vmem:[%s0 + $0x38] sm:$0xf]
    %v34 = vld [vmem:[%s0 + $0x3c] sm:$0xf]
    %v35 = vld [vmem:[%s0 + $0x40] sm:$0xf]
    %v36 = vld [vmem:[%s0 + $0x44] sm:$0xf]
    %v37 = vld [vmem:[%s0 + $0x48] sm:$0xf]
    %v38 = vld [vmem:[%s0 + $0x4c] sm:$0xf]
    %v39 = vld [vmem:[%s0 + $0x50] sm:$0xf]
    %v40 = vld [vmem:[%s0 + $0x54] sm:$0xf]
    %v41 = vld [vmem:[%s0 + $0x58] sm:$0xf]
    %v42 = vld [vmem:[%s0 + $0x5c] sm:$0xf]
    %v43 = vld [vmem:[%s0 + $0x60] sm:$0xf]
    %v44 = vld [vmem:[%s0 + $0x64] sm:$0xf]
    %v45 = vld [vmem:[%s0 + $0x68] sm:$0xf]
    %v46 = vld [vmem:[%s0 + $0x6c] sm:$0xf]
    %v47 = vld [vmem:[%s0 + $0x70] sm:$0xf]
    %v48 = vld [vmem:[%s0 + $0x74] sm:$0xf]
    %v49 = vld [vmem:[%s0 + $0x78] sm:$0xf]
    %v50 = vld [vmem:[%s0 + $0x7c] sm:$0xf]
    %v51 = vld [vmem:[%s0 + $0x80] sm:$0xf]
    %v52 = vld [vmem:[%s0 + $0x84] sm:$0xf]
    %v53 = vld [vmem:[%s0 + $0x88] sm:$0xf]
    %v54 = vld [vmem:[%s0 + $0x8c] sm:$0xf]
    %v55 = vld [vmem:[%s0 + $0x90] sm:$0xf]
    %v56 = vld [vmem:[%s0 + $0x94] sm:$0xf]
    %v57 = vld [vmem:[%s0 + $0x98] sm:$0xf]
    %v58 = vld [vmem:[%s0 + $0x9c] sm:$0xf]
    %v59 = vld [vmem:[%s0 + $0xa0] sm:$0xf]
    %v60 = vld [vmem:[%s0 + $0xa4] sm:$0xf]
    %v61 = vld [vmem:[%s0 + $0xa8] sm:$0xf]
    %v62 = vld [vmem:[%s0 + $0xac] sm:$0xf]
    %v63 = vld [vmem:[%s0 + $0xb0] sm:$0xf]
    %v64 = vld [vmem:[%s0 + $0xb4] sm:$0xf]
    %v65 = vld [vmem:[%s0 + $0xb8] sm:$0xf]
    %v66 = vld [vmem:[%s0 + $0xbc] sm:$0xf]
    %v67 = vld [vmem:[%s0 + $0xc0] sm:$0xf]
    %v68 = vld [vmem:[%s0 + $0xc4] sm:$0xf]
    %v69 = vld [vmem:[%s0 + $0xc8] sm:$0xf]
    %v70 = vld [vmem:[%s0 + $0xcc] sm:$0xf]
    %v71 = vld [vmem:[%s0 + $0xd0] sm:$0xf]
    %v72 = vld [vmem:[%s0 + $0xd4] sm:$0xf]
    %v73 = vld [vmem:[%s0 + $0xd8] sm:$0xf]
    %v74 = vld [vmem:[%s0 + $0xdc] sm:$0xf]
    %v75 = vld [vmem:[%s0 + $0xe0] sm:$0xf]
    %v76 = vld [vmem:[%s0 + $0xe4] sm:$0xf]
    %v77 = vld [vmem:[%s0 + $0xe8] sm:$0xf]
    %v78 = vld [vmem:[%s0 + $0xec] sm:$0xf]
    %v79 = vld [vmem:[%s0 + $0xf0] sm:$0xf]
    %v80 = vld [vmem:[%s0 + $0xf4] sm:$0xf]
    %v81 = vld [vmem:[%s0 + $0xf8] sm:$0xf]
    %v82 = vld [vmem:[%s0 + $0xfc] sm:$0xf]
    %v83 = vld [vmem:[%s0 + $0x100] sm:$0xf]
    %v84 = vld [vmem:[%s0 + $0x104] sm:$0xf]
    %v85 = vld [vmem:[%s0 + $0x108] sm:$0xf]
    %v86 = vld [vmem:[%s0 + $0x10c] sm:$0xf]
    %v87 = vld [vmem:[%s0 + $0x110] sm:$0xf]
    %v88 = vld [vmem:[%s0 + $0x114] sm:$0xf]
    %v89 = vld [vmem:[%s0 + $0x118] sm:$0xf]
    %v90 = vld [vmem:[%s0 + $0x11c] sm:$0xf]
    %v91 = vld [vmem:[%s0 + $0x120] sm:$0xf]
    %v92 = vld [vmem:[%s0 + $0x124] sm:$0xf]
    %v93 = vld [vmem:[%s0 + $0x128] sm:$0xf]
    %v94 = vld [vmem:[%s0 + $0x12c] sm:$0xf]
    %v95 = vld [vmem:[%s0 + $0x130] sm:$0xf]
    %v96 = vld [vmem:[%s0 + $0x134] sm:$0xf]
    %v97 = vld [vmem:[%s0 + $0x138] sm:$0xf]
    %v98 = vld [vmem:[%s0 + $0x13c] sm:$0xf]
    %v99 = vld [vmem:[%s0 + $0x140] sm:$0xf]
    %v100 = vld [vmem:[%s0 + $0x144] sm:$0xf]
    %v101 = vld [vmem:[%s0 + $0x148] sm:$0xf]
    %v102 = vld [vmem:[%s0 + $0x14c] sm:$0xf]
    %v103 = vld [vmem:[%s0 + $0x150] sm:$0xf]
    %v104 = vld [vmem:[%s0 + $0x154] sm:$0xf]
    %v105 = vld [vmem:[%s0 + $0x158] sm:$0xf]
    %v106 = vld [vmem:[%s0 + $0x15c] sm:$0xf]
    %v107 = vld [vmem:[%s0 + $0x160] sm:$0xf]
    %v108 = vld [vmem:[%s0 + $0x164] sm:$0xf]
    %v109 = vld [vmem:[%s0 + $0x168] sm:$0xf]
    %v110 = vld [vmem:[%s0 + $0x16c] sm:$0xf]
    %v111 = vld [vmem:[%s0 + $0x170] sm:$0xf]
    %v112 = vld [vmem:[%s0 + $0x174] sm:$0xf]
    %v113 = vld [vmem:[%s0 + $0x178] sm:$0xf]
    %v114 = vld [vmem:[%s0 + $0x17c] sm:$0xf]
    %v115 = vld [vmem:[%s0 + $0x180] sm:$0xf]
    %v116 = vld [vmem:[%s0 + $0x184] sm:$0xf]
    %v117 = vld [vmem:[%s0 + $0x188] sm:$0xf]
    %v118 = vld [vmem:[%s0 + $0x18c] sm:$0xf]
    %v119 = vld [vmem:[%s0 + $0x190] sm:$0xf]
    %v120 = vld [vmem:[%s0 + $0x194] sm:$0xf]
    %v121 = vld [vmem:[%s0 + $0x198] sm:$0xf]
    %v122 = vld [vmem:[%s0 + $0x19c] sm:$0xf]
    %v123 = vld [vmem:[%s0 + $0x1a0] sm:$0xf]
    %v124 = vld [vmem:[%s0 + $0x1a4] sm:$0xf]
    %v125 = vld [vmem:[%s0 + $0x1a8] sm:$0xf]
    %v126 = vld [vmem:[%s0 + $0x1ac] sm:$0xf]
    %v127 = vld [vmem:[%s0 + $0x1b0] sm:$0xf]
    %v128 = vld [vmem:[%s0 + $0x1b4] sm:$0xf]
    %v129 = vld [vmem:[%s0 + $0x1b8] sm:$0xf]
    %v130 = vld [vmem:[%s0 + $0x1bc] sm:$0xf]
    %v131 = vld [vmem:[%s0 + $0x1c0] sm:$0xf]
    %v132 = vld [vmem:[%s0 + $0x1c4] sm:$0xf]
    %v133 = vld [vmem:[%s0 + $0x1c8] sm:$0xf]
    %v134 = vld [vmem:[%s0 + $0x1cc] sm:$0xf]
    %v135 = vld [vmem:[%s0 + $0x1d0] sm:$0xf]
    %v136 = vld [vmem:[%s0 + $0x1d4] sm:$0xf]
    %v137 = vld [vmem:[%s0 + $0x1d8] sm:$0xf]
    %v138 = vld [vmem:[%s0 + $0x1dc] sm:$0xf]
    %v139 = vld [vmem:[%s0 + $0x1e0] sm:$0xf]
    %v140 = vld [vmem:[%s0 + $0x1e4] sm:$0xf]
    %v141 = vld [vmem:[%s0 + $0x1e8] sm:$0xf]
    %v142 = vld [vmem:[%s0 + $0x1ec] sm:$0xf]
    %v143 = vld [vmem:[%s0 + $0x1f0] sm:$0xf]
    %v144 = vld [vmem:[%s0 + $0x1f4] sm:$0xf]
    %v145 = vld [vmem:[%s0 + $0x1f8] sm:$0xf]
    %v146 = vld [vmem:[%s0 + $0x1fc] sm:$0xf]
    %v147 = vld [vmem:[%s0 + $0x200] sm:$0xf]
    %v148 = vld [vmem:[%s0 + $0x204] sm:$0xf]
    %v149 = vld [vmem:[%s0 + $0x208] sm:$0xf]
    %v150 = vld [vmem:[%s0 + $0x20c] sm:$0xf]
    %v151 = vld [vmem:[%s0 + $0x210] sm:$0xf]
    %v152 = vld [vmem:[%s0 + $0x214] sm:$0xf]
    %v153 = vld [vmem:[%s0 + $0x218] sm:$0xf]
    %v154 = vld [vmem:[%s0 + $0x21c] sm:$0xf]
    %v155 = vld [vmem:[%s2] sm:$0xf]
    %v156 = vld [vmem:[%s2 + $0x4] sm:$0xf]
    %v157 = vld [vmem:[%s2 + $0x8] sm:$0xf]
    %v158 = vld [vmem:[%s2 + $0xc] sm:$0xf]
    %v159 = vld [vmem:[%s2 + $0x10] sm:$0xf]
    %v160 = vld [vmem:[%s2 + $0x14] sm:$0xf]
    %v161 = vld [vmem:[%s2 + $0x18] sm:$0xf]
    %v162 = vld [vmem:[%s2 + $0x1c] sm:$0xf]
    %v163 = vld [vmem:[%s2 + $0x20] sm:$0xf]
    %v164 = vld [vmem:[%s2 + $0x24] sm:$0xf]
    %v165 = vld [vmem:[%s2 + $0x28] sm:$0xf]
    %v166 = vld [vmem:[%s2 + $0x2c] sm:$0xf]
    %v167 = vld [vmem:[%s2 + $0x30] sm:$0xf]
    %v168 = vld [vmem:[%s2 + $0x34] sm:$0xf]
    %v169 = vld [vmem:[%s2 + $0x38] sm:$0xf]
    %v170 = vld [vmem:[%s2 + $0x3c] sm:$0xf]
    %v171 = vld [vmem:[%s2 + $0x40] sm:$0xf]
    %v172 = vld [vmem:[%s2 + $0x44] sm:$0xf]
    %v173 = vld [vmem:[%s2 + $0x48] sm:$0xf]
    %v174 = vld [vmem:[%s2 + $0x4c] sm:$0xf]
    %v175 = vld [vmem:[%s2 + $0x50] sm:$0xf]
    %v176 = vld [vmem:[%s2 + $0x54] sm:$0xf]
    %v177 = vld [vmem:[%s2 + $0x58] sm:$0xf]
    %v178 = vld [vmem:[%s2 + $0x5c] sm:$0xf]
    %v179 = vld [vmem:[%s0 + $0x220] sm:$0xf]
    %v180 = vld [vmem:[%s0 + $0x224] sm:$0xf]
    %v181 = vld [vmem:[%s0 + $0x228] sm:$0xf]
    %v182 = vld [vmem:[%s0 + $0x22c] sm:$0xf]
    %v183 = vld [vmem:[%s2 + $0x60] sm:$0xf]
    %v184 = vld [vmem:[%s2 + $0x64] sm:$0xf]
    %v185 = vld [vmem:[%s2 + $0x68] sm:$0xf]
    %v186 = vld [vmem:[%s2 + $0x6c] sm:$0xf]
    %v187 = vld [vmem:[%s2 + $0x70] sm:$0xf]
    %v188 = vld [vmem:[%s2 + $0x74] sm:$0xf]
    %v189 = vld [vmem:[%s2 + $0x78] sm:$0xf]
    %v190 = vld [vmem:[%s2 + $0x7c] sm:$0xf]
    %v327 = vunpack.c.l.b16 %v23
    %v328 = vunpack.c.l.b16 %v24
    %v329 = vunpack.c.l.b16 %v25
    %v330 = vunpack.c.l.b16 %v26
    %v331 = vunpack.c.l.b16 %v27
    %v332 = vunpack.c.l.b16 %v28
    %v333 = vunpack.c.l.b16 %v29
    %v334 = vunpack.c.l.b16 %v30
    %v335 = vunpack.c.l.b16 %v31
    %v336 = vunpack.c.l.b16 %v32
    %v337 = vunpack.c.l.b16 %v33
    %v338 = vunpack.c.l.b16 %v34
    %v339 = vunpack.c.l.b16 %v35
    %v340 = vunpack.c.l.b16 %v36
    %v341 = vunpack.c.l.b16 %v37
    %v342 = vunpack.c.l.b16 %v38
    %v343 = vunpack.c.l.b16 %v39
    %v344 = vunpack.c.l.b16 %v40
    %v345 = vunpack.c.l.b16 %v41
    %v346 = vunpack.c.l.b16 %v42
    %v347 = vunpack.c.l.b16 %v43
    %v348 = vunpack.c.l.b16 %v44
    %v349 = vunpack.c.l.b16 %v45
    %v350 = vunpack.c.l.b16 %v46
    %v351 = vunpack.c.l.b16 %v47
    %v352 = vunpack.c.l.b16 %v48
    %v353 = vunpack.c.l.b16 %v49
    %v354 = vunpack.c.l.b16 %v50
    %v355 = vunpack.c.l.b16 %v51
    %v356 = vunpack.c.l.b16 %v52
    %v357 = vunpack.c.l.b16 %v53
    %v358 = vunpack.c.l.b16 %v54
    %v359 = vunpack.c.l.b16 %v55
    %v360 = vunpack.c.l.b16 %v56
    %v361 = vunpack.c.l.b16 %v57
    %v362 = vunpack.c.l.b16 %v58
    %v363 = vunpack.c.l.b16 %v59
    %v364 = vunpack.c.l.b16 %v60
    %v365 = vunpack.c.l.b16 %v61
    %v366 = vunpack.c.l.b16 %v62
    %v367 = vunpack.c.l.b16 %v63
    %v368 = vunpack.c.l.b16 %v64
    %v369 = vunpack.c.l.b16 %v65
    %v370 = vunpack.c.l.b16 %v66
    %v371 = vunpack.c.l.b16 %v67
    %v372 = vunpack.c.l.b16 %v68
    %v373 = vunpack.c.l.b16 %v69
    %v374 = vunpack.c.l.b16 %v70
    %v375 = vunpack.c.l.b16 %v71
    %v376 = vunpack.c.l.b16 %v72
    %v377 = vunpack.c.l.b16 %v73
    %v378 = vunpack.c.l.b16 %v74
    %v379 = vunpack.c.l.b16 %v75
    %v380 = vunpack.c.l.b16 %v76
    %v381 = vunpack.c.l.b16 %v77
    %v382 = vunpack.c.l.b16 %v78
    %v383 = vunpack.c.l.b16 %v79
    %v384 = vunpack.c.l.b16 %v80
    %v385 = vunpack.c.l.b16 %v81
    %v386 = vunpack.c.l.b16 %v82
    %v387 = vunpack.c.l.b16 %v83
    %v388 = vunpack.c.l.b16 %v84
    %v389 = vunpack.c.l.b16 %v85
    %v390 = vunpack.c.l.b16 %v86
    %v391 = vunpack.c.l.b16 %v87
    %v392 = vunpack.c.l.b16 %v88
    %v393 = vunpack.c.l.b16 %v89
    %v394 = vunpack.c.l.b16 %v90
    %v395 = vunpack.c.l.b16 %v91
    %v396 = vunpack.c.l.b16 %v92
    %v397 = vunpack.c.l.b16 %v93
    %v398 = vunpack.c.l.b16 %v94
    %v399 = vunpack.c.l.b16 %v95
    %v400 = vunpack.c.l.b16 %v96
    %v401 = vunpack.c.l.b16 %v97
    %v402 = vunpack.c.l.b16 %v98
    %v403 = vunpack.c.l.b16 %v99
    %v404 = vunpack.c.l.b16 %v100
    %v405 = vunpack.c.l.b16 %v101
    %v406 = vunpack.c.l.b16 %v102
    %v407 = vunpack.c.l.b16 %v103
    %v408 = vunpack.c.l.b16 %v104
    %v409 = vunpack.c.l.b16 %v105
    %v410 = vunpack.c.l.b16 %v106
    %v411 = vunpack.c.l.b16 %v107
    %v412 = vunpack.c.l.b16 %v108
    %v413 = vunpack.c.l.b16 %v109
    %v414 = vunpack.c.l.b16 %v110
    %v415 = vunpack.c.l.b16 %v111
    %v416 = vunpack.c.l.b16 %v112
    %v417 = vunpack.c.l.b16 %v113
    %v418 = vunpack.c.l.b16 %v114
    %v419 = vunpack.c.l.b16 %v115
    %v420 = vunpack.c.l.b16 %v116
    %v421 = vunpack.c.l.b16 %v117
    %v422 = vunpack.c.l.b16 %v118
    %v423 = vunpack.c.l.b16 %v119
    %v424 = vunpack.c.l.b16 %v120
    %v425 = vunpack.c.l.b16 %v121
    %v426 = vunpack.c.l.b16 %v122
    %v427 = vunpack.c.l.b16 %v123
    %v428 = vunpack.c.l.b16 %v124
    %v429 = vunpack.c.l.b16 %v125
    %v430 = vunpack.c.l.b16 %v126
    %v431 = vunpack.c.l.b16 %v127
    %v432 = vunpack.c.l.b16 %v128
    %v433 = vunpack.c.l.b16 %v129
    %v434 = vunpack.c.l.b16 %v130
    %v435 = vunpack.c.l.b16 %v131
    %v436 = vunpack.c.l.b16 %v132
    %v437 = vunpack.c.l.b16 %v133
    %v438 = vunpack.c.l.b16 %v134
    %v439 = vunpack.c.l.b16 %v135
    %v440 = vunpack.c.l.b16 %v136
    %v441 = vunpack.c.l.b16 %v137
    %v442 = vunpack.c.l.b16 %v138
    %v443 = vunpack.c.l.b16 %v139
    %v444 = vunpack.c.l.b16 %v140
    %v445 = vunpack.c.l.b16 %v141
    %v446 = vunpack.c.l.b16 %v142
    %v447 = vunpack.c.l.b16 %v143
    %v448 = vunpack.c.l.b16 %v144
    %v449 = vunpack.c.l.b16 %v145
    %v450 = vunpack.c.l.b16 %v146
    %v451 = vunpack.c.l.b16 %v147
    %v452 = vunpack.c.l.b16 %v148
    %v453 = vunpack.c.l.b16 %v149
    %v454 = vunpack.c.l.b16 %v150
    %v455 = vunpack.c.l.b16 %v151
    %v456 = vunpack.c.l.b16 %v152
    %v457 = vunpack.c.l.b16 %v153
    %v458 = vunpack.c.l.b16 %v154
    %v459 = vunpack.c.l.b16 %v179
    %v460 = vunpack.c.l.b16 %v180
    %v461 = vunpack.c.l.b16 %v181
    %v462 = vunpack.c.l.b16 %v182
    %v463 = vpack.c.b16 %v328, %v327
    %v464 = vpack.c.b16 %v330, %v329
    %v465 = vpack.c.b16 %v332, %v331
    %v466 = vpack.c.b16 %v334, %v333
    %v467 = vpack.c.b16 %v336, %v335
    %v468 = vpack.c.b16 %v338, %v337
    %v469 = vpack.c.b16 %v340, %v339
    %v470 = vpack.c.b16 %v342, %v341
    %v471 = vpack.c.b16 %v344, %v343
    %v472 = vpack.c.b16 %v346, %v345
    %v473 = vpack.c.b16 %v348, %v347
    %v474 = vpack.c.b16 %v350, %v349
    %v475 = vpack.c.b16 %v352, %v351
    %v476 = vpack.c.b16 %v354, %v353
    %v477 = vpack.c.b16 %v356, %v355
    %v478 = vpack.c.b16 %v358, %v357
    %v479 = vpack.c.b16 %v360, %v359
    %v480 = vpack.c.b16 %v362, %v361
    %v481 = vpack.c.b16 %v364, %v363
    %v482 = vpack.c.b16 %v366, %v365
    %v483 = vpack.c.b16 %v368, %v367
    %v484 = vpack.c.b16 %v370, %v369
    %v485 = vpack.c.b16 %v372, %v371
    %v486 = vpack.c.b16 %v374, %v373
    %v487 = vpack.c.b16 %v376, %v375
    %v488 = vpack.c.b16 %v378, %v377
    %v489 = vpack.c.b16 %v380, %v379
    %v490 = vpack.c.b16 %v382, %v381
    %v491 = vpack.c.b16 %v384, %v383
    %v492 = vpack.c.b16 %v386, %v385
    %v493 = vpack.c.b16 %v388, %v387
    %v494 = vpack.c.b16 %v390, %v389
    %v495 = vpack.c.b16 %v392, %v391
    %v496 = vpack.c.b16 %v394, %v393
    %v497 = vpack.c.b16 %v396, %v395
    %v498 = vpack.c.b16 %v398, %v397
    %v499 = vpack.c.b16 %v400, %v399
    %v500 = vpack.c.b16 %v402, %v401
    %v501 = vpack.c.b16 %v404, %v403
    %v502 = vpack.c.b16 %v406, %v405
    %v503 = vpack.c.b16 %v408, %v407
    %v504 = vpack.c.b16 %v410, %v409
    %v505 = vpack.c.b16 %v412, %v411
    %v506 = vpack.c.b16 %v414, %v413
    %v507 = vpack.c.b16 %v416, %v415
    %v508 = vpack.c.b16 %v418, %v417
    %v509 = vpack.c.b16 %v420, %v419
    %v510 = vpack.c.b16 %v422, %v421
    %v511 = vpack.c.b16 %v424, %v423
    %v512 = vpack.c.b16 %v426, %v425
    %v513 = vpack.c.b16 %v428, %v427
    %v514 = vpack.c.b16 %v430, %v429
    %v515 = vpack.c.b16 %v432, %v431
    %v516 = vpack.c.b16 %v434, %v433
    %v517 = vpack.c.b16 %v436, %v435
    %v518 = vpack.c.b16 %v438, %v437
    %v519 = vpack.c.b16 %v440, %v439
    %v520 = vpack.c.b16 %v442, %v441
    %v521 = vpack.c.b16 %v444, %v443
    %v522 = vpack.c.b16 %v446, %v445
    %v523 = vpack.c.b16 %v448, %v447
    %v524 = vpack.c.b16 %v450, %v449
    %v525 = vpack.c.b16 %v452, %v451
    %v526 = vpack.c.b16 %v454, %v453
    %v527 = vpack.c.b16 %v456, %v455
    %v528 = vpack.c.b16 %v458, %v457
    %v529 = vpack.c.b16 %v460, %v459
    %v530 = vpack.c.b16 %v462, %v461
    %v539 = vunpack.c.l.b16 %v183
    %v540 = vunpack.c.l.b16 %v184
    %v541 = vunpack.c.l.b16 %v185
    %v542 = vunpack.c.l.b16 %v186
    %v543 = vunpack.c.l.b16 %v187
    %v544 = vunpack.c.l.b16 %v188
    %v545 = vunpack.c.l.b16 %v189
    %v546 = vunpack.c.l.b16 %v190
    %v547 = vpack.c.b16 %v540, %v539
    %v548 = vpack.c.b16 %v542, %v541
    %v549 = vpack.c.b16 %v544, %v543
    %v550 = vpack.c.b16 %v546, %v545
    %vm555 = vcmask 523264
    %v557 = vsel %vm555, %v463, 0
    %v560 = vsel %vm555, %v464, 0
    %v563 = vsel %vm555, %v465, 0
    %v566 = vsel %vm555, %v466, 0
    %v569 = vsel %vm555, %v467, 0
    %v572 = vsel %vm555, %v468, 0
    %v575 = vsel %vm555, %v469, 0
    %v578 = vsel %vm555, %v470, 0
    %v581 = vsel %vm555, %v471, 0
    %v584 = vsel %vm555, %v472, 0
    %v587 = vsel %vm555, %v473, 0
    %v590 = vsel %vm555, %v474, 0
    %v593 = vsel %vm555, %v475, 0
    %v596 = vsel %vm555, %v476, 0
    %v599 = vsel %vm555, %v477, 0
    %v602 = vsel %vm555, %v478, 0
    %v605 = vsel %vm555, %v479, 0
    %v608 = vsel %vm555, %v480, 0
    %v611 = vsel %vm555, %v481, 0
    %v614 = vsel %vm555, %v482, 0
    %v617 = vsel %vm555, %v483, 0
    %v620 = vsel %vm555, %v484, 0
    %v623 = vsel %vm555, %v485, 0
    %v626 = vsel %vm555, %v486, 0
    %v629 = vsel %vm555, %v487, 0
    %v632 = vsel %vm555, %v488, 0
    %v635 = vsel %vm555, %v489, 0
    %v638 = vsel %vm555, %v490, 0
    %v641 = vsel %vm555, %v491, 0
    %v644 = vsel %vm555, %v492, 0
    %v647 = vsel %vm555, %v493, 0
    %v650 = vsel %vm555, %v494, 0
    %v653 = vsel %vm555, %v495, 0
    %v656 = vsel %vm555, %v496, 0
    %v659 = vsel %vm555, %v497, 0
    %v662 = vsel %vm555, %v498, 0
    %v665 = vsel %vm555, %v499, 0
    %v668 = vsel %vm555, %v500, 0
    %v671 = vsel %vm555, %v501, 0
    %v674 = vsel %vm555, %v502, 0
    %v677 = vsel %vm555, %v503, 0
    %v680 = vsel %vm555, %v504, 0
    %v683 = vsel %vm555, %v505, 0
    %v686 = vsel %vm555, %v506, 0
    %v689 = vsel %vm555, %v507, 0
    %v692 = vsel %vm555, %v508, 0
    %v695 = vsel %vm555, %v509, 0
    %v698 = vsel %vm555, %v510, 0
    %v701 = vsel %vm555, %v511, 0
    %v704 = vsel %vm555, %v512, 0
    %v707 = vsel %vm555, %v513, 0
    %v710 = vsel %vm555, %v514, 0
    %v713 = vsel %vm555, %v515, 0
    %v716 = vsel %vm555, %v516, 0
    %v719 = vsel %vm555, %v517, 0
    %v722 = vsel %vm555, %v518, 0
    %v725 = vsel %vm555, %v519, 0
    %v728 = vsel %vm555, %v520, 0
    %v731 = vsel %vm555, %v521, 0
    %v734 = vsel %vm555, %v522, 0
    %v737 = vsel %vm555, %v523, 0
    %v740 = vsel %vm555, %v524, 0
    %v743 = vsel %vm555, %v525, 0
    %v746 = vsel %vm555, %v526, 0
    %v749 = vsel %vm555, %v527, 0
    %v752 = vsel %vm555, %v528, 0
    %v755 = vsel %vm555, %v529, 0
    %v758 = vsel %vm555, %v530, 0
    %760 = vmatpush.bf16.msra.mxu0 0
    %761 = vmatpush.bf16.msra.mxu0 0
    %762 = vmatpush.bf16.msra.mxu0 0
    %763 = vmatpush.bf16.msra.mxu0 0
    %764 = vmatpush.bf16.msra.mxu0 %v550
    %765 = vmatpush.bf16.msra.mxu0 %v549
    %766 = vmatpush.bf16.msra.mxu0 %v548
    %767 = vmatpush.bf16.msra.mxu0 %v547
    %768 = vmatmul.bf16.gmra.mxu0 %v557
    %v769 = vpop.f32.mrf.mxu0
    %v770 = vadd.f32 0.0, %v769
    %v771 = vpop.f32.mrf.mxu0
    %v772 = vadd.f32 0.0, %v771
    %773 = vmatmul.bf16.gmra.mxu0 %v560
    %v774 = vpop.f32.mrf.mxu0
    %v775 = vpop.f32.mrf.mxu0
    %776 = vmatmul.bf16.gmra.mxu0 %v563
    %v777 = vpop.f32.mrf.mxu0
    %v778 = vadd.f32 0.0, %v777
    %v779 = vpop.f32.mrf.mxu0
    %v780 = vadd.f32 0.0, %v779
    %781 = vmatmul.bf16.gmra.mxu0 %v566
    %v782 = vpop.f32.mrf.mxu0
    %v783 = vpop.f32.mrf.mxu0
    %784 = vmatmul.bf16.gmra.mxu0 %v569
    %v785 = vpop.f32.mrf.mxu0
    %v786 = vadd.f32 0.0, %v785
    %v787 = vpop.f32.mrf.mxu0
    %v788 = vadd.f32 0.0, %v787
    %789 = vmatmul.bf16.gmra.mxu0 %v572
    %v790 = vpop.f32.mrf.mxu0
    %v791 = vpop.f32.mrf.mxu0
    %792 = vmatmul.bf16.gmra.mxu0 %v575
    %v793 = vpop.f32.mrf.mxu0
    %v794 = vadd.f32 0.0, %v793
    %v795 = vpop.f32.mrf.mxu0
    %v796 = vadd.f32 0.0, %v795
    %797 = vmatmul.bf16.gmra.mxu0 %v578
    %v798 = vpop.f32.mrf.mxu0
    %v799 = vpop.f32.mrf.mxu0
    %800 = vmatmul.bf16.gmra.mxu0 %v581
    %v801 = vpop.f32.mrf.mxu0
    %v802 = vadd.f32 0.0, %v801
    %v803 = vpop.f32.mrf.mxu0
    %v804 = vadd.f32 0.0, %v803
    %805 = vmatmul.bf16.gmra.mxu0 %v584
    %v806 = vpop.f32.mrf.mxu0
    %v807 = vpop.f32.mrf.mxu0
    %808 = vmatmul.bf16.gmra.mxu0 %v587
    %v809 = vpop.f32.mrf.mxu0
    %v810 = vadd.f32 0.0, %v809
    %v811 = vpop.f32.mrf.mxu0
    %v812 = vadd.f32 0.0, %v811
    %813 = vmatmul.bf16.gmra.mxu0 %v590
    %v814 = vpop.f32.mrf.mxu0
    %v815 = vpop.f32.mrf.mxu0
    %816 = vmatmul.bf16.gmra.mxu0 %v593
    %v817 = vpop.f32.mrf.mxu0
    %v818 = vadd.f32 0.0, %v817
    %v819 = vpop.f32.mrf.mxu0
    %v820 = vadd.f32 0.0, %v819
    %821 = vmatmul.bf16.gmra.mxu0 %v596
    %v822 = vpop.f32.mrf.mxu0
    %v823 = vpop.f32.mrf.mxu0
    %824 = vmatmul.bf16.gmra.mxu0 %v599
    %v825 = vpop.f32.mrf.mxu0
    %v826 = vadd.f32 0.0, %v825
    %v827 = vpop.f32.mrf.mxu0
    %v828 = vadd.f32 0.0, %v827
    %829 = vmatmul.bf16.gmra.mxu0 %v602
    %v830 = vpop.f32.mrf.mxu0
    %v831 = vpop.f32.mrf.mxu0
    %832 = vmatmul.bf16.gmra.mxu0 %v605
    %v833 = vpop.f32.mrf.mxu0
    %v834 = vadd.f32 0.0, %v833
    %v835 = vpop.f32.mrf.mxu0
    %v836 = vadd.f32 0.0, %v835
    %837 = vmatmul.bf16.gmra.mxu0 %v608
    %v838 = vpop.f32.mrf.mxu0
    %v839 = vpop.f32.mrf.mxu0
    %840 = vmatmul.bf16.gmra.mxu0 %v611
    %v841 = vpop.f32.mrf.mxu0
    %v842 = vadd.f32 0.0, %v841
    %v843 = vpop.f32.mrf.mxu0
    %v844 = vadd.f32 0.0, %v843
    %845 = vmatmul.bf16.gmra.mxu0 %v614
    %v846 = vpop.f32.mrf.mxu0
    %v847 = vpop.f32.mrf.mxu0
    %848 = vmatmul.bf16.gmra.mxu0 %v617
    %v849 = vpop.f32.mrf.mxu0
    %v850 = vadd.f32 0.0, %v849
    %v851 = vpop.f32.mrf.mxu0
    %v852 = vadd.f32 0.0, %v851
    %853 = vmatmul.bf16.gmra.mxu0 %v620
    %v854 = vpop.f32.mrf.mxu0
    %v855 = vpop.f32.mrf.mxu0
    %856 = vmatmul.bf16.gmra.mxu0 %v623
    %v857 = vpop.f32.mrf.mxu0
    %v858 = vadd.f32 0.0, %v857
    %v859 = vpop.f32.mrf.mxu0
    %v860 = vadd.f32 0.0, %v859
    %861 = vmatmul.bf16.gmra.mxu0 %v626
    %v862 = vpop.f32.mrf.mxu0
    %v863 = vpop.f32.mrf.mxu0
    %864 = vmatmul.bf16.gmra.mxu0 %v629
    %v865 = vpop.f32.mrf.mxu0
    %v866 = vadd.f32 0.0, %v865
    %v867 = vpop.f32.mrf.mxu0
    %v868 = vadd.f32 0.0, %v867
    %869 = vmatmul.bf16.gmra.mxu0 %v632
    %v870 = vpop.f32.mrf.mxu0
    %v871 = vpop.f32.mrf.mxu0
    %872 = vmatmul.bf16.gmra.mxu0 %v635
    %v873 = vpop.f32.mrf.mxu0
    %v874 = vadd.f32 0.0, %v873
    %v875 = vpop.f32.mrf.mxu0
    %v876 = vadd.f32 0.0, %v875
    %877 = vmatmul.bf16.gmra.mxu0 %v638
    %v878 = vpop.f32.mrf.mxu0
    %v879 = vpop.f32.mrf.mxu0
    %880 = vmatmul.bf16.gmra.mxu0 %v641
    %v881 = vpop.f32.mrf.mxu0
    %v882 = vadd.f32 0.0, %v881
    %v883 = vpop.f32.mrf.mxu0
    %v884 = vadd.f32 0.0, %v883
    %885 = vmatmul.bf16.gmra.mxu0 %v644
    %v886 = vpop.f32.mrf.mxu0
    %v887 = vpop.f32.mrf.mxu0
    %888 = vmatmul.bf16.gmra.mxu0 %v647
    %v889 = vpop.f32.mrf.mxu0
    %v890 = vadd.f32 0.0, %v889
    %v891 = vpop.f32.mrf.mxu0
    %v892 = vadd.f32 0.0, %v891
    %893 = vmatmul.bf16.gmra.mxu0 %v650
    %v894 = vpop.f32.mrf.mxu0
    %v895 = vpop.f32.mrf.mxu0
    %896 = vmatmul.bf16.gmra.mxu0 %v653
    %v897 = vpop.f32.mrf.mxu0
    %v898 = vpop.f32.mrf.mxu0
    %899 = vmatmul.bf16.gmra.mxu0 %v656
    %v900 = vpop.f32.mrf.mxu0
    %v901 = vpop.f32.mrf.mxu0
    %902 = vmatmul.bf16.gmra.mxu0 %v659
    %v903 = vpop.f32.mrf.mxu0
    %v904 = vpop.f32.mrf.mxu0
    %905 = vmatmul.bf16.gmra.mxu0 %v662
    %v906 = vpop.f32.mrf.mxu0
    %v907 = vpop.f32.mrf.mxu0
    %908 = vmatmul.bf16.gmra.mxu0 %v665
    %v909 = vpop.f32.mrf.mxu0
    %v910 = vadd.f32 0.0, %v909
    %v911 = vpop.f32.mrf.mxu0
    %v912 = vadd.f32 0.0, %v911
    %913 = vmatmul.bf16.gmra.mxu0 %v668
    %v914 = vpop.f32.mrf.mxu0
    %v915 = vpop.f32.mrf.mxu0
    %916 = vmatmul.bf16.gmra.mxu0 %v671
    %v917 = vpop.f32.mrf.mxu0
    %v918 = vadd.f32 0.0, %v917
    %v919 = vpop.f32.mrf.mxu0
    %v920 = vadd.f32 0.0, %v919
    %921 = vmatmul.bf16.gmra.mxu0 %v674
    %v922 = vpop.f32.mrf.mxu0
    %v923 = vpop.f32.mrf.mxu0
    %924 = vmatmul.bf16.gmra.mxu0 %v677
    %v925 = vpop.f32.mrf.mxu0
    %v926 = vadd.f32 0.0, %v925
    %v927 = vpop.f32.mrf.mxu0
    %v928 = vadd.f32 0.0, %v927
    %929 = vmatmul.bf16.gmra.mxu0 %v680
    %v930 = vpop.f32.mrf.mxu0
    %v931 = vpop.f32.mrf.mxu0
    %932 = vmatmul.bf16.gmra.mxu0 %v683
    %v933 = vpop.f32.mrf.mxu0
    %v934 = vadd.f32 0.0, %v933
    %v935 = vpop.f32.mrf.mxu0
    %v936 = vadd.f32 0.0, %v935
    %937 = vmatmul.bf16.gmra.mxu0 %v686
    %v938 = vpop.f32.mrf.mxu0
    %v939 = vpop.f32.mrf.mxu0
    %940 = vmatmul.bf16.gmra.mxu0 %v689
    %v941 = vpop.f32.mrf.mxu0
    %v942 = vadd.f32 0.0, %v941
    %v943 = vpop.f32.mrf.mxu0
    %v944 = vadd.f32 0.0, %v943
    %945 = vmatmul.bf16.gmra.mxu0 %v692
    %v946 = vpop.f32.mrf.mxu0
    %v947 = vpop.f32.mrf.mxu0
    %948 = vmatmul.bf16.gmra.mxu0 %v695
    %v949 = vpop.f32.mrf.mxu0
    %v950 = vadd.f32 0.0, %v949
    %v951 = vpop.f32.mrf.mxu0
    %v952 = vadd.f32 0.0, %v951
    %953 = vmatmul.bf16.gmra.mxu0 %v698
    %v954 = vpop.f32.mrf.mxu0
    %v955 = vpop.f32.mrf.mxu0
    %956 = vmatmul.bf16.gmra.mxu0 %v701
    %v957 = vpop.f32.mrf.mxu0
    %v958 = vadd.f32 0.0, %v957
    %v959 = vpop.f32.mrf.mxu0
    %v960 = vadd.f32 0.0, %v959
    %961 = vmatmul.bf16.gmra.mxu0 %v704
    %v962 = vpop.f32.mrf.mxu0
    %v963 = vpop.f32.mrf.mxu0
    %964 = vmatmul.bf16.gmra.mxu0 %v707
    %v965 = vpop.f32.mrf.mxu0
    %v966 = vadd.f32 0.0, %v965
    %v967 = vpop.f32.mrf.mxu0
    %v968 = vadd.f32 0.0, %v967
    %969 = vmatmul.bf16.gmra.mxu0 %v710
    %v970 = vpop.f32.mrf.mxu0
    %v971 = vpop.f32.mrf.mxu0
    %972 = vmatmul.bf16.gmra.mxu0 %v713
    %v973 = vpop.f32.mrf.mxu0
    %v974 = vadd.f32 0.0, %v973
    %v975 = vpop.f32.mrf.mxu0
    %v976 = vadd.f32 0.0, %v975
    %977 = vmatmul.bf16.gmra.mxu0 %v716
    %v978 = vpop.f32.mrf.mxu0
    %v979 = vpop.f32.mrf.mxu0
    %980 = vmatmul.bf16.gmra.mxu0 %v719
    %v981 = vpop.f32.mrf.mxu0
    %v982 = vadd.f32 0.0, %v981
    %v983 = vpop.f32.mrf.mxu0
    %v984 = vadd.f32 0.0, %v983
    %985 = vmatmul.bf16.gmra.mxu0 %v722
    %v986 = vpop.f32.mrf.mxu0
    %v987 = vpop.f32.mrf.mxu0
    %988 = vmatmul.bf16.gmra.mxu0 %v725
    %v989 = vpop.f32.mrf.mxu0
    %v990 = vadd.f32 0.0, %v989
    %v991 = vpop.f32.mrf.mxu0
    %v992 = vadd.f32 0.0, %v991
    %993 = vmatmul.bf16.gmra.mxu0 %v728
    %v994 = vpop.f32.mrf.mxu0
    %v995 = vpop.f32.mrf.mxu0
    %996 = vmatmul.bf16.gmra.mxu0 %v731
    %v997 = vpop.f32.mrf.mxu0
    %v998 = vadd.f32 0.0, %v997
    %v999 = vpop.f32.mrf.mxu0
    %v1000 = vadd.f32 0.0, %v999
    %1001 = vmatmul.bf16.gmra.mxu0 %v734
    %v1002 = vpop.f32.mrf.mxu0
    %v1003 = vpop.f32.mrf.mxu0
    %1004 = vmatmul.bf16.gmra.mxu0 %v737
    %v1005 = vpop.f32.mrf.mxu0
    %v1006 = vadd.f32 0.0, %v1005
    %v1007 = vpop.f32.mrf.mxu0
    %v1008 = vadd.f32 0.0, %v1007
    %1009 = vmatmul.bf16.gmra.mxu0 %v740
    %v1010 = vpop.f32.mrf.mxu0
    %v1011 = vpop.f32.mrf.mxu0
    %1012 = vmatmul.bf16.gmra.mxu0 %v743
    %v1013 = vpop.f32.mrf.mxu0
    %v1014 = vadd.f32 0.0, %v1013
    %v1015 = vpop.f32.mrf.mxu0
    %v1016 = vadd.f32 0.0, %v1015
    %1017 = vmatmul.bf16.gmra.mxu0 %v746
    %v1018 = vpop.f32.mrf.mxu0
    %v1019 = vpop.f32.mrf.mxu0
    %1020 = vmatmul.bf16.gmra.mxu0 %v749
    %v1021 = vpop.f32.mrf.mxu0
    %v1022 = vadd.f32 0.0, %v1021
    %v1023 = vpop.f32.mrf.mxu0
    %v1024 = vadd.f32 0.0, %v1023
    %1025 = vmatmul.bf16.gmra.mxu0 %v752
    %v1026 = vpop.f32.mrf.mxu0
    %v1027 = vpop.f32.mrf.mxu0
    %1028 = vmatmul.bf16.gmra.mxu0 %v755
    %v1029 = vpop.f32.mrf.mxu0
    %v1030 = vadd.f32 0.0, %v1029
    %v1031 = vpop.f32.mrf.mxu0
    %v1032 = vadd.f32 0.0, %v1031
    %1033 = vmatmul.bf16.gmra.mxu0 %v758
    %v1034 = vpop.f32.mrf.mxu0
    %v1035 = vpop.f32.mrf.mxu0
    %1036 = vdwg.mxu0
    %v1041 = vunpack.c.l.b16 %v19
    %v1042 = vunpack.c.l.b16 %v20
    %v1043 = vunpack.c.l.b16 %v21
    %v1044 = vunpack.c.l.b16 %v22
    %v1045 = vpack.c.b16 %v1042, %v1041
    %v1046 = vpack.c.b16 %v1044, %v1043
    %v1055 = vunpack.c.l.b16 %v155
    %v1056 = vunpack.c.l.b16 %v156
    %v1057 = vunpack.c.l.b16 %v157
    %v1058 = vunpack.c.l.b16 %v158
    %v1059 = vunpack.c.l.b16 %v159
    %v1060 = vunpack.c.l.b16 %v160
    %v1061 = vunpack.c.l.b16 %v161
    %v1062 = vunpack.c.l.b16 %v162
    %v1063 = vpack.c.b16 %v1056, %v1055
    %v1064 = vpack.c.b16 %v1058, %v1057
    %v1065 = vpack.c.b16 %v1060, %v1059
    %v1066 = vpack.c.b16 %v1062, %v1061
    %v1072 = vsel %vm555, %v1045, 0
    %v1075 = vsel %vm555, %v1046, 0
    %1077 = vmatpush.bf16.msra.mxu0 0
    %1078 = vmatpush.bf16.msra.mxu0 0
    %1079 = vmatpush.bf16.msra.mxu0 0
    %1080 = vmatpush.bf16.msra.mxu0 0
    %1081 = vmatpush.bf16.msra.mxu0 %v1066
    %1082 = vmatpush.bf16.msra.mxu0 %v1065
    %1083 = vmatpush.bf16.msra.mxu0 %v1064
    %1084 = vmatpush.bf16.msra.mxu0 %v1063
    %1085 = vmatmul.bf16.gmra.mxu0 %v1072
    %v1086 = vpop.f32.mrf.mxu0
    %v1087 = vadd.f32 %v770, %v1086
    %v1088 = vpop.f32.mrf.mxu0
    %v1089 = vadd.f32 %v772, %v1088
    %1090 = vmatmul.bf16.gmra.mxu0 %v1075
    %v1091 = vpop.f32.mrf.mxu0
    %v1092 = vpop.f32.mrf.mxu0
    %1093 = vmatmul.bf16.gmra.mxu0 %v557
    %v1094 = vpop.f32.mrf.mxu0
    %v1095 = vadd.f32 %v778, %v1094
    %v1096 = vpop.f32.mrf.mxu0
    %v1097 = vadd.f32 %v780, %v1096
    %1098 = vmatmul.bf16.gmra.mxu0 %v560
    %v1099 = vpop.f32.mrf.mxu0
    %v1100 = vpop.f32.mrf.mxu0
    %1101 = vmatmul.bf16.gmra.mxu0 %v563
    %v1102 = vpop.f32.mrf.mxu0
    %v1103 = vadd.f32 %v786, %v1102
    %v1104 = vpop.f32.mrf.mxu0
    %v1105 = vadd.f32 %v788, %v1104
    %1106 = vmatmul.bf16.gmra.mxu0 %v566
    %v1107 = vpop.f32.mrf.mxu0
    %v1108 = vpop.f32.mrf.mxu0
    %1109 = vmatmul.bf16.gmra.mxu0 %v569
    %v1110 = vpop.f32.mrf.mxu0
    %v1111 = vadd.f32 %v794, %v1110
    %v1112 = vpop.f32.mrf.mxu0
    %v1113 = vadd.f32 %v796, %v1112
    %1114 = vmatmul.bf16.gmra.mxu0 %v572
    %v1115 = vpop.f32.mrf.mxu0
    %v1116 = vpop.f32.mrf.mxu0
    %1117 = vmatmul.bf16.gmra.mxu0 %v575
    %v1118 = vpop.f32.mrf.mxu0
    %v1119 = vadd.f32 %v802, %v1118
    %v1120 = vpop.f32.mrf.mxu0
    %v1121 = vadd.f32 %v804, %v1120
    %1122 = vmatmul.bf16.gmra.mxu0 %v578
    %v1123 = vpop.f32.mrf.mxu0
    %v1124 = vpop.f32.mrf.mxu0
    %1125 = vmatmul.bf16.gmra.mxu0 %v581
    %v1126 = vpop.f32.mrf.mxu0
    %v1127 = vadd.f32 %v810, %v1126
    %v1128 = vpop.f32.mrf.mxu0
    %v1129 = vadd.f32 %v812, %v1128
    %1130 = vmatmul.bf16.gmra.mxu0 %v584
    %v1131 = vpop.f32.mrf.mxu0
    %v1132 = vpop.f32.mrf.mxu0
    %1133 = vmatmul.bf16.gmra.mxu0 %v587
    %v1134 = vpop.f32.mrf.mxu0
    %v1135 = vadd.f32 %v818, %v1134
    %v1136 = vpop.f32.mrf.mxu0
    %v1137 = vadd.f32 %v820, %v1136
    %1138 = vmatmul.bf16.gmra.mxu0 %v590
    %v1139 = vpop.f32.mrf.mxu0
    %v1140 = vpop.f32.mrf.mxu0
    %1141 = vmatmul.bf16.gmra.mxu0 %v593
    %v1142 = vpop.f32.mrf.mxu0
    %v1143 = vadd.f32 %v826, %v1142
    %v1144 = vpop.f32.mrf.mxu0
    %v1145 = vadd.f32 %v828, %v1144
    %1146 = vmatmul.bf16.gmra.mxu0 %v596
    %v1147 = vpop.f32.mrf.mxu0
    %v1148 = vpop.f32.mrf.mxu0
    %1149 = vmatmul.bf16.gmra.mxu0 %v599
    %v1150 = vpop.f32.mrf.mxu0
    %v1151 = vadd.f32 %v834, %v1150
    %v1152 = vpop.f32.mrf.mxu0
    %v1153 = vadd.f32 %v836, %v1152
    %1154 = vmatmul.bf16.gmra.mxu0 %v602
    %v1155 = vpop.f32.mrf.mxu0
    %v1156 = vpop.f32.mrf.mxu0
    %1157 = vmatmul.bf16.gmra.mxu0 %v605
    %v1158 = vpop.f32.mrf.mxu0
    %v1159 = vadd.f32 %v842, %v1158
    %v1160 = vpop.f32.mrf.mxu0
    %v1161 = vadd.f32 %v844, %v1160
    %1162 = vmatmul.bf16.gmra.mxu0 %v608
    %v1163 = vpop.f32.mrf.mxu0
    %v1164 = vpop.f32.mrf.mxu0
    %1165 = vmatmul.bf16.gmra.mxu0 %v611
    %v1166 = vpop.f32.mrf.mxu0
    %v1167 = vadd.f32 %v850, %v1166
    %v1168 = vpop.f32.mrf.mxu0
    %v1169 = vadd.f32 %v852, %v1168
    %1170 = vmatmul.bf16.gmra.mxu0 %v614
    %v1171 = vpop.f32.mrf.mxu0
    %v1172 = vpop.f32.mrf.mxu0
    %1173 = vmatmul.bf16.gmra.mxu0 %v617
    %v1174 = vpop.f32.mrf.mxu0
    %v1175 = vadd.f32 %v858, %v1174
    %v1176 = vpop.f32.mrf.mxu0
    %v1177 = vadd.f32 %v860, %v1176
    %1178 = vmatmul.bf16.gmra.mxu0 %v620
    %v1179 = vpop.f32.mrf.mxu0
    %v1180 = vpop.f32.mrf.mxu0
    %1181 = vmatmul.bf16.gmra.mxu0 %v623
    %v1182 = vpop.f32.mrf.mxu0
    %v1183 = vadd.f32 %v866, %v1182
    %v1184 = vpop.f32.mrf.mxu0
    %v1185 = vadd.f32 %v868, %v1184
    %1186 = vmatmul.bf16.gmra.mxu0 %v626
    %v1187 = vpop.f32.mrf.mxu0
    %v1188 = vpop.f32.mrf.mxu0
    %1189 = vmatmul.bf16.gmra.mxu0 %v629
    %v1190 = vpop.f32.mrf.mxu0
    %v1191 = vadd.f32 %v874, %v1190
    %v1192 = vpop.f32.mrf.mxu0
    %v1193 = vadd.f32 %v876, %v1192
    %1194 = vmatmul.bf16.gmra.mxu0 %v632
    %v1195 = vpop.f32.mrf.mxu0
    %v1196 = vpop.f32.mrf.mxu0
    %1197 = vmatmul.bf16.gmra.mxu0 %v635
    %v1198 = vpop.f32.mrf.mxu0
    %v1199 = vadd.f32 %v882, %v1198
    %v1200 = vpop.f32.mrf.mxu0
    %v1201 = vadd.f32 %v884, %v1200
    %1202 = vmatmul.bf16.gmra.mxu0 %v638
    %v1203 = vpop.f32.mrf.mxu0
    %v1204 = vpop.f32.mrf.mxu0
    %1205 = vmatmul.bf16.gmra.mxu0 %v641
    %v1206 = vpop.f32.mrf.mxu0
    %v1207 = vadd.f32 %v890, %v1206
    %v1208 = vpop.f32.mrf.mxu0
    %v1209 = vadd.f32 %v892, %v1208
    %1210 = vmatmul.bf16.gmra.mxu0 %v644
    %v1211 = vpop.f32.mrf.mxu0
    %v1212 = vpop.f32.mrf.mxu0
    %1213 = vmatmul.bf16.gmra.mxu0 %v647
    %v1214 = vpop.f32.mrf.mxu0
    %v1215 = vpop.f32.mrf.mxu0
    %1216 = vmatmul.bf16.gmra.mxu0 %v650
    %v1217 = vpop.f32.mrf.mxu0
    %v1218 = vpop.f32.mrf.mxu0
    %1219 = vmatmul.bf16.gmra.mxu0 %v653
    %v1220 = vpop.f32.mrf.mxu0
    %v1221 = vpop.f32.mrf.mxu0
    %1222 = vmatmul.bf16.gmra.mxu0 %v656
    %v1223 = vpop.f32.mrf.mxu0
    %v1224 = vpop.f32.mrf.mxu0
    %1225 = vmatmul.bf16.gmra.mxu0 %v659
    %v1226 = vpop.f32.mrf.mxu0
    %v1227 = vadd.f32 %v910, %v1226
    %v1228 = vpop.f32.mrf.mxu0
    %v1229 = vadd.f32 %v912, %v1228
    %1230 = vmatmul.bf16.gmra.mxu0 %v662
    %v1231 = vpop.f32.mrf.mxu0
    %v1232 = vpop.f32.mrf.mxu0
    %1233 = vmatmul.bf16.gmra.mxu0 %v665
    %v1234 = vpop.f32.mrf.mxu0
    %v1235 = vadd.f32 %v918, %v1234
    %v1236 = vpop.f32.mrf.mxu0
    %v1237 = vadd.f32 %v920, %v1236
    %1238 = vmatmul.bf16.gmra.mxu0 %v668
    %v1239 = vpop.f32.mrf.mxu0
    %v1240 = vpop.f32.mrf.mxu0
    %1241 = vmatmul.bf16.gmra.mxu0 %v671
    %v1242 = vpop.f32.mrf.mxu0
    %v1243 = vadd.f32 %v926, %v1242
    %v1244 = vpop.f32.mrf.mxu0
    %v1245 = vadd.f32 %v928, %v1244
    %1246 = vmatmul.bf16.gmra.mxu0 %v674
    %v1247 = vpop.f32.mrf.mxu0
    %v1248 = vpop.f32.mrf.mxu0
    %1249 = vmatmul.bf16.gmra.mxu0 %v677
    %v1250 = vpop.f32.mrf.mxu0
    %v1251 = vadd.f32 %v934, %v1250
    %v1252 = vpop.f32.mrf.mxu0
    %v1253 = vadd.f32 %v936, %v1252
    %1254 = vmatmul.bf16.gmra.mxu0 %v680
    %v1255 = vpop.f32.mrf.mxu0
    %v1256 = vpop.f32.mrf.mxu0
    %1257 = vmatmul.bf16.gmra.mxu0 %v683
    %v1258 = vpop.f32.mrf.mxu0
    %v1259 = vadd.f32 %v942, %v1258
    %v1260 = vpop.f32.mrf.mxu0
    %v1261 = vadd.f32 %v944, %v1260
    %1262 = vmatmul.bf16.gmra.mxu0 %v686
    %v1263 = vpop.f32.mrf.mxu0
    %v1264 = vpop.f32.mrf.mxu0
    %1265 = vmatmul.bf16.gmra.mxu0 %v689
    %v1266 = vpop.f32.mrf.mxu0
    %v1267 = vadd.f32 %v950, %v1266
    %v1268 = vpop.f32.mrf.mxu0
    %v1269 = vadd.f32 %v952, %v1268
    %1270 = vmatmul.bf16.gmra.mxu0 %v692
    %v1271 = vpop.f32.mrf.mxu0
    %v1272 = vpop.f32.mrf.mxu0
    %1273 = vmatmul.bf16.gmra.mxu0 %v695
    %v1274 = vpop.f32.mrf.mxu0
    %v1275 = vadd.f32 %v958, %v1274
    %v1276 = vpop.f32.mrf.mxu0
    %v1277 = vadd.f32 %v960, %v1276
    %1278 = vmatmul.bf16.gmra.mxu0 %v698
    %v1279 = vpop.f32.mrf.mxu0
    %v1280 = vpop.f32.mrf.mxu0
    %1281 = vmatmul.bf16.gmra.mxu0 %v701
    %v1282 = vpop.f32.mrf.mxu0
    %v1283 = vadd.f32 %v966, %v1282
    %v1284 = vpop.f32.mrf.mxu0
    %v1285 = vadd.f32 %v968, %v1284
    %1286 = vmatmul.bf16.gmra.mxu0 %v704
    %v1287 = vpop.f32.mrf.mxu0
    %v1288 = vpop.f32.mrf.mxu0
    %1289 = vmatmul.bf16.gmra.mxu0 %v707
    %v1290 = vpop.f32.mrf.mxu0
    %v1291 = vadd.f32 %v974, %v1290
    %v1292 = vpop.f32.mrf.mxu0
    %v1293 = vadd.f32 %v976, %v1292
    %1294 = vmatmul.bf16.gmra.mxu0 %v710
    %v1295 = vpop.f32.mrf.mxu0
    %v1296 = vpop.f32.mrf.mxu0
    %1297 = vmatmul.bf16.gmra.mxu0 %v713
    %v1298 = vpop.f32.mrf.mxu0
    %v1299 = vadd.f32 %v982, %v1298
    %v1300 = vpop.f32.mrf.mxu0
    %v1301 = vadd.f32 %v984, %v1300
    %1302 = vmatmul.bf16.gmra.mxu0 %v716
    %v1303 = vpop.f32.mrf.mxu0
    %v1304 = vpop.f32.mrf.mxu0
    %1305 = vmatmul.bf16.gmra.mxu0 %v719
    %v1306 = vpop.f32.mrf.mxu0
    %v1307 = vadd.f32 %v990, %v1306
    %v1308 = vpop.f32.mrf.mxu0
    %v1309 = vadd.f32 %v992, %v1308
    %1310 = vmatmul.bf16.gmra.mxu0 %v722
    %v1311 = vpop.f32.mrf.mxu0
    %v1312 = vpop.f32.mrf.mxu0
    %1313 = vmatmul.bf16.gmra.mxu0 %v725
    %v1314 = vpop.f32.mrf.mxu0
    %v1315 = vadd.f32 %v998, %v1314
    %v1316 = vpop.f32.mrf.mxu0
    %v1317 = vadd.f32 %v1000, %v1316
    %1318 = vmatmul.bf16.gmra.mxu0 %v728
    %v1319 = vpop.f32.mrf.mxu0
    %v1320 = vpop.f32.mrf.mxu0
    %1321 = vmatmul.bf16.gmra.mxu0 %v731
    %v1322 = vpop.f32.mrf.mxu0
    %v1323 = vadd.f32 %v1006, %v1322
    %v1324 = vpop.f32.mrf.mxu0
    %v1325 = vadd.f32 %v1008, %v1324
    %1326 = vmatmul.bf16.gmra.mxu0 %v734
    %v1327 = vpop.f32.mrf.mxu0
    %v1328 = vpop.f32.mrf.mxu0
    %1329 = vmatmul.bf16.gmra.mxu0 %v737
    %v1330 = vpop.f32.mrf.mxu0
    %v1331 = vadd.f32 %v1014, %v1330
    %v1332 = vpop.f32.mrf.mxu0
    %v1333 = vadd.f32 %v1016, %v1332
    %1334 = vmatmul.bf16.gmra.mxu0 %v740
    %v1335 = vpop.f32.mrf.mxu0
    %v1336 = vpop.f32.mrf.mxu0
    %1337 = vmatmul.bf16.gmra.mxu0 %v743
    %v1338 = vpop.f32.mrf.mxu0
    %v1339 = vadd.f32 %v1022, %v1338
    %v1340 = vpop.f32.mrf.mxu0
    %v1341 = vadd.f32 %v1024, %v1340
    %1342 = vmatmul.bf16.gmra.mxu0 %v746
    %v1343 = vpop.f32.mrf.mxu0
    %v1344 = vpop.f32.mrf.mxu0
    %1345 = vmatmul.bf16.gmra.mxu0 %v749
    %v1346 = vpop.f32.mrf.mxu0
    %v1347 = vadd.f32 %v1030, %v1346
    %v1348 = vpop.f32.mrf.mxu0
    %v1349 = vadd.f32 %v1032, %v1348
    %1350 = vmatmul.bf16.gmra.mxu0 %v752
    %v1351 = vpop.f32.mrf.mxu0
    %v1352 = vpop.f32.mrf.mxu0
    %1353 = vdwg.mxu0
    %v1354 = vld [vmem:[%s2 + $0x80] sm:$0xf]
    %v1355 = vld [vmem:[%s2 + $0x84] sm:$0xf]
    %v1356 = vld [vmem:[%s2 + $0x88] sm:$0xf]
    %v1357 = vld [vmem:[%s2 + $0x8c] sm:$0xf]
    %v1358 = vld [vmem:[%s2 + $0x90] sm:$0xf]
    %v1359 = vld [vmem:[%s2 + $0x94] sm:$0xf]
    %v1360 = vld [vmem:[%s2 + $0x98] sm:$0xf]
    %v1361 = vld [vmem:[%s2 + $0x9c] sm:$0xf]
    %v1370 = vunpack.c.l.b16 %v1354
    %v1371 = vunpack.c.l.b16 %v1355
    %v1372 = vunpack.c.l.b16 %v1356
    %v1373 = vunpack.c.l.b16 %v1357
    %v1374 = vunpack.c.l.b16 %v1358
    %v1375 = vunpack.c.l.b16 %v1359
    %v1376 = vunpack.c.l.b16 %v1360
    %v1377 = vunpack.c.l.b16 %v1361
    %v1378 = vpack.c.b16 %v1371, %v1370
    %v1379 = vpack.c.b16 %v1373, %v1372
    %v1380 = vpack.c.b16 %v1375, %v1374
    %v1381 = vpack.c.b16 %v1377, %v1376
    %1386 = vmatpush.bf16.msra.mxu0 0
    %1387 = vmatpush.bf16.msra.mxu0 0
    %1388 = vmatpush.bf16.msra.mxu0 0
    %1389 = vmatpush.bf16.msra.mxu0 0
    %1390 = vmatpush.bf16.msra.mxu0 %v1381
    %1391 = vmatpush.bf16.msra.mxu0 %v1380
    %1392 = vmatpush.bf16.msra.mxu0 %v1379
    %1393 = vmatpush.bf16.msra.mxu0 %v1378
    %1394 = vmatmul.bf16.gmra.mxu0 %v557
    %v1395 = vpop.f32.mrf.mxu0
    %v1396 = vadd.f32 0.0, %v1395
    %v1397 = vpop.f32.mrf.mxu0
    %v1398 = vadd.f32 0.0, %v1397
    %1399 = vmatmul.bf16.gmra.mxu0 %v560
    %v1400 = vpop.f32.mrf.mxu0
    %v1401 = vadd.f32 0.0, %v1400
    %v1402 = vpop.f32.mrf.mxu0
    %1403 = vmatmul.bf16.gmra.mxu0 %v563
    %v1404 = vpop.f32.mrf.mxu0
    %v1405 = vadd.f32 0.0, %v1404
    %v1406 = vpop.f32.mrf.mxu0
    %v1407 = vadd.f32 0.0, %v1406
    %1408 = vmatmul.bf16.gmra.mxu0 %v566
    %v1409 = vpop.f32.mrf.mxu0
    %v1410 = vadd.f32 0.0, %v1409
    %v1411 = vpop.f32.mrf.mxu0
    %1412 = vmatmul.bf16.gmra.mxu0 %v569
    %v1413 = vpop.f32.mrf.mxu0
    %v1414 = vadd.f32 0.0, %v1413
    %v1415 = vpop.f32.mrf.mxu0
    %v1416 = vadd.f32 0.0, %v1415
    %1417 = vmatmul.bf16.gmra.mxu0 %v572
    %v1418 = vpop.f32.mrf.mxu0
    %v1419 = vadd.f32 0.0, %v1418
    %v1420 = vpop.f32.mrf.mxu0
    %1421 = vmatmul.bf16.gmra.mxu0 %v575
    %v1422 = vpop.f32.mrf.mxu0
    %v1423 = vadd.f32 0.0, %v1422
    %v1424 = vpop.f32.mrf.mxu0
    %v1425 = vadd.f32 0.0, %v1424
    %1426 = vmatmul.bf16.gmra.mxu0 %v578
    %v1427 = vpop.f32.mrf.mxu0
    %v1428 = vadd.f32 0.0, %v1427
    %v1429 = vpop.f32.mrf.mxu0
    %1430 = vmatmul.bf16.gmra.mxu0 %v581
    %v1431 = vpop.f32.mrf.mxu0
    %v1432 = vadd.f32 0.0, %v1431
    %v1433 = vpop.f32.mrf.mxu0
    %v1434 = vadd.f32 0.0, %v1433
    %1435 = vmatmul.bf16.gmra.mxu0 %v584
    %v1436 = vpop.f32.mrf.mxu0
    %v1437 = vadd.f32 0.0, %v1436
    %v1438 = vpop.f32.mrf.mxu0
    %1439 = vmatmul.bf16.gmra.mxu0 %v587
    %v1440 = vpop.f32.mrf.mxu0
    %v1441 = vadd.f32 0.0, %v1440
    %v1442 = vpop.f32.mrf.mxu0
    %v1443 = vadd.f32 0.0, %v1442
    %1444 = vmatmul.bf16.gmra.mxu0 %v590
    %v1445 = vpop.f32.mrf.mxu0
    %v1446 = vadd.f32 0.0, %v1445
    %v1447 = vpop.f32.mrf.mxu0
    %1448 = vmatmul.bf16.gmra.mxu0 %v593
    %v1449 = vpop.f32.mrf.mxu0
    %v1450 = vadd.f32 0.0, %v1449
    %v1451 = vpop.f32.mrf.mxu0
    %v1452 = vadd.f32 0.0, %v1451
    %1453 = vmatmul.bf16.gmra.mxu0 %v596
    %v1454 = vpop.f32.mrf.mxu0
    %v1455 = vadd.f32 0.0, %v1454
    %v1456 = vpop.f32.mrf.mxu0
    %1457 = vmatmul.bf16.gmra.mxu0 %v599
    %v1458 = vpop.f32.mrf.mxu0
    %v1459 = vadd.f32 0.0, %v1458
    %v1460 = vpop.f32.mrf.mxu0
    %v1461 = vadd.f32 0.0, %v1460
    %1462 = vmatmul.bf16.gmra.mxu0 %v602
    %v1463 = vpop.f32.mrf.mxu0
    %v1464 = vadd.f32 0.0, %v1463
    %v1465 = vpop.f32.mrf.mxu0
    %1466 = vmatmul.bf16.gmra.mxu0 %v605
    %v1467 = vpop.f32.mrf.mxu0
    %v1468 = vadd.f32 0.0, %v1467
    %v1469 = vpop.f32.mrf.mxu0
    %v1470 = vadd.f32 0.0, %v1469
    %1471 = vmatmul.bf16.gmra.mxu0 %v608
    %v1472 = vpop.f32.mrf.mxu0
    %v1473 = vadd.f32 0.0, %v1472
    %v1474 = vpop.f32.mrf.mxu0
    %1475 = vmatmul.bf16.gmra.mxu0 %v611
    %v1476 = vpop.f32.mrf.mxu0
    %v1477 = vadd.f32 0.0, %v1476
    %v1478 = vpop.f32.mrf.mxu0
    %v1479 = vadd.f32 0.0, %v1478
    %1480 = vmatmul.bf16.gmra.mxu0 %v614
    %v1481 = vpop.f32.mrf.mxu0
    %v1482 = vadd.f32 0.0, %v1481
    %v1483 = vpop.f32.mrf.mxu0
    %1484 = vmatmul.bf16.gmra.mxu0 %v617
    %v1485 = vpop.f32.mrf.mxu0
    %v1486 = vadd.f32 0.0, %v1485
    %v1487 = vpop.f32.mrf.mxu0
    %v1488 = vadd.f32 0.0, %v1487
    %1489 = vmatmul.bf16.gmra.mxu0 %v620
    %v1490 = vpop.f32.mrf.mxu0
    %v1491 = vadd.f32 0.0, %v1490
    %v1492 = vpop.f32.mrf.mxu0
    %1493 = vmatmul.bf16.gmra.mxu0 %v623
    %v1494 = vpop.f32.mrf.mxu0
    %v1495 = vadd.f32 0.0, %v1494
    %v1496 = vpop.f32.mrf.mxu0
    %v1497 = vadd.f32 0.0, %v1496
    %1498 = vmatmul.bf16.gmra.mxu0 %v626
    %v1499 = vpop.f32.mrf.mxu0
    %v1500 = vadd.f32 0.0, %v1499
    %v1501 = vpop.f32.mrf.mxu0
    %1502 = vmatmul.bf16.gmra.mxu0 %v629
    %v1503 = vpop.f32.mrf.mxu0
    %v1504 = vadd.f32 0.0, %v1503
    %v1505 = vpop.f32.mrf.mxu0
    %v1506 = vadd.f32 0.0, %v1505
    %1507 = vmatmul.bf16.gmra.mxu0 %v632
    %v1508 = vpop.f32.mrf.mxu0
    %v1509 = vadd.f32 0.0, %v1508
    %v1510 = vpop.f32.mrf.mxu0
    %1511 = vmatmul.bf16.gmra.mxu0 %v635
    %v1512 = vpop.f32.mrf.mxu0
    %v1513 = vadd.f32 0.0, %v1512
    %v1514 = vpop.f32.mrf.mxu0
    %v1515 = vadd.f32 0.0, %v1514
    %1516 = vmatmul.bf16.gmra.mxu0 %v638
    %v1517 = vpop.f32.mrf.mxu0
    %v1518 = vadd.f32 0.0, %v1517
    %v1519 = vpop.f32.mrf.mxu0
    %1520 = vmatmul.bf16.gmra.mxu0 %v641
    %v1521 = vpop.f32.mrf.mxu0
    %v1522 = vadd.f32 0.0, %v1521
    %v1523 = vpop.f32.mrf.mxu0
    %v1524 = vadd.f32 0.0, %v1523
    %1525 = vmatmul.bf16.gmra.mxu0 %v644
    %v1526 = vpop.f32.mrf.mxu0
    %v1527 = vadd.f32 0.0, %v1526
    %v1528 = vpop.f32.mrf.mxu0
    %1529 = vmatmul.bf16.gmra.mxu0 %v647
    %v1530 = vpop.f32.mrf.mxu0
    %v1531 = vadd.f32 0.0, %v1530
    %v1532 = vpop.f32.mrf.mxu0
    %v1533 = vadd.f32 0.0, %v1532
    %1534 = vmatmul.bf16.gmra.mxu0 %v650
    %v1535 = vpop.f32.mrf.mxu0
    %v1536 = vadd.f32 0.0, %v1535
    %v1537 = vpop.f32.mrf.mxu0
    %1538 = vmatmul.bf16.gmra.mxu0 %v653
    %v1539 = vpop.f32.mrf.mxu0
    %v1540 = vpop.f32.mrf.mxu0
    %1541 = vmatmul.bf16.gmra.mxu0 %v656
    %v1542 = vpop.f32.mrf.mxu0
    %v1543 = vpop.f32.mrf.mxu0
    %1544 = vmatmul.bf16.gmra.mxu0 %v659
    %v1545 = vpop.f32.mrf.mxu0
    %v1546 = vpop.f32.mrf.mxu0
    %1547 = vmatmul.bf16.gmra.mxu0 %v662
    %v1548 = vpop.f32.mrf.mxu0
    %v1549 = vpop.f32.mrf.mxu0
    %1550 = vmatmul.bf16.gmra.mxu0 %v665
    %v1551 = vpop.f32.mrf.mxu0
    %v1552 = vadd.f32 0.0, %v1551
    %v1553 = vpop.f32.mrf.mxu0
    %v1554 = vadd.f32 0.0, %v1553
    %1555 = vmatmul.bf16.gmra.mxu0 %v668
    %v1556 = vpop.f32.mrf.mxu0
    %v1557 = vadd.f32 0.0, %v1556
    %v1558 = vpop.f32.mrf.mxu0
    %1559 = vmatmul.bf16.gmra.mxu0 %v671
    %v1560 = vpop.f32.mrf.mxu0
    %v1561 = vadd.f32 0.0, %v1560
    %v1562 = vpop.f32.mrf.mxu0
    %v1563 = vadd.f32 0.0, %v1562
    %1564 = vmatmul.bf16.gmra.mxu0 %v674
    %v1565 = vpop.f32.mrf.mxu0
    %v1566 = vadd.f32 0.0, %v1565
    %v1567 = vpop.f32.mrf.mxu0
    %1568 = vmatmul.bf16.gmra.mxu0 %v677
    %v1569 = vpop.f32.mrf.mxu0
    %v1570 = vadd.f32 0.0, %v1569
    %v1571 = vpop.f32.mrf.mxu0
    %v1572 = vadd.f32 0.0, %v1571
    %1573 = vmatmul.bf16.gmra.mxu0 %v680
    %v1574 = vpop.f32.mrf.mxu0
    %v1575 = vadd.f32 0.0, %v1574
    %v1576 = vpop.f32.mrf.mxu0
    %1577 = vmatmul.bf16.gmra.mxu0 %v683
    %v1578 = vpop.f32.mrf.mxu0
    %v1579 = vadd.f32 0.0, %v1578
    %v1580 = vpop.f32.mrf.mxu0
    %v1581 = vadd.f32 0.0, %v1580
    %1582 = vmatmul.bf16.gmra.mxu0 %v686
    %v1583 = vpop.f32.mrf.mxu0
    %v1584 = vadd.f32 0.0, %v1583
    %v1585 = vpop.f32.mrf.mxu0
    %1586 = vmatmul.bf16.gmra.mxu0 %v689
    %v1587 = vpop.f32.mrf.mxu0
    %v1588 = vadd.f32 0.0, %v1587
    %v1589 = vpop.f32.mrf.mxu0
    %v1590 = vadd.f32 0.0, %v1589
    %1591 = vmatmul.bf16.gmra.mxu0 %v692
    %v1592 = vpop.f32.mrf.mxu0
    %v1593 = vadd.f32 0.0, %v1592
    %v1594 = vpop.f32.mrf.mxu0
    %1595 = vmatmul.bf16.gmra.mxu0 %v695
    %v1596 = vpop.f32.mrf.mxu0
    %v1597 = vadd.f32 0.0, %v1596
    %v1598 = vpop.f32.mrf.mxu0
    %v1599 = vadd.f32 0.0, %v1598
    %1600 = vmatmul.bf16.gmra.mxu0 %v698
    %v1601 = vpop.f32.mrf.mxu0
    %v1602 = vadd.f32 0.0, %v1601
    %v1603 = vpop.f32.mrf.mxu0
    %1604 = vmatmul.bf16.gmra.mxu0 %v701
    %v1605 = vpop.f32.mrf.mxu0
    %v1606 = vadd.f32 0.0, %v1605
    %v1607 = vpop.f32.mrf.mxu0
    %v1608 = vadd.f32 0.0, %v1607
    %1609 = vmatmul.bf16.gmra.mxu0 %v704
    %v1610 = vpop.f32.mrf.mxu0
    %v1611 = vadd.f32 0.0, %v1610
    %v1612 = vpop.f32.mrf.mxu0
    %1613 = vmatmul.bf16.gmra.mxu0 %v707
    %v1614 = vpop.f32.mrf.mxu0
    %v1615 = vadd.f32 0.0, %v1614
    %v1616 = vpop.f32.mrf.mxu0
    %v1617 = vadd.f32 0.0, %v1616
    %1618 = vmatmul.bf16.gmra.mxu0 %v710
    %v1619 = vpop.f32.mrf.mxu0
    %v1620 = vadd.f32 0.0, %v1619
    %v1621 = vpop.f32.mrf.mxu0
    %1622 = vmatmul.bf16.gmra.mxu0 %v713
    %v1623 = vpop.f32.mrf.mxu0
    %v1624 = vadd.f32 0.0, %v1623
    %v1625 = vpop.f32.mrf.mxu0
    %v1626 = vadd.f32 0.0, %v1625
    %1627 = vmatmul.bf16.gmra.mxu0 %v716
    %v1628 = vpop.f32.mrf.mxu0
    %v1629 = vadd.f32 0.0, %v1628
    %v1630 = vpop.f32.mrf.mxu0
    %1631 = vmatmul.bf16.gmra.mxu0 %v719
    %v1632 = vpop.f32.mrf.mxu0
    %v1633 = vadd.f32 0.0, %v1632
    %v1634 = vpop.f32.mrf.mxu0
    %v1635 = vadd.f32 0.0, %v1634
    %1636 = vmatmul.bf16.gmra.mxu0 %v722
    %v1637 = vpop.f32.mrf.mxu0
    %v1638 = vadd.f32 0.0, %v1637
    %v1639 = vpop.f32.mrf.mxu0
    %1640 = vmatmul.bf16.gmra.mxu0 %v725
    %v1641 = vpop.f32.mrf.mxu0
    %v1642 = vadd.f32 0.0, %v1641
    %v1643 = vpop.f32.mrf.mxu0
    %v1644 = vadd.f32 0.0, %v1643
    %1645 = vmatmul.bf16.gmra.mxu0 %v728
    %v1646 = vpop.f32.mrf.mxu0
    %v1647 = vadd.f32 0.0, %v1646
    %v1648 = vpop.f32.mrf.mxu0
    %1649 = vmatmul.bf16.gmra.mxu0 %v731
    %v1650 = vpop.f32.mrf.mxu0
    %v1651 = vadd.f32 0.0, %v1650
    %v1652 = vpop.f32.mrf.mxu0
    %v1653 = vadd.f32 0.0, %v1652
    %1654 = vmatmul.bf16.gmra.mxu0 %v734
    %v1655 = vpop.f32.mrf.mxu0
    %v1656 = vadd.f32 0.0, %v1655
    %v1657 = vpop.f32.mrf.mxu0
    %1658 = vmatmul.bf16.gmra.mxu0 %v737
    %v1659 = vpop.f32.mrf.mxu0
    %v1660 = vadd.f32 0.0, %v1659
    %v1661 = vpop.f32.mrf.mxu0
    %v1662 = vadd.f32 0.0, %v1661
    %1663 = vmatmul.bf16.gmra.mxu0 %v740
    %v1664 = vpop.f32.mrf.mxu0
    %v1665 = vadd.f32 0.0, %v1664
    %v1666 = vpop.f32.mrf.mxu0
    %1667 = vmatmul.bf16.gmra.mxu0 %v743
    %v1668 = vpop.f32.mrf.mxu0
    %v1669 = vadd.f32 0.0, %v1668
    %v1670 = vpop.f32.mrf.mxu0
    %v1671 = vadd.f32 0.0, %v1670
    %1672 = vmatmul.bf16.gmra.mxu0 %v746
    %v1673 = vpop.f32.mrf.mxu0
    %v1674 = vadd.f32 0.0, %v1673
    %v1675 = vpop.f32.mrf.mxu0
    %1676 = vmatmul.bf16.gmra.mxu0 %v749
    %v1677 = vpop.f32.mrf.mxu0
    %v1678 = vadd.f32 0.0, %v1677
    %v1679 = vpop.f32.mrf.mxu0
    %v1680 = vadd.f32 0.0, %v1679
    %1681 = vmatmul.bf16.gmra.mxu0 %v752
    %v1682 = vpop.f32.mrf.mxu0
    %v1683 = vadd.f32 0.0, %v1682
    %v1684 = vpop.f32.mrf.mxu0
    %1685 = vmatmul.bf16.gmra.mxu0 %v755
    %v1686 = vpop.f32.mrf.mxu0
    %v1687 = vadd.f32 0.0, %v1686
    %v1688 = vpop.f32.mrf.mxu0
    %v1689 = vadd.f32 0.0, %v1688
    %1690 = vmatmul.bf16.gmra.mxu0 %v758
    %v1691 = vpop.f32.mrf.mxu0
    %v1692 = vadd.f32 0.0, %v1691
    %v1693 = vpop.f32.mrf.mxu0
    %1694 = vdwg.mxu0
    %v1703 = vunpack.c.l.b16 %v163
    %v1704 = vunpack.c.l.b16 %v164
    %v1705 = vunpack.c.l.b16 %v165
    %v1706 = vunpack.c.l.b16 %v166
    %v1707 = vunpack.c.l.b16 %v167
    %v1708 = vunpack.c.l.b16 %v168
    %v1709 = vunpack.c.l.b16 %v169
    %v1710 = vunpack.c.l.b16 %v170
    %v1711 = vpack.c.b16 %v1704, %v1703
    %v1712 = vpack.c.b16 %v1706, %v1705
    %v1713 = vpack.c.b16 %v1708, %v1707
    %v1714 = vpack.c.b16 %v1710, %v1709
    %1719 = vmatpush.bf16.msra.mxu0 0
    %1720 = vmatpush.bf16.msra.mxu0 0
    %1721 = vmatpush.bf16.msra.mxu0 0
    %1722 = vmatpush.bf16.msra.mxu0 0
    %1723 = vmatpush.bf16.msra.mxu0 %v1714
    %1724 = vmatpush.bf16.msra.mxu0 %v1713
    %1725 = vmatpush.bf16.msra.mxu0 %v1712
    %1726 = vmatpush.bf16.msra.mxu0 %v1711
    %1727 = vmatmul.bf16.gmra.mxu0 %v1072
    %v1728 = vpop.f32.mrf.mxu0
    %v1729 = vadd.f32 %v1396, %v1728
    %v1730 = vpop.f32.mrf.mxu0
    %v1731 = vadd.f32 %v1398, %v1730
    %1732 = vmatmul.bf16.gmra.mxu0 %v1075
    %v1733 = vpop.f32.mrf.mxu0
    %v1734 = vadd.f32 %v1401, %v1733
    %v1735 = vpop.f32.mrf.mxu0
    %1736 = vmatmul.bf16.gmra.mxu0 %v557
    %v1737 = vpop.f32.mrf.mxu0
    %v1738 = vadd.f32 %v1405, %v1737
    %v1739 = vpop.f32.mrf.mxu0
    %v1740 = vadd.f32 %v1407, %v1739
    %1741 = vmatmul.bf16.gmra.mxu0 %v560
    %v1742 = vpop.f32.mrf.mxu0
    %v1743 = vadd.f32 %v1410, %v1742
    %v1744 = vpop.f32.mrf.mxu0
    %1745 = vmatmul.bf16.gmra.mxu0 %v563
    %v1746 = vpop.f32.mrf.mxu0
    %v1747 = vadd.f32 %v1414, %v1746
    %v1748 = vpop.f32.mrf.mxu0
    %v1749 = vadd.f32 %v1416, %v1748
    %1750 = vmatmul.bf16.gmra.mxu0 %v566
    %v1751 = vpop.f32.mrf.mxu0
    %v1752 = vadd.f32 %v1419, %v1751
    %v1753 = vpop.f32.mrf.mxu0
    %1754 = vmatmul.bf16.gmra.mxu0 %v569
    %v1755 = vpop.f32.mrf.mxu0
    %v1756 = vadd.f32 %v1423, %v1755
    %v1757 = vpop.f32.mrf.mxu0
    %v1758 = vadd.f32 %v1425, %v1757
    %1759 = vmatmul.bf16.gmra.mxu0 %v572
    %v1760 = vpop.f32.mrf.mxu0
    %v1761 = vadd.f32 %v1428, %v1760
    %v1762 = vpop.f32.mrf.mxu0
    %1763 = vmatmul.bf16.gmra.mxu0 %v575
    %v1764 = vpop.f32.mrf.mxu0
    %v1765 = vadd.f32 %v1432, %v1764
    %v1766 = vpop.f32.mrf.mxu0
    %v1767 = vadd.f32 %v1434, %v1766
    %1768 = vmatmul.bf16.gmra.mxu0 %v578
    %v1769 = vpop.f32.mrf.mxu0
    %v1770 = vadd.f32 %v1437, %v1769
    %v1771 = vpop.f32.mrf.mxu0
    %1772 = vmatmul.bf16.gmra.mxu0 %v581
    %v1773 = vpop.f32.mrf.mxu0
    %v1774 = vadd.f32 %v1441, %v1773
    %v1775 = vpop.f32.mrf.mxu0
    %v1776 = vadd.f32 %v1443, %v1775
    %1777 = vmatmul.bf16.gmra.mxu0 %v584
    %v1778 = vpop.f32.mrf.mxu0
    %v1779 = vadd.f32 %v1446, %v1778
    %v1780 = vpop.f32.mrf.mxu0
    %1781 = vmatmul.bf16.gmra.mxu0 %v587
    %v1782 = vpop.f32.mrf.mxu0
    %v1783 = vadd.f32 %v1450, %v1782
    %v1784 = vpop.f32.mrf.mxu0
    %v1785 = vadd.f32 %v1452, %v1784
    %1786 = vmatmul.bf16.gmra.mxu0 %v590
    %v1787 = vpop.f32.mrf.mxu0
    %v1788 = vadd.f32 %v1455, %v1787
    %v1789 = vpop.f32.mrf.mxu0
    %1790 = vmatmul.bf16.gmra.mxu0 %v593
    %v1791 = vpop.f32.mrf.mxu0
    %v1792 = vadd.f32 %v1459, %v1791
    %v1793 = vpop.f32.mrf.mxu0
    %v1794 = vadd.f32 %v1461, %v1793
    %1795 = vmatmul.bf16.gmra.mxu0 %v596
    %v1796 = vpop.f32.mrf.mxu0
    %v1797 = vadd.f32 %v1464, %v1796
    %v1798 = vpop.f32.mrf.mxu0
    %1799 = vmatmul.bf16.gmra.mxu0 %v599
    %v1800 = vpop.f32.mrf.mxu0
    %v1801 = vadd.f32 %v1468, %v1800
    %v1802 = vpop.f32.mrf.mxu0
    %v1803 = vadd.f32 %v1470, %v1802
    %1804 = vmatmul.bf16.gmra.mxu0 %v602
    %v1805 = vpop.f32.mrf.mxu0
    %v1806 = vadd.f32 %v1473, %v1805
    %v1807 = vpop.f32.mrf.mxu0
    %1808 = vmatmul.bf16.gmra.mxu0 %v605
    %v1809 = vpop.f32.mrf.mxu0
    %v1810 = vadd.f32 %v1477, %v1809
    %v1811 = vpop.f32.mrf.mxu0
    %v1812 = vadd.f32 %v1479, %v1811
    %1813 = vmatmul.bf16.gmra.mxu0 %v608
    %v1814 = vpop.f32.mrf.mxu0
    %v1815 = vadd.f32 %v1482, %v1814
    %v1816 = vpop.f32.mrf.mxu0
    %1817 = vmatmul.bf16.gmra.mxu0 %v611
    %v1818 = vpop.f32.mrf.mxu0
    %v1819 = vadd.f32 %v1486, %v1818
    %v1820 = vpop.f32.mrf.mxu0
    %v1821 = vadd.f32 %v1488, %v1820
    %1822 = vmatmul.bf16.gmra.mxu0 %v614
    %v1823 = vpop.f32.mrf.mxu0
    %v1824 = vadd.f32 %v1491, %v1823
    %v1825 = vpop.f32.mrf.mxu0
    %1826 = vmatmul.bf16.gmra.mxu0 %v617
    %v1827 = vpop.f32.mrf.mxu0
    %v1828 = vadd.f32 %v1495, %v1827
    %v1829 = vpop.f32.mrf.mxu0
    %v1830 = vadd.f32 %v1497, %v1829
    %1831 = vmatmul.bf16.gmra.mxu0 %v620
    %v1832 = vpop.f32.mrf.mxu0
    %v1833 = vadd.f32 %v1500, %v1832
    %v1834 = vpop.f32.mrf.mxu0
    %1835 = vmatmul.bf16.gmra.mxu0 %v623
    %v1836 = vpop.f32.mrf.mxu0
    %v1837 = vadd.f32 %v1504, %v1836
    %v1838 = vpop.f32.mrf.mxu0
    %v1839 = vadd.f32 %v1506, %v1838
    %1840 = vmatmul.bf16.gmra.mxu0 %v626
    %v1841 = vpop.f32.mrf.mxu0
    %v1842 = vadd.f32 %v1509, %v1841
    %v1843 = vpop.f32.mrf.mxu0
    %1844 = vmatmul.bf16.gmra.mxu0 %v629
    %v1845 = vpop.f32.mrf.mxu0
    %v1846 = vadd.f32 %v1513, %v1845
    %v1847 = vpop.f32.mrf.mxu0
    %v1848 = vadd.f32 %v1515, %v1847
    %1849 = vmatmul.bf16.gmra.mxu0 %v632
    %v1850 = vpop.f32.mrf.mxu0
    %v1851 = vadd.f32 %v1518, %v1850
    %v1852 = vpop.f32.mrf.mxu0
    %1853 = vmatmul.bf16.gmra.mxu0 %v635
    %v1854 = vpop.f32.mrf.mxu0
    %v1855 = vadd.f32 %v1522, %v1854
    %v1856 = vpop.f32.mrf.mxu0
    %v1857 = vadd.f32 %v1524, %v1856
    %1858 = vmatmul.bf16.gmra.mxu0 %v638
    %v1859 = vpop.f32.mrf.mxu0
    %v1860 = vadd.f32 %v1527, %v1859
    %v1861 = vpop.f32.mrf.mxu0
    %1862 = vmatmul.bf16.gmra.mxu0 %v641
    %v1863 = vpop.f32.mrf.mxu0
    %v1864 = vadd.f32 %v1531, %v1863
    %v1865 = vpop.f32.mrf.mxu0
    %v1866 = vadd.f32 %v1533, %v1865
    %1867 = vmatmul.bf16.gmra.mxu0 %v644
    %v1868 = vpop.f32.mrf.mxu0
    %v1869 = vadd.f32 %v1536, %v1868
    %v1870 = vpop.f32.mrf.mxu0
    %1871 = vmatmul.bf16.gmra.mxu0 %v647
    %v1872 = vpop.f32.mrf.mxu0
    %v1873 = vpop.f32.mrf.mxu0
    %1874 = vmatmul.bf16.gmra.mxu0 %v650
    %v1875 = vpop.f32.mrf.mxu0
    %v1876 = vpop.f32.mrf.mxu0
    %1877 = vmatmul.bf16.gmra.mxu0 %v653
    %v1878 = vpop.f32.mrf.mxu0
    %v1879 = vpop.f32.mrf.mxu0
    %1880 = vmatmul.bf16.gmra.mxu0 %v656
    %v1881 = vpop.f32.mrf.mxu0
    %v1882 = vpop.f32.mrf.mxu0
    %1883 = vmatmul.bf16.gmra.mxu0 %v659
    %v1884 = vpop.f32.mrf.mxu0
    %v1885 = vadd.f32 %v1552, %v1884
    %v1886 = vpop.f32.mrf.mxu0
    %v1887 = vadd.f32 %v1554, %v1886
    %1888 = vmatmul.bf16.gmra.mxu0 %v662
    %v1889 = vpop.f32.mrf.mxu0
    %v1890 = vadd.f32 %v1557, %v1889
    %v1891 = vpop.f32.mrf.mxu0
    %1892 = vmatmul.bf16.gmra.mxu0 %v665
    %v1893 = vpop.f32.mrf.mxu0
    %v1894 = vadd.f32 %v1561, %v1893
    %v1895 = vpop.f32.mrf.mxu0
    %v1896 = vadd.f32 %v1563, %v1895
    %1897 = vmatmul.bf16.gmra.mxu0 %v668
    %v1898 = vpop.f32.mrf.mxu0
    %v1899 = vadd.f32 %v1566, %v1898
    %v1900 = vpop.f32.mrf.mxu0
    %1901 = vmatmul.bf16.gmra.mxu0 %v671
    %v1902 = vpop.f32.mrf.mxu0
    %v1903 = vadd.f32 %v1570, %v1902
    %v1904 = vpop.f32.mrf.mxu0
    %v1905 = vadd.f32 %v1572, %v1904
    %1906 = vmatmul.bf16.gmra.mxu0 %v674
    %v1907 = vpop.f32.mrf.mxu0
    %v1908 = vadd.f32 %v1575, %v1907
    %v1909 = vpop.f32.mrf.mxu0
    %1910 = vmatmul.bf16.gmra.mxu0 %v677
    %v1911 = vpop.f32.mrf.mxu0
    %v1912 = vadd.f32 %v1579, %v1911
    %v1913 = vpop.f32.mrf.mxu0
    %v1914 = vadd.f32 %v1581, %v1913
    %1915 = vmatmul.bf16.gmra.mxu0 %v680
    %v1916 = vpop.f32.mrf.mxu0
    %v1917 = vadd.f32 %v1584, %v1916
    %v1918 = vpop.f32.mrf.mxu0
    %1919 = vmatmul.bf16.gmra.mxu0 %v683
    %v1920 = vpop.f32.mrf.mxu0
    %v1921 = vadd.f32 %v1588, %v1920
    %v1922 = vpop.f32.mrf.mxu0
    %v1923 = vadd.f32 %v1590, %v1922
    %1924 = vmatmul.bf16.gmra.mxu0 %v686
    %v1925 = vpop.f32.mrf.mxu0
    %v1926 = vadd.f32 %v1593, %v1925
    %v1927 = vpop.f32.mrf.mxu0
    %1928 = vmatmul.bf16.gmra.mxu0 %v689
    %v1929 = vpop.f32.mrf.mxu0
    %v1930 = vadd.f32 %v1597, %v1929
    %v1931 = vpop.f32.mrf.mxu0
    %v1932 = vadd.f32 %v1599, %v1931
    %1933 = vmatmul.bf16.gmra.mxu0 %v692
    %v1934 = vpop.f32.mrf.mxu0
    %v1935 = vadd.f32 %v1602, %v1934
    %v1936 = vpop.f32.mrf.mxu0
    %1937 = vmatmul.bf16.gmra.mxu0 %v695
    %v1938 = vpop.f32.mrf.mxu0
    %v1939 = vadd.f32 %v1606, %v1938
    %v1940 = vpop.f32.mrf.mxu0
    %v1941 = vadd.f32 %v1608, %v1940
    %1942 = vmatmul.bf16.gmra.mxu0 %v698
    %v1943 = vpop.f32.mrf.mxu0
    %v1944 = vadd.f32 %v1611, %v1943
    %v1945 = vpop.f32.mrf.mxu0
    %1946 = vmatmul.bf16.gmra.mxu0 %v701
    %v1947 = vpop.f32.mrf.mxu0
    %v1948 = vadd.f32 %v1615, %v1947
    %v1949 = vpop.f32.mrf.mxu0
    %v1950 = vadd.f32 %v1617, %v1949
    %1951 = vmatmul.bf16.gmra.mxu0 %v704
    %v1952 = vpop.f32.mrf.mxu0
    %v1953 = vadd.f32 %v1620, %v1952
    %v1954 = vpop.f32.mrf.mxu0
    %1955 = vmatmul.bf16.gmra.mxu0 %v707
    %v1956 = vpop.f32.mrf.mxu0
    %v1957 = vadd.f32 %v1624, %v1956
    %v1958 = vpop.f32.mrf.mxu0
    %v1959 = vadd.f32 %v1626, %v1958
    %1960 = vmatmul.bf16.gmra.mxu0 %v710
    %v1961 = vpop.f32.mrf.mxu0
    %v1962 = vadd.f32 %v1629, %v1961
    %v1963 = vpop.f32.mrf.mxu0
    %1964 = vmatmul.bf16.gmra.mxu0 %v713
    %v1965 = vpop.f32.mrf.mxu0
    %v1966 = vadd.f32 %v1633, %v1965
    %v1967 = vpop.f32.mrf.mxu0
    %v1968 = vadd.f32 %v1635, %v1967
    %1969 = vmatmul.bf16.gmra.mxu0 %v716
    %v1970 = vpop.f32.mrf.mxu0
    %v1971 = vadd.f32 %v1638, %v1970
    %v1972 = vpop.f32.mrf.mxu0
    %1973 = vmatmul.bf16.gmra.mxu0 %v719
    %v1974 = vpop.f32.mrf.mxu0
    %v1975 = vadd.f32 %v1642, %v1974
    %v1976 = vpop.f32.mrf.mxu0
    %v1977 = vadd.f32 %v1644, %v1976
    %1978 = vmatmul.bf16.gmra.mxu0 %v722
    %v1979 = vpop.f32.mrf.mxu0
    %v1980 = vadd.f32 %v1647, %v1979
    %v1981 = vpop.f32.mrf.mxu0
    %1982 = vmatmul.bf16.gmra.mxu0 %v725
    %v1983 = vpop.f32.mrf.mxu0
    %v1984 = vadd.f32 %v1651, %v1983
    %v1985 = vpop.f32.mrf.mxu0
    %v1986 = vadd.f32 %v1653, %v1985
    %1987 = vmatmul.bf16.gmra.mxu0 %v728
    %v1988 = vpop.f32.mrf.mxu0
    %v1989 = vadd.f32 %v1656, %v1988
    %v1990 = vpop.f32.mrf.mxu0
    %1991 = vmatmul.bf16.gmra.mxu0 %v731
    %v1992 = vpop.f32.mrf.mxu0
    %v1993 = vadd.f32 %v1660, %v1992
    %v1994 = vpop.f32.mrf.mxu0
    %v1995 = vadd.f32 %v1662, %v1994
    %1996 = vmatmul.bf16.gmra.mxu0 %v734
    %v1997 = vpop.f32.mrf.mxu0
    %v1998 = vadd.f32 %v1665, %v1997
    %v1999 = vpop.f32.mrf.mxu0
    %2000 = vmatmul.bf16.gmra.mxu0 %v737
    %v2001 = vpop.f32.mrf.mxu0
    %v2002 = vadd.f32 %v1669, %v2001
    %v2003 = vpop.f32.mrf.mxu0
    %v2004 = vadd.f32 %v1671, %v2003
    %2005 = vmatmul.bf16.gmra.mxu0 %v740
    %v2006 = vpop.f32.mrf.mxu0
    %v2007 = vadd.f32 %v1674, %v2006
    %v2008 = vpop.f32.mrf.mxu0
    %2009 = vmatmul.bf16.gmra.mxu0 %v743
    %v2010 = vpop.f32.mrf.mxu0
    %v2011 = vadd.f32 %v1678, %v2010
    %v2012 = vpop.f32.mrf.mxu0
    %v2013 = vadd.f32 %v1680, %v2012
    %2014 = vmatmul.bf16.gmra.mxu0 %v746
    %v2015 = vpop.f32.mrf.mxu0
    %v2016 = vadd.f32 %v1683, %v2015
    %v2017 = vpop.f32.mrf.mxu0
    %2018 = vmatmul.bf16.gmra.mxu0 %v749
    %v2019 = vpop.f32.mrf.mxu0
    %v2020 = vadd.f32 %v1687, %v2019
    %v2021 = vpop.f32.mrf.mxu0
    %v2022 = vadd.f32 %v1689, %v2021
    %2023 = vmatmul.bf16.gmra.mxu0 %v752
    %v2024 = vpop.f32.mrf.mxu0
    %v2025 = vadd.f32 %v1692, %v2024
    %v2026 = vpop.f32.mrf.mxu0
    %2027 = vdwg.mxu0
    %v2028 = vld [vmem:[%s2 + $0xa0] sm:$0xf]
    %v2029 = vld [vmem:[%s2 + $0xa4] sm:$0xf]
    %v2030 = vld [vmem:[%s2 + $0xa8] sm:$0xf]
    %v2031 = vld [vmem:[%s2 + $0xac] sm:$0xf]
    %v2032 = vld [vmem:[%s2 + $0xb0] sm:$0xf]
    %v2033 = vld [vmem:[%s2 + $0xb4] sm:$0xf]
    %v2034 = vld [vmem:[%s2 + $0xb8] sm:$0xf]
    %v2035 = vld [vmem:[%s2 + $0xbc] sm:$0xf]
    %v2044 = vunpack.c.l.b16 %v2028
    %v2045 = vunpack.c.l.b16 %v2029
    %v2046 = vunpack.c.l.b16 %v2030
    %v2047 = vunpack.c.l.b16 %v2031
    %v2048 = vunpack.c.l.b16 %v2032
    %v2049 = vunpack.c.l.b16 %v2033
    %v2050 = vunpack.c.l.b16 %v2034
    %v2051 = vunpack.c.l.b16 %v2035
    %v2052 = vpack.c.b16 %v2045, %v2044
    %v2053 = vpack.c.b16 %v2047, %v2046
    %v2054 = vpack.c.b16 %v2049, %v2048
    %v2055 = vpack.c.b16 %v2051, %v2050
    %2060 = vmatpush.bf16.msra.mxu0 0
    %2061 = vmatpush.bf16.msra.mxu0 0
    %2062 = vmatpush.bf16.msra.mxu0 0
    %2063 = vmatpush.bf16.msra.mxu0 0
    %2064 = vmatpush.bf16.msra.mxu0 %v2055
    %2065 = vmatpush.bf16.msra.mxu0 %v2054
    %2066 = vmatpush.bf16.msra.mxu0 %v2053
    %2067 = vmatpush.bf16.msra.mxu0 %v2052
    %2068 = vmatmul.bf16.gmra.mxu0 %v557
    %v2069 = vpop.f32.mrf.mxu0
    %v2070 = vadd.f32 0.0, %v2069
    %v2071 = vpop.f32.mrf.mxu0
    %v2072 = vadd.f32 0.0, %v2071
    %2073 = vmatmul.bf16.gmra.mxu0 %v560
    %v2074 = vpop.f32.mrf.mxu0
    %v2075 = vadd.f32 0.0, %v2074
    %v2076 = vpop.f32.mrf.mxu0
    %2077 = vmatmul.bf16.gmra.mxu0 %v563
    %v2078 = vpop.f32.mrf.mxu0
    %v2079 = vadd.f32 0.0, %v2078
    %v2080 = vpop.f32.mrf.mxu0
    %v2081 = vadd.f32 0.0, %v2080
    %2082 = vmatmul.bf16.gmra.mxu0 %v566
    %v2083 = vpop.f32.mrf.mxu0
    %v2084 = vadd.f32 0.0, %v2083
    %v2085 = vpop.f32.mrf.mxu0
    %2086 = vmatmul.bf16.gmra.mxu0 %v569
    %v2087 = vpop.f32.mrf.mxu0
    %v2088 = vadd.f32 0.0, %v2087
    %v2089 = vpop.f32.mrf.mxu0
    %v2090 = vadd.f32 0.0, %v2089
    %2091 = vmatmul.bf16.gmra.mxu0 %v572
    %v2092 = vpop.f32.mrf.mxu0
    %v2093 = vadd.f32 0.0, %v2092
    %v2094 = vpop.f32.mrf.mxu0
    %2095 = vmatmul.bf16.gmra.mxu0 %v575
    %v2096 = vpop.f32.mrf.mxu0
    %v2097 = vadd.f32 0.0, %v2096
    %v2098 = vpop.f32.mrf.mxu0
    %v2099 = vadd.f32 0.0, %v2098
    %2100 = vmatmul.bf16.gmra.mxu0 %v578
    %v2101 = vpop.f32.mrf.mxu0
    %v2102 = vadd.f32 0.0, %v2101
    %v2103 = vpop.f32.mrf.mxu0
    %2104 = vmatmul.bf16.gmra.mxu0 %v581
    %v2105 = vpop.f32.mrf.mxu0
    %v2106 = vadd.f32 0.0, %v2105
    %v2107 = vpop.f32.mrf.mxu0
    %v2108 = vadd.f32 0.0, %v2107
    %2109 = vmatmul.bf16.gmra.mxu0 %v584
    %v2110 = vpop.f32.mrf.mxu0
    %v2111 = vadd.f32 0.0, %v2110
    %v2112 = vpop.f32.mrf.mxu0
    %2113 = vmatmul.bf16.gmra.mxu0 %v587
    %v2114 = vpop.f32.mrf.mxu0
    %v2115 = vadd.f32 0.0, %v2114
    %v2116 = vpop.f32.mrf.mxu0
    %v2117 = vadd.f32 0.0, %v2116
    %2118 = vmatmul.bf16.gmra.mxu0 %v590
    %v2119 = vpop.f32.mrf.mxu0
    %v2120 = vadd.f32 0.0, %v2119
    %v2121 = vpop.f32.mrf.mxu0
    %2122 = vmatmul.bf16.gmra.mxu0 %v593
    %v2123 = vpop.f32.mrf.mxu0
    %v2124 = vadd.f32 0.0, %v2123
    %v2125 = vpop.f32.mrf.mxu0
    %v2126 = vadd.f32 0.0, %v2125
    %2127 = vmatmul.bf16.gmra.mxu0 %v596
    %v2128 = vpop.f32.mrf.mxu0
    %v2129 = vadd.f32 0.0, %v2128
    %v2130 = vpop.f32.mrf.mxu0
    %2131 = vmatmul.bf16.gmra.mxu0 %v599
    %v2132 = vpop.f32.mrf.mxu0
    %v2133 = vadd.f32 0.0, %v2132
    %v2134 = vpop.f32.mrf.mxu0
    %v2135 = vadd.f32 0.0, %v2134
    %2136 = vmatmul.bf16.gmra.mxu0 %v602
    %v2137 = vpop.f32.mrf.mxu0
    %v2138 = vadd.f32 0.0, %v2137
    %v2139 = vpop.f32.mrf.mxu0
    %2140 = vmatmul.bf16.gmra.mxu0 %v605
    %v2141 = vpop.f32.mrf.mxu0
    %v2142 = vadd.f32 0.0, %v2141
    %v2143 = vpop.f32.mrf.mxu0
    %v2144 = vadd.f32 0.0, %v2143
    %2145 = vmatmul.bf16.gmra.mxu0 %v608
    %v2146 = vpop.f32.mrf.mxu0
    %v2147 = vadd.f32 0.0, %v2146
    %v2148 = vpop.f32.mrf.mxu0
    %2149 = vmatmul.bf16.gmra.mxu0 %v611
    %v2150 = vpop.f32.mrf.mxu0
    %v2151 = vadd.f32 0.0, %v2150
    %v2152 = vpop.f32.mrf.mxu0
    %v2153 = vadd.f32 0.0, %v2152
    %2154 = vmatmul.bf16.gmra.mxu0 %v614
    %v2155 = vpop.f32.mrf.mxu0
    %v2156 = vadd.f32 0.0, %v2155
    %v2157 = vpop.f32.mrf.mxu0
    %2158 = vmatmul.bf16.gmra.mxu0 %v617
    %v2159 = vpop.f32.mrf.mxu0
    %v2160 = vadd.f32 0.0, %v2159
    %v2161 = vpop.f32.mrf.mxu0
    %v2162 = vadd.f32 0.0, %v2161
    %2163 = vmatmul.bf16.gmra.mxu0 %v620
    %v2164 = vpop.f32.mrf.mxu0
    %v2165 = vadd.f32 0.0, %v2164
    %v2166 = vpop.f32.mrf.mxu0
    %2167 = vmatmul.bf16.gmra.mxu0 %v623
    %v2168 = vpop.f32.mrf.mxu0
    %v2169 = vadd.f32 0.0, %v2168
    %v2170 = vpop.f32.mrf.mxu0
    %v2171 = vadd.f32 0.0, %v2170
    %2172 = vmatmul.bf16.gmra.mxu0 %v626
    %v2173 = vpop.f32.mrf.mxu0
    %v2174 = vadd.f32 0.0, %v2173
    %v2175 = vpop.f32.mrf.mxu0
    %2176 = vmatmul.bf16.gmra.mxu0 %v629
    %v2177 = vpop.f32.mrf.mxu0
    %v2178 = vadd.f32 0.0, %v2177
    %v2179 = vpop.f32.mrf.mxu0
    %v2180 = vadd.f32 0.0, %v2179
    %2181 = vmatmul.bf16.gmra.mxu0 %v632
    %v2182 = vpop.f32.mrf.mxu0
    %v2183 = vadd.f32 0.0, %v2182
    %v2184 = vpop.f32.mrf.mxu0
    %2185 = vmatmul.bf16.gmra.mxu0 %v635
    %v2186 = vpop.f32.mrf.mxu0
    %v2187 = vadd.f32 0.0, %v2186
    %v2188 = vpop.f32.mrf.mxu0
    %v2189 = vadd.f32 0.0, %v2188
    %2190 = vmatmul.bf16.gmra.mxu0 %v638
    %v2191 = vpop.f32.mrf.mxu0
    %v2192 = vadd.f32 0.0, %v2191
    %v2193 = vpop.f32.mrf.mxu0
    %2194 = vmatmul.bf16.gmra.mxu0 %v641
    %v2195 = vpop.f32.mrf.mxu0
    %v2196 = vadd.f32 0.0, %v2195
    %v2197 = vpop.f32.mrf.mxu0
    %v2198 = vadd.f32 0.0, %v2197
    %2199 = vmatmul.bf16.gmra.mxu0 %v644
    %v2200 = vpop.f32.mrf.mxu0
    %v2201 = vadd.f32 0.0, %v2200
    %v2202 = vpop.f32.mrf.mxu0
    %2203 = vmatmul.bf16.gmra.mxu0 %v647
    %v2204 = vpop.f32.mrf.mxu0
    %v2205 = vadd.f32 0.0, %v2204
    %v2206 = vpop.f32.mrf.mxu0
    %v2207 = vadd.f32 0.0, %v2206
    %2208 = vmatmul.bf16.gmra.mxu0 %v650
    %v2209 = vpop.f32.mrf.mxu0
    %v2210 = vadd.f32 0.0, %v2209
    %v2211 = vpop.f32.mrf.mxu0
    %2212 = vmatmul.bf16.gmra.mxu0 %v653
    %v2213 = vpop.f32.mrf.mxu0
    %v2214 = vpop.f32.mrf.mxu0
    %2215 = vmatmul.bf16.gmra.mxu0 %v656
    %v2216 = vpop.f32.mrf.mxu0
    %v2217 = vpop.f32.mrf.mxu0
    %2218 = vmatmul.bf16.gmra.mxu0 %v659
    %v2219 = vpop.f32.mrf.mxu0
    %v2220 = vpop.f32.mrf.mxu0
    %2221 = vmatmul.bf16.gmra.mxu0 %v662
    %v2222 = vpop.f32.mrf.mxu0
    %v2223 = vpop.f32.mrf.mxu0
    %2224 = vmatmul.bf16.gmra.mxu0 %v665
    %v2225 = vpop.f32.mrf.mxu0
    %v2226 = vadd.f32 0.0, %v2225
    %v2227 = vpop.f32.mrf.mxu0
    %v2228 = vadd.f32 0.0, %v2227
    %2229 = vmatmul.bf16.gmra.mxu0 %v668
    %v2230 = vpop.f32.mrf.mxu0
    %v2231 = vadd.f32 0.0, %v2230
    %v2232 = vpop.f32.mrf.mxu0
    %2233 = vmatmul.bf16.gmra.mxu0 %v671
    %v2234 = vpop.f32.mrf.mxu0
    %v2235 = vadd.f32 0.0, %v2234
    %v2236 = vpop.f32.mrf.mxu0
    %v2237 = vadd.f32 0.0, %v2236
    %2238 = vmatmul.bf16.gmra.mxu0 %v674
    %v2239 = vpop.f32.mrf.mxu0
    %v2240 = vadd.f32 0.0, %v2239
    %v2241 = vpop.f32.mrf.mxu0
    %2242 = vmatmul.bf16.gmra.mxu0 %v677
    %v2243 = vpop.f32.mrf.mxu0
    %v2244 = vadd.f32 0.0, %v2243
    %v2245 = vpop.f32.mrf.mxu0
    %v2246 = vadd.f32 0.0, %v2245
    %2247 = vmatmul.bf16.gmra.mxu0 %v680
    %v2248 = vpop.f32.mrf.mxu0
    %v2249 = vadd.f32 0.0, %v2248
    %v2250 = vpop.f32.mrf.mxu0
    %2251 = vmatmul.bf16.gmra.mxu0 %v683
    %v2252 = vpop.f32.mrf.mxu0
    %v2253 = vadd.f32 0.0, %v2252
    %v2254 = vpop.f32.mrf.mxu0
    %v2255 = vadd.f32 0.0, %v2254
    %2256 = vmatmul.bf16.gmra.mxu0 %v686
    %v2257 = vpop.f32.mrf.mxu0
    %v2258 = vadd.f32 0.0, %v2257
    %v2259 = vpop.f32.mrf.mxu0
    %2260 = vmatmul.bf16.gmra.mxu0 %v689
    %v2261 = vpop.f32.mrf.mxu0
    %v2262 = vadd.f32 0.0, %v2261
    %v2263 = vpop.f32.mrf.mxu0
    %v2264 = vadd.f32 0.0, %v2263
    %2265 = vmatmul.bf16.gmra.mxu0 %v692
    %v2266 = vpop.f32.mrf.mxu0
    %v2267 = vadd.f32 0.0, %v2266
    %v2268 = vpop.f32.mrf.mxu0
    %2269 = vmatmul.bf16.gmra.mxu0 %v695
    %v2270 = vpop.f32.mrf.mxu0
    %v2271 = vadd.f32 0.0, %v2270
    %v2272 = vpop.f32.mrf.mxu0
    %v2273 = vadd.f32 0.0, %v2272
    %2274 = vmatmul.bf16.gmra.mxu0 %v698
    %v2275 = vpop.f32.mrf.mxu0
    %v2276 = vadd.f32 0.0, %v2275
    %v2277 = vpop.f32.mrf.mxu0
    %2278 = vmatmul.bf16.gmra.mxu0 %v701
    %v2279 = vpop.f32.mrf.mxu0
    %v2280 = vadd.f32 0.0, %v2279
    %v2281 = vpop.f32.mrf.mxu0
    %v2282 = vadd.f32 0.0, %v2281
    %2283 = vmatmul.bf16.gmra.mxu0 %v704
    %v2284 = vpop.f32.mrf.mxu0
    %v2285 = vadd.f32 0.0, %v2284
    %v2286 = vpop.f32.mrf.mxu0
    %2287 = vmatmul.bf16.gmra.mxu0 %v707
    %v2288 = vpop.f32.mrf.mxu0
    %v2289 = vadd.f32 0.0, %v2288
    %v2290 = vpop.f32.mrf.mxu0
    %v2291 = vadd.f32 0.0, %v2290
    %2292 = vmatmul.bf16.gmra.mxu0 %v710
    %v2293 = vpop.f32.mrf.mxu0
    %v2294 = vadd.f32 0.0, %v2293
    %v2295 = vpop.f32.mrf.mxu0
    %2296 = vmatmul.bf16.gmra.mxu0 %v713
    %v2297 = vpop.f32.mrf.mxu0
    %v2298 = vadd.f32 0.0, %v2297
    %v2299 = vpop.f32.mrf.mxu0
    %v2300 = vadd.f32 0.0, %v2299
    %2301 = vmatmul.bf16.gmra.mxu0 %v716
    %v2302 = vpop.f32.mrf.mxu0
    %v2303 = vadd.f32 0.0, %v2302
    %v2304 = vpop.f32.mrf.mxu0
    %2305 = vmatmul.bf16.gmra.mxu0 %v719
    %v2306 = vpop.f32.mrf.mxu0
    %v2307 = vadd.f32 0.0, %v2306
    %v2308 = vpop.f32.mrf.mxu0
    %v2309 = vadd.f32 0.0, %v2308
    %2310 = vmatmul.bf16.gmra.mxu0 %v722
    %v2311 = vpop.f32.mrf.mxu0
    %v2312 = vadd.f32 0.0, %v2311
    %v2313 = vpop.f32.mrf.mxu0
    %2314 = vmatmul.bf16.gmra.mxu0 %v725
    %v2315 = vpop.f32.mrf.mxu0
    %v2316 = vadd.f32 0.0, %v2315
    %v2317 = vpop.f32.mrf.mxu0
    %v2318 = vadd.f32 0.0, %v2317
    %2319 = vmatmul.bf16.gmra.mxu0 %v728
    %v2320 = vpop.f32.mrf.mxu0
    %v2321 = vadd.f32 0.0, %v2320
    %v2322 = vpop.f32.mrf.mxu0
    %2323 = vmatmul.bf16.gmra.mxu0 %v731
    %v2324 = vpop.f32.mrf.mxu0
    %v2325 = vadd.f32 0.0, %v2324
    %v2326 = vpop.f32.mrf.mxu0
    %v2327 = vadd.f32 0.0, %v2326
    %2328 = vmatmul.bf16.gmra.mxu0 %v734
    %v2329 = vpop.f32.mrf.mxu0
    %v2330 = vadd.f32 0.0, %v2329
    %v2331 = vpop.f32.mrf.mxu0
    %2332 = vmatmul.bf16.gmra.mxu0 %v737
    %v2333 = vpop.f32.mrf.mxu0
    %v2334 = vadd.f32 0.0, %v2333
    %v2335 = vpop.f32.mrf.mxu0
    %v2336 = vadd.f32 0.0, %v2335
    %2337 = vmatmul.bf16.gmra.mxu0 %v740
    %v2338 = vpop.f32.mrf.mxu0
    %v2339 = vadd.f32 0.0, %v2338
    %v2340 = vpop.f32.mrf.mxu0
    %2341 = vmatmul.bf16.gmra.mxu0 %v743
    %v2342 = vpop.f32.mrf.mxu0
    %v2343 = vadd.f32 0.0, %v2342
    %v2344 = vpop.f32.mrf.mxu0
    %v2345 = vadd.f32 0.0, %v2344
    %2346 = vmatmul.bf16.gmra.mxu0 %v746
    %v2347 = vpop.f32.mrf.mxu0
    %v2348 = vadd.f32 0.0, %v2347
    %v2349 = vpop.f32.mrf.mxu0
    %2350 = vmatmul.bf16.gmra.mxu0 %v749
    %v2351 = vpop.f32.mrf.mxu0
    %v2352 = vadd.f32 0.0, %v2351
    %v2353 = vpop.f32.mrf.mxu0
    %v2354 = vadd.f32 0.0, %v2353
    %2355 = vmatmul.bf16.gmra.mxu0 %v752
    %v2356 = vpop.f32.mrf.mxu0
    %v2357 = vadd.f32 0.0, %v2356
    %v2358 = vpop.f32.mrf.mxu0
    %2359 = vmatmul.bf16.gmra.mxu0 %v755
    %v2360 = vpop.f32.mrf.mxu0
    %v2361 = vadd.f32 0.0, %v2360
    %v2362 = vpop.f32.mrf.mxu0
    %v2363 = vadd.f32 0.0, %v2362
    %2364 = vmatmul.bf16.gmra.mxu0 %v758
    %v2365 = vpop.f32.mrf.mxu0
    %v2366 = vadd.f32 0.0, %v2365
    %v2367 = vpop.f32.mrf.mxu0
    %2368 = vdwg.mxu0
    %v2377 = vunpack.c.l.b16 %v171
    %v2378 = vunpack.c.l.b16 %v172
    %v2379 = vunpack.c.l.b16 %v173
    %v2380 = vunpack.c.l.b16 %v174
    %v2381 = vunpack.c.l.b16 %v175
    %v2382 = vunpack.c.l.b16 %v176
    %v2383 = vunpack.c.l.b16 %v177
    %v2384 = vunpack.c.l.b16 %v178
    %v2385 = vpack.c.b16 %v2378, %v2377
    %v2386 = vpack.c.b16 %v2380, %v2379
    %v2387 = vpack.c.b16 %v2382, %v2381
    %v2388 = vpack.c.b16 %v2384, %v2383
    %2393 = vmatpush.bf16.msra.mxu0 0
    %2394 = vmatpush.bf16.msra.mxu0 0
    %2395 = vmatpush.bf16.msra.mxu0 0
    %2396 = vmatpush.bf16.msra.mxu0 0
    %2397 = vmatpush.bf16.msra.mxu0 %v2388
    %2398 = vmatpush.bf16.msra.mxu0 %v2387
    %2399 = vmatpush.bf16.msra.mxu0 %v2386
    %2400 = vmatpush.bf16.msra.mxu0 %v2385
    %2401 = vmatmul.bf16.gmra.mxu0 %v1072
    %v2402 = vpop.f32.mrf.mxu0
    %v2403 = vadd.f32 %v2070, %v2402
    %v2404 = vpop.f32.mrf.mxu0
    %v2405 = vadd.f32 %v2072, %v2404
    %2406 = vmatmul.bf16.gmra.mxu0 %v1075
    %v2407 = vpop.f32.mrf.mxu0
    %v2408 = vadd.f32 %v2075, %v2407
    %v2409 = vpop.f32.mrf.mxu0
    %2410 = vmatmul.bf16.gmra.mxu0 %v557
    %v2411 = vpop.f32.mrf.mxu0
    %v2412 = vadd.f32 %v2079, %v2411
    %v2413 = vpop.f32.mrf.mxu0
    %v2414 = vadd.f32 %v2081, %v2413
    %2415 = vmatmul.bf16.gmra.mxu0 %v560
    %v2416 = vpop.f32.mrf.mxu0
    %v2417 = vadd.f32 %v2084, %v2416
    %v2418 = vpop.f32.mrf.mxu0
    %2419 = vmatmul.bf16.gmra.mxu0 %v563
    %v2420 = vpop.f32.mrf.mxu0
    %v2421 = vadd.f32 %v2088, %v2420
    %v2422 = vpop.f32.mrf.mxu0
    %v2423 = vadd.f32 %v2090, %v2422
    %2424 = vmatmul.bf16.gmra.mxu0 %v566
    %v2425 = vpop.f32.mrf.mxu0
    %v2426 = vadd.f32 %v2093, %v2425
    %v2427 = vpop.f32.mrf.mxu0
    %2428 = vmatmul.bf16.gmra.mxu0 %v569
    %v2429 = vpop.f32.mrf.mxu0
    %v2430 = vadd.f32 %v2097, %v2429
    %v2431 = vpop.f32.mrf.mxu0
    %v2432 = vadd.f32 %v2099, %v2431
    %2433 = vmatmul.bf16.gmra.mxu0 %v572
    %v2434 = vpop.f32.mrf.mxu0
    %v2435 = vadd.f32 %v2102, %v2434
    %v2436 = vpop.f32.mrf.mxu0
    %2437 = vmatmul.bf16.gmra.mxu0 %v575
    %v2438 = vpop.f32.mrf.mxu0
    %v2439 = vadd.f32 %v2106, %v2438
    %v2440 = vpop.f32.mrf.mxu0
    %v2441 = vadd.f32 %v2108, %v2440
    %2442 = vmatmul.bf16.gmra.mxu0 %v578
    %v2443 = vpop.f32.mrf.mxu0
    %v2444 = vadd.f32 %v2111, %v2443
    %v2445 = vpop.f32.mrf.mxu0
    %2446 = vmatmul.bf16.gmra.mxu0 %v581
    %v2447 = vpop.f32.mrf.mxu0
    %v2448 = vadd.f32 %v2115, %v2447
    %v2449 = vpop.f32.mrf.mxu0
    %v2450 = vadd.f32 %v2117, %v2449
    %2451 = vmatmul.bf16.gmra.mxu0 %v584
    %v2452 = vpop.f32.mrf.mxu0
    %v2453 = vadd.f32 %v2120, %v2452
    %v2454 = vpop.f32.mrf.mxu0
    %2455 = vmatmul.bf16.gmra.mxu0 %v587
    %v2456 = vpop.f32.mrf.mxu0
    %v2457 = vadd.f32 %v2124, %v2456
    %v2458 = vpop.f32.mrf.mxu0
    %v2459 = vadd.f32 %v2126, %v2458
    %2460 = vmatmul.bf16.gmra.mxu0 %v590
    %v2461 = vpop.f32.mrf.mxu0
    %v2462 = vadd.f32 %v2129, %v2461
    %v2463 = vpop.f32.mrf.mxu0
    %2464 = vmatmul.bf16.gmra.mxu0 %v593
    %v2465 = vpop.f32.mrf.mxu0
    %v2466 = vadd.f32 %v2133, %v2465
    %v2467 = vpop.f32.mrf.mxu0
    %v2468 = vadd.f32 %v2135, %v2467
    %2469 = vmatmul.bf16.gmra.mxu0 %v596
    %v2470 = vpop.f32.mrf.mxu0
    %v2471 = vadd.f32 %v2138, %v2470
    %v2472 = vpop.f32.mrf.mxu0
    %2473 = vmatmul.bf16.gmra.mxu0 %v599
    %v2474 = vpop.f32.mrf.mxu0
    %v2475 = vadd.f32 %v2142, %v2474
    %v2476 = vpop.f32.mrf.mxu0
    %v2477 = vadd.f32 %v2144, %v2476
    %2478 = vmatmul.bf16.gmra.mxu0 %v602
    %v2479 = vpop.f32.mrf.mxu0
    %v2480 = vadd.f32 %v2147, %v2479
    %v2481 = vpop.f32.mrf.mxu0
    %2482 = vmatmul.bf16.gmra.mxu0 %v605
    %v2483 = vpop.f32.mrf.mxu0
    %v2484 = vadd.f32 %v2151, %v2483
    %v2485 = vpop.f32.mrf.mxu0
    %v2486 = vadd.f32 %v2153, %v2485
    %2487 = vmatmul.bf16.gmra.mxu0 %v608
    %v2488 = vpop.f32.mrf.mxu0
    %v2489 = vadd.f32 %v2156, %v2488
    %v2490 = vpop.f32.mrf.mxu0
    %2491 = vmatmul.bf16.gmra.mxu0 %v611
    %v2492 = vpop.f32.mrf.mxu0
    %v2493 = vadd.f32 %v2160, %v2492
    %v2494 = vpop.f32.mrf.mxu0
    %v2495 = vadd.f32 %v2162, %v2494
    %2496 = vmatmul.bf16.gmra.mxu0 %v614
    %v2497 = vpop.f32.mrf.mxu0
    %v2498 = vadd.f32 %v2165, %v2497
    %v2499 = vpop.f32.mrf.mxu0
    %2500 = vmatmul.bf16.gmra.mxu0 %v617
    %v2501 = vpop.f32.mrf.mxu0
    %v2502 = vadd.f32 %v2169, %v2501
    %v2503 = vpop.f32.mrf.mxu0
    %v2504 = vadd.f32 %v2171, %v2503
    %2505 = vmatmul.bf16.gmra.mxu0 %v620
    %v2506 = vpop.f32.mrf.mxu0
    %v2507 = vadd.f32 %v2174, %v2506
    %v2508 = vpop.f32.mrf.mxu0
    %2509 = vmatmul.bf16.gmra.mxu0 %v623
    %v2510 = vpop.f32.mrf.mxu0
    %v2511 = vadd.f32 %v2178, %v2510
    %v2512 = vpop.f32.mrf.mxu0
    %v2513 = vadd.f32 %v2180, %v2512
    %2514 = vmatmul.bf16.gmra.mxu0 %v626
    %v2515 = vpop.f32.mrf.mxu0
    %v2516 = vadd.f32 %v2183, %v2515
    %v2517 = vpop.f32.mrf.mxu0
    %2518 = vmatmul.bf16.gmra.mxu0 %v629
    %v2519 = vpop.f32.mrf.mxu0
    %v2520 = vadd.f32 %v2187, %v2519
    %v2521 = vpop.f32.mrf.mxu0
    %v2522 = vadd.f32 %v2189, %v2521
    %2523 = vmatmul.bf16.gmra.mxu0 %v632
    %v2524 = vpop.f32.mrf.mxu0
    %v2525 = vadd.f32 %v2192, %v2524
    %v2526 = vpop.f32.mrf.mxu0
    %2527 = vmatmul.bf16.gmra.mxu0 %v635
    %v2528 = vpop.f32.mrf.mxu0
    %v2529 = vadd.f32 %v2196, %v2528
    %v2530 = vpop.f32.mrf.mxu0
    %v2531 = vadd.f32 %v2198, %v2530
    %2532 = vmatmul.bf16.gmra.mxu0 %v638
    %v2533 = vpop.f32.mrf.mxu0
    %v2534 = vadd.f32 %v2201, %v2533
    %v2535 = vpop.f32.mrf.mxu0
    %2536 = vmatmul.bf16.gmra.mxu0 %v641
    %v2537 = vpop.f32.mrf.mxu0
    %v2538 = vadd.f32 %v2205, %v2537
    %v2539 = vpop.f32.mrf.mxu0
    %v2540 = vadd.f32 %v2207, %v2539
    %2541 = vmatmul.bf16.gmra.mxu0 %v644
    %v2542 = vpop.f32.mrf.mxu0
    %v2543 = vadd.f32 %v2210, %v2542
    %v2544 = vpop.f32.mrf.mxu0
    %2545 = vmatmul.bf16.gmra.mxu0 %v647
    %v2546 = vpop.f32.mrf.mxu0
    %v2547 = vpop.f32.mrf.mxu0
    %2548 = vmatmul.bf16.gmra.mxu0 %v650
    %v2549 = vpop.f32.mrf.mxu0
    %v2550 = vpop.f32.mrf.mxu0
    %2551 = vmatmul.bf16.gmra.mxu0 %v653
    %v2552 = vpop.f32.mrf.mxu0
    %v2553 = vpop.f32.mrf.mxu0
    %2554 = vmatmul.bf16.gmra.mxu0 %v656
    %v2555 = vpop.f32.mrf.mxu0
    %v2556 = vpop.f32.mrf.mxu0
    %2557 = vmatmul.bf16.gmra.mxu0 %v659
    %v2558 = vpop.f32.mrf.mxu0
    %v2559 = vadd.f32 %v2226, %v2558
    %v2560 = vpop.f32.mrf.mxu0
    %v2561 = vadd.f32 %v2228, %v2560
    %2562 = vmatmul.bf16.gmra.mxu0 %v662
    %v2563 = vpop.f32.mrf.mxu0
    %v2564 = vadd.f32 %v2231, %v2563
    %v2565 = vpop.f32.mrf.mxu0
    %2566 = vmatmul.bf16.gmra.mxu0 %v665
    %v2567 = vpop.f32.mrf.mxu0
    %v2568 = vadd.f32 %v2235, %v2567
    %v2569 = vpop.f32.mrf.mxu0
    %v2570 = vadd.f32 %v2237, %v2569
    %2571 = vmatmul.bf16.gmra.mxu0 %v668
    %v2572 = vpop.f32.mrf.mxu0
    %v2573 = vadd.f32 %v2240, %v2572
    %v2574 = vpop.f32.mrf.mxu0
    %2575 = vmatmul.bf16.gmra.mxu0 %v671
    %v2576 = vpop.f32.mrf.mxu0
    %v2577 = vadd.f32 %v2244, %v2576
    %v2578 = vpop.f32.mrf.mxu0
    %v2579 = vadd.f32 %v2246, %v2578
    %2580 = vmatmul.bf16.gmra.mxu0 %v674
    %v2581 = vpop.f32.mrf.mxu0
    %v2582 = vadd.f32 %v2249, %v2581
    %v2583 = vpop.f32.mrf.mxu0
    %2584 = vmatmul.bf16.gmra.mxu0 %v677
    %v2585 = vpop.f32.mrf.mxu0
    %v2586 = vadd.f32 %v2253, %v2585
    %v2587 = vpop.f32.mrf.mxu0
    %v2588 = vadd.f32 %v2255, %v2587
    %2589 = vmatmul.bf16.gmra.mxu0 %v680
    %v2590 = vpop.f32.mrf.mxu0
    %v2591 = vadd.f32 %v2258, %v2590
    %v2592 = vpop.f32.mrf.mxu0
    %2593 = vmatmul.bf16.gmra.mxu0 %v683
    %v2594 = vpop.f32.mrf.mxu0
    %v2595 = vadd.f32 %v2262, %v2594
    %v2596 = vpop.f32.mrf.mxu0
    %v2597 = vadd.f32 %v2264, %v2596
    %2598 = vmatmul.bf16.gmra.mxu0 %v686
    %v2599 = vpop.f32.mrf.mxu0
    %v2600 = vadd.f32 %v2267, %v2599
    %v2601 = vpop.f32.mrf.mxu0
    %2602 = vmatmul.bf16.gmra.mxu0 %v689
    %v2603 = vpop.f32.mrf.mxu0
    %v2604 = vadd.f32 %v2271, %v2603
    %v2605 = vpop.f32.mrf.mxu0
    %v2606 = vadd.f32 %v2273, %v2605
    %2607 = vmatmul.bf16.gmra.mxu0 %v692
    %v2608 = vpop.f32.mrf.mxu0
    %v2609 = vadd.f32 %v2276, %v2608
    %v2610 = vpop.f32.mrf.mxu0
    %2611 = vmatmul.bf16.gmra.mxu0 %v695
    %v2612 = vpop.f32.mrf.mxu0
    %v2613 = vadd.f32 %v2280, %v2612
    %v2614 = vpop.f32.mrf.mxu0
    %v2615 = vadd.f32 %v2282, %v2614
    %2616 = vmatmul.bf16.gmra.mxu0 %v698
    %v2617 = vpop.f32.mrf.mxu0
    %v2618 = vadd.f32 %v2285, %v2617
    %v2619 = vpop.f32.mrf.mxu0
    %2620 = vmatmul.bf16.gmra.mxu0 %v701
    %v2621 = vpop.f32.mrf.mxu0
    %v2622 = vadd.f32 %v2289, %v2621
    %v2623 = vpop.f32.mrf.mxu0
    %v2624 = vadd.f32 %v2291, %v2623
    %2625 = vmatmul.bf16.gmra.mxu0 %v704
    %v2626 = vpop.f32.mrf.mxu0
    %v2627 = vadd.f32 %v2294, %v2626
    %v2628 = vpop.f32.mrf.mxu0
    %2629 = vmatmul.bf16.gmra.mxu0 %v707
    %v2630 = vpop.f32.mrf.mxu0
    %v2631 = vadd.f32 %v2298, %v2630
    %v2632 = vpop.f32.mrf.mxu0
    %v2633 = vadd.f32 %v2300, %v2632
    %2634 = vmatmul.bf16.gmra.mxu0 %v710
    %v2635 = vpop.f32.mrf.mxu0
    %v2636 = vadd.f32 %v2303, %v2635
    %v2637 = vpop.f32.mrf.mxu0
    %2638 = vmatmul.bf16.gmra.mxu0 %v713
    %v2639 = vpop.f32.mrf.mxu0
    %v2640 = vadd.f32 %v2307, %v2639
    %v2641 = vpop.f32.mrf.mxu0
    %v2642 = vadd.f32 %v2309, %v2641
    %2643 = vmatmul.bf16.gmra.mxu0 %v716
    %v2644 = vpop.f32.mrf.mxu0
    %v2645 = vadd.f32 %v2312, %v2644
    %v2646 = vpop.f32.mrf.mxu0
    %2647 = vmatmul.bf16.gmra.mxu0 %v719
    %v2648 = vpop.f32.mrf.mxu0
    %v2649 = vadd.f32 %v2316, %v2648
    %v2650 = vpop.f32.mrf.mxu0
    %v2651 = vadd.f32 %v2318, %v2650
    %2652 = vmatmul.bf16.gmra.mxu0 %v722
    %v2653 = vpop.f32.mrf.mxu0
    %v2654 = vadd.f32 %v2321, %v2653
    %v2655 = vpop.f32.mrf.mxu0
    %2656 = vmatmul.bf16.gmra.mxu0 %v725
    %v2657 = vpop.f32.mrf.mxu0
    %v2658 = vadd.f32 %v2325, %v2657
    %v2659 = vpop.f32.mrf.mxu0
    %v2660 = vadd.f32 %v2327, %v2659
    %2661 = vmatmul.bf16.gmra.mxu0 %v728
    %v2662 = vpop.f32.mrf.mxu0
    %v2663 = vadd.f32 %v2330, %v2662
    %v2664 = vpop.f32.mrf.mxu0
    %2665 = vmatmul.bf16.gmra.mxu0 %v731
    %v2666 = vpop.f32.mrf.mxu0
    %v2667 = vadd.f32 %v2334, %v2666
    %v2668 = vpop.f32.mrf.mxu0
    %v2669 = vadd.f32 %v2336, %v2668
    %2670 = vmatmul.bf16.gmra.mxu0 %v734
    %v2671 = vpop.f32.mrf.mxu0
    %v2672 = vadd.f32 %v2339, %v2671
    %v2673 = vpop.f32.mrf.mxu0
    %2674 = vmatmul.bf16.gmra.mxu0 %v737
    %v2675 = vpop.f32.mrf.mxu0
    %v2676 = vadd.f32 %v2343, %v2675
    %v2677 = vpop.f32.mrf.mxu0
    %v2678 = vadd.f32 %v2345, %v2677
    %2679 = vmatmul.bf16.gmra.mxu0 %v740
    %v2680 = vpop.f32.mrf.mxu0
    %v2681 = vadd.f32 %v2348, %v2680
    %v2682 = vpop.f32.mrf.mxu0
    %2683 = vmatmul.bf16.gmra.mxu0 %v743
    %v2684 = vpop.f32.mrf.mxu0
    %v2685 = vadd.f32 %v2352, %v2684
    %v2686 = vpop.f32.mrf.mxu0
    %v2687 = vadd.f32 %v2354, %v2686
    %2688 = vmatmul.bf16.gmra.mxu0 %v746
    %v2689 = vpop.f32.mrf.mxu0
    %v2690 = vadd.f32 %v2357, %v2689
    %v2691 = vpop.f32.mrf.mxu0
    %2692 = vmatmul.bf16.gmra.mxu0 %v749
    %v2693 = vpop.f32.mrf.mxu0
    %v2694 = vadd.f32 %v2361, %v2693
    %v2695 = vpop.f32.mrf.mxu0
    %v2696 = vadd.f32 %v2363, %v2695
    %2697 = vmatmul.bf16.gmra.mxu0 %v752
    %v2698 = vpop.f32.mrf.mxu0
    %v2699 = vadd.f32 %v2366, %v2698
    %v2700 = vpop.f32.mrf.mxu0
    %2701 = vdwg.mxu0
    %v2702 = vld [vmem:[%s0 + $0x20] sm:$0xf]
    %v2703 = vld [vmem:[%s0 + $0x24] sm:$0xf]
    %v2704 = vld [vmem:[%s0 + $0x28] sm:$0xf]
    %v2705 = vld [vmem:[%s0 + $0x2c] sm:$0xf]
    %v2706 = vld [vmem:[%s0 + $0x30] sm:$0xf]
    %v2707 = vld [vmem:[%s0 + $0x34] sm:$0xf]
    %v2708 = vld [vmem:[%s0 + $0x38] sm:$0xf]
    %v2709 = vld [vmem:[%s0 + $0x3c] sm:$0xf]
    %v2710 = vld [vmem:[%s0 + $0x40] sm:$0xf]
    %v2711 = vld [vmem:[%s0 + $0x44] sm:$0xf]
    %v2712 = vld [vmem:[%s0 + $0x48] sm:$0xf]
    %v2713 = vld [vmem:[%s0 + $0x4c] sm:$0xf]
    %v2714 = vld [vmem:[%s0 + $0x50] sm:$0xf]
    %v2715 = vld [vmem:[%s0 + $0x54] sm:$0xf]
    %v2716 = vld [vmem:[%s0 + $0x58] sm:$0xf]
    %v2717 = vld [vmem:[%s0 + $0x5c] sm:$0xf]
    %v2718 = vld [vmem:[%s0 + $0x60] sm:$0xf]
    %v2719 = vld [vmem:[%s0 + $0x64] sm:$0xf]
    %v2720 = vld [vmem:[%s0 + $0x68] sm:$0xf]
    %v2721 = vld [vmem:[%s0 + $0x6c] sm:$0xf]
    %v2722 = vld [vmem:[%s0 + $0x70] sm:$0xf]
    %v2723 = vld [vmem:[%s0 + $0x74] sm:$0xf]
    %v2724 = vld [vmem:[%s0 + $0x78] sm:$0xf]
    %v2725 = vld [vmem:[%s0 + $0x7c] sm:$0xf]
    %v2726 = vld [vmem:[%s0 + $0x80] sm:$0xf]
    %v2727 = vld [vmem:[%s0 + $0x84] sm:$0xf]
    %v2728 = vld [vmem:[%s0 + $0x88] sm:$0xf]
    %v2729 = vld [vmem:[%s0 + $0x8c] sm:$0xf]
    %v2730 = vld [vmem:[%s0 + $0x90] sm:$0xf]
    %v2731 = vld [vmem:[%s0 + $0x94] sm:$0xf]
    %v2732 = vld [vmem:[%s0 + $0x98] sm:$0xf]
    %v2733 = vld [vmem:[%s0 + $0x9c] sm:$0xf]
    %v2734 = vld [vmem:[%s0 + $0xa0] sm:$0xf]
    %v2735 = vld [vmem:[%s0 + $0xa4] sm:$0xf]
    %v2736 = vld [vmem:[%s0 + $0xa8] sm:$0xf]
    %v2737 = vld [vmem:[%s0 + $0xac] sm:$0xf]
    %v2738 = vld [vmem:[%s0 + $0xb0] sm:$0xf]
    %v2739 = vld [vmem:[%s0 + $0xb4] sm:$0xf]
    %v2740 = vld [vmem:[%s0 + $0xb8] sm:$0xf]
    %v2741 = vld [vmem:[%s0 + $0xbc] sm:$0xf]
    %v2742 = vld [vmem:[%s0 + $0xc0] sm:$0xf]
    %v2743 = vld [vmem:[%s0 + $0xc4] sm:$0xf]
    %v2744 = vld [vmem:[%s0 + $0xc8] sm:$0xf]
    %v2745 = vld [vmem:[%s0 + $0xcc] sm:$0xf]
    %v2746 = vld [vmem:[%s0 + $0xd0] sm:$0xf]
    %v2747 = vld [vmem:[%s0 + $0xd4] sm:$0xf]
    %v2748 = vld [vmem:[%s0 + $0xd8] sm:$0xf]
    %v2749 = vld [vmem:[%s0 + $0xdc] sm:$0xf]
    %v2750 = vld [vmem:[%s0 + $0xe0] sm:$0xf]
    %v2751 = vld [vmem:[%s0 + $0xe4] sm:$0xf]
    %v2752 = vld [vmem:[%s0 + $0xe8] sm:$0xf]
    %v2753 = vld [vmem:[%s0 + $0xec] sm:$0xf]
    %v2754 = vld [vmem:[%s0 + $0xf0] sm:$0xf]
    %v2755 = vld [vmem:[%s0 + $0xf4] sm:$0xf]
    %v2756 = vld [vmem:[%s0 + $0xf8] sm:$0xf]
    %v2757 = vld [vmem:[%s0 + $0xfc] sm:$0xf]
    %v2758 = vld [vmem:[%s0 + $0x100] sm:$0xf]
    %v2759 = vld [vmem:[%s0 + $0x104] sm:$0xf]
    %v2760 = vld [vmem:[%s0 + $0x108] sm:$0xf]
    %v2761 = vld [vmem:[%s0 + $0x10c] sm:$0xf]
    %v2762 = vld [vmem:[%s0 + $0x110] sm:$0xf]
    %v2763 = vld [vmem:[%s0 + $0x114] sm:$0xf]
    %v2764 = vld [vmem:[%s0 + $0x118] sm:$0xf]
    %v2765 = vld [vmem:[%s0 + $0x11c] sm:$0xf]
    %v2766 = vld [vmem:[%s0 + $0x120] sm:$0xf]
    %v2767 = vld [vmem:[%s0 + $0x124] sm:$0xf]
    %v2768 = vld [vmem:[%s0 + $0x128] sm:$0xf]
    %v2769 = vld [vmem:[%s0 + $0x12c] sm:$0xf]
    %v2770 = vld [vmem:[%s0 + $0x130] sm:$0xf]
    %v2771 = vld [vmem:[%s0 + $0x134] sm:$0xf]
    %v2772 = vld [vmem:[%s0 + $0x138] sm:$0xf]
    %v2773 = vld [vmem:[%s0 + $0x13c] sm:$0xf]
    %v2774 = vld [vmem:[%s0 + $0x140] sm:$0xf]
    %v2775 = vld [vmem:[%s0 + $0x144] sm:$0xf]
    %v2776 = vld [vmem:[%s0 + $0x148] sm:$0xf]
    %v2777 = vld [vmem:[%s0 + $0x14c] sm:$0xf]
    %v2778 = vld [vmem:[%s0 + $0x150] sm:$0xf]
    %v2779 = vld [vmem:[%s0 + $0x154] sm:$0xf]
    %v2780 = vld [vmem:[%s0 + $0x158] sm:$0xf]
    %v2781 = vld [vmem:[%s0 + $0x15c] sm:$0xf]
    %v2782 = vld [vmem:[%s0 + $0x160] sm:$0xf]
    %v2783 = vld [vmem:[%s0 + $0x164] sm:$0xf]
    %v2784 = vld [vmem:[%s0 + $0x168] sm:$0xf]
    %v2785 = vld [vmem:[%s0 + $0x16c] sm:$0xf]
    %v2786 = vld [vmem:[%s0 + $0x170] sm:$0xf]
    %v2787 = vld [vmem:[%s0 + $0x174] sm:$0xf]
    %v2788 = vld [vmem:[%s0 + $0x178] sm:$0xf]
    %v2789 = vld [vmem:[%s0 + $0x17c] sm:$0xf]
    %v2790 = vld [vmem:[%s0 + $0x180] sm:$0xf]
    %v2791 = vld [vmem:[%s0 + $0x184] sm:$0xf]
    %v2792 = vld [vmem:[%s0 + $0x188] sm:$0xf]
    %v2793 = vld [vmem:[%s0 + $0x18c] sm:$0xf]
    %v2794 = vld [vmem:[%s0 + $0x190] sm:$0xf]
    %v2795 = vld [vmem:[%s0 + $0x194] sm:$0xf]
    %v2796 = vld [vmem:[%s0 + $0x198] sm:$0xf]
    %v2797 = vld [vmem:[%s0 + $0x19c] sm:$0xf]
    %v2798 = vld [vmem:[%s0 + $0x1a0] sm:$0xf]
    %v2799 = vld [vmem:[%s0 + $0x1a4] sm:$0xf]
    %v2800 = vld [vmem:[%s0 + $0x1a8] sm:$0xf]
    %v2801 = vld [vmem:[%s0 + $0x1ac] sm:$0xf]
    %v2802 = vld [vmem:[%s0 + $0x1b0] sm:$0xf]
    %v2803 = vld [vmem:[%s0 + $0x1b4] sm:$0xf]
    %v2804 = vld [vmem:[%s0 + $0x1b8] sm:$0xf]
    %v2805 = vld [vmem:[%s0 + $0x1bc] sm:$0xf]
    %v2806 = vld [vmem:[%s0 + $0x1c0] sm:$0xf]
    %v2807 = vld [vmem:[%s0 + $0x1c4] sm:$0xf]
    %v2808 = vld [vmem:[%s0 + $0x1c8] sm:$0xf]
    %v2809 = vld [vmem:[%s0 + $0x1cc] sm:$0xf]
    %v2810 = vld [vmem:[%s0 + $0x1d0] sm:$0xf]
    %v2811 = vld [vmem:[%s0 + $0x1d4] sm:$0xf]
    %v2812 = vld [vmem:[%s0 + $0x1d8] sm:$0xf]
    %v2813 = vld [vmem:[%s0 + $0x1dc] sm:$0xf]
    %v2814 = vld [vmem:[%s0 + $0x1e0] sm:$0xf]
    %v2815 = vld [vmem:[%s0 + $0x1e4] sm:$0xf]
    %v2816 = vld [vmem:[%s0 + $0x1e8] sm:$0xf]
    %v2817 = vld [vmem:[%s0 + $0x1ec] sm:$0xf]
    %v2818 = vld [vmem:[%s0 + $0x1f0] sm:$0xf]
    %v2819 = vld [vmem:[%s0 + $0x1f4] sm:$0xf]
    %v2820 = vld [vmem:[%s0 + $0x1f8] sm:$0xf]
    %v2821 = vld [vmem:[%s0 + $0x1fc] sm:$0xf]
    %v2822 = vld [vmem:[%s0 + $0x200] sm:$0xf]
    %v2823 = vld [vmem:[%s0 + $0x204] sm:$0xf]
    %v2824 = vld [vmem:[%s0 + $0x208] sm:$0xf]
    %v2825 = vld [vmem:[%s0 + $0x20c] sm:$0xf]
    %v2826 = vld [vmem:[%s0 + $0x210] sm:$0xf]
    %v2827 = vld [vmem:[%s0 + $0x214] sm:$0xf]
    %v2828 = vld [vmem:[%s0 + $0x218] sm:$0xf]
    %v2829 = vld [vmem:[%s0 + $0x21c] sm:$0xf]
    %v2830 = vld [vmem:[%s0 + $0x220] sm:$0xf]
    %v2831 = vld [vmem:[%s0 + $0x224] sm:$0xf]
    %v2832 = vld [vmem:[%s0 + $0x228] sm:$0xf]
    %v2833 = vld [vmem:[%s0 + $0x22c] sm:$0xf]
    %v2834 = vld [vmem:[%s0 + $0x230] sm:$0xf]
    %v2835 = vld [vmem:[%s0 + $0x234] sm:$0xf]
    %v2836 = vld [vmem:[%s0 + $0x238] sm:$0xf]
    %v2837 = vld [vmem:[%s0 + $0x23c] sm:$0xf]
    %v2838 = vld [vmem:[%s2 + $0xc0] sm:$0xf]
    %v2839 = vld [vmem:[%s2 + $0xc4] sm:$0xf]
    %v2840 = vld [vmem:[%s2 + $0xc8] sm:$0xf]
    %v2841 = vld [vmem:[%s2 + $0xcc] sm:$0xf]
    %v2842 = vld [vmem:[%s2 + $0xd0] sm:$0xf]
    %v2843 = vld [vmem:[%s2 + $0xd4] sm:$0xf]
    %v2844 = vld [vmem:[%s2 + $0xd8] sm:$0xf]
    %v2845 = vld [vmem:[%s2 + $0xdc] sm:$0xf]
    %v2982 = vunpack.c.l.b16 %v2702
    %v2983 = vunpack.c.l.b16 %v2703
    %v2984 = vunpack.c.l.b16 %v2704
    %v2985 = vunpack.c.l.b16 %v2705
    %v2986 = vunpack.c.l.b16 %v2706
    %v2987 = vunpack.c.l.b16 %v2707
    %v2988 = vunpack.c.l.b16 %v2708
    %v2989 = vunpack.c.l.b16 %v2709
    %v2990 = vunpack.c.l.b16 %v2710
    %v2991 = vunpack.c.l.b16 %v2711
    %v2992 = vunpack.c.l.b16 %v2712
    %v2993 = vunpack.c.l.b16 %v2713
    %v2994 = vunpack.c.l.b16 %v2714
    %v2995 = vunpack.c.l.b16 %v2715
    %v2996 = vunpack.c.l.b16 %v2716
    %v2997 = vunpack.c.l.b16 %v2717
    %v2998 = vunpack.c.l.b16 %v2718
    %v2999 = vunpack.c.l.b16 %v2719
    %v3000 = vunpack.c.l.b16 %v2720
    %v3001 = vunpack.c.l.b16 %v2721
    %v3002 = vunpack.c.l.b16 %v2722
    %v3003 = vunpack.c.l.b16 %v2723
    %v3004 = vunpack.c.l.b16 %v2724
    %v3005 = vunpack.c.l.b16 %v2725
    %v3006 = vunpack.c.l.b16 %v2726
    %v3007 = vunpack.c.l.b16 %v2727
    %v3008 = vunpack.c.l.b16 %v2728
    %v3009 = vunpack.c.l.b16 %v2729
    %v3010 = vunpack.c.l.b16 %v2730
    %v3011 = vunpack.c.l.b16 %v2731
    %v3012 = vunpack.c.l.b16 %v2732
    %v3013 = vunpack.c.l.b16 %v2733
    %v3014 = vunpack.c.l.b16 %v2734
    %v3015 = vunpack.c.l.b16 %v2735
    %v3016 = vunpack.c.l.b16 %v2736
    %v3017 = vunpack.c.l.b16 %v2737
    %v3018 = vunpack.c.l.b16 %v2738
    %v3019 = vunpack.c.l.b16 %v2739
    %v3020 = vunpack.c.l.b16 %v2740
    %v3021 = vunpack.c.l.b16 %v2741
    %v3022 = vunpack.c.l.b16 %v2742
    %v3023 = vunpack.c.l.b16 %v2743
    %v3024 = vunpack.c.l.b16 %v2744
    %v3025 = vunpack.c.l.b16 %v2745
    %v3026 = vunpack.c.l.b16 %v2746
    %v3027 = vunpack.c.l.b16 %v2747
    %v3028 = vunpack.c.l.b16 %v2748
    %v3029 = vunpack.c.l.b16 %v2749
    %v3030 = vunpack.c.l.b16 %v2750
    %v3031 = vunpack.c.l.b16 %v2751
    %v3032 = vunpack.c.l.b16 %v2752
    %v3033 = vunpack.c.l.b16 %v2753
    %v3034 = vunpack.c.l.b16 %v2754
    %v3035 = vunpack.c.l.b16 %v2755
    %v3036 = vunpack.c.l.b16 %v2756
    %v3037 = vunpack.c.l.b16 %v2757
    %v3038 = vunpack.c.l.b16 %v2758
    %v3039 = vunpack.c.l.b16 %v2759
    %v3040 = vunpack.c.l.b16 %v2760
    %v3041 = vunpack.c.l.b16 %v2761
    %v3042 = vunpack.c.l.b16 %v2762
    %v3043 = vunpack.c.l.b16 %v2763
    %v3044 = vunpack.c.l.b16 %v2764
    %v3045 = vunpack.c.l.b16 %v2765
    %v3046 = vunpack.c.l.b16 %v2766
    %v3047 = vunpack.c.l.b16 %v2767
    %v3048 = vunpack.c.l.b16 %v2768
    %v3049 = vunpack.c.l.b16 %v2769
    %v3050 = vunpack.c.l.b16 %v2770
    %v3051 = vunpack.c.l.b16 %v2771
    %v3052 = vunpack.c.l.b16 %v2772
    %v3053 = vunpack.c.l.b16 %v2773
    %v3054 = vunpack.c.l.b16 %v2774
    %v3055 = vunpack.c.l.b16 %v2775
    %v3056 = vunpack.c.l.b16 %v2776
    %v3057 = vunpack.c.l.b16 %v2777
    %v3058 = vunpack.c.l.b16 %v2778
    %v3059 = vunpack.c.l.b16 %v2779
    %v3060 = vunpack.c.l.b16 %v2780
    %v3061 = vunpack.c.l.b16 %v2781
    %v3062 = vunpack.c.l.b16 %v2782
    %v3063 = vunpack.c.l.b16 %v2783
    %v3064 = vunpack.c.l.b16 %v2784
    %v3065 = vunpack.c.l.b16 %v2785
    %v3066 = vunpack.c.l.b16 %v2786
    %v3067 = vunpack.c.l.b16 %v2787
    %v3068 = vunpack.c.l.b16 %v2788
    %v3069 = vunpack.c.l.b16 %v2789
    %v3070 = vunpack.c.l.b16 %v2790
    %v3071 = vunpack.c.l.b16 %v2791
    %v3072 = vunpack.c.l.b16 %v2792
    %v3073 = vunpack.c.l.b16 %v2793
    %v3074 = vunpack.c.l.b16 %v2794
    %v3075 = vunpack.c.l.b16 %v2795
    %v3076 = vunpack.c.l.b16 %v2796
    %v3077 = vunpack.c.l.b16 %v2797
    %v3078 = vunpack.c.l.b16 %v2798
    %v3079 = vunpack.c.l.b16 %v2799
    %v3080 = vunpack.c.l.b16 %v2800
    %v3081 = vunpack.c.l.b16 %v2801
    %v3082 = vunpack.c.l.b16 %v2802
    %v3083 = vunpack.c.l.b16 %v2803
    %v3084 = vunpack.c.l.b16 %v2804
    %v3085 = vunpack.c.l.b16 %v2805
    %v3086 = vunpack.c.l.b16 %v2806
    %v3087 = vunpack.c.l.b16 %v2807
    %v3088 = vunpack.c.l.b16 %v2808
    %v3089 = vunpack.c.l.b16 %v2809
    %v3090 = vunpack.c.l.b16 %v2810
    %v3091 = vunpack.c.l.b16 %v2811
    %v3092 = vunpack.c.l.b16 %v2812
    %v3093 = vunpack.c.l.b16 %v2813
    %v3094 = vunpack.c.l.b16 %v2814
    %v3095 = vunpack.c.l.b16 %v2815
    %v3096 = vunpack.c.l.b16 %v2816
    %v3097 = vunpack.c.l.b16 %v2817
    %v3098 = vunpack.c.l.b16 %v2818
    %v3099 = vunpack.c.l.b16 %v2819
    %v3100 = vunpack.c.l.b16 %v2820
    %v3101 = vunpack.c.l.b16 %v2821
    %v3102 = vunpack.c.l.b16 %v2822
    %v3103 = vunpack.c.l.b16 %v2823
    %v3104 = vunpack.c.l.b16 %v2824
    %v3105 = vunpack.c.l.b16 %v2825
    %v3106 = vunpack.c.l.b16 %v2826
    %v3107 = vunpack.c.l.b16 %v2827
    %v3108 = vunpack.c.l.b16 %v2828
    %v3109 = vunpack.c.l.b16 %v2829
    %v3110 = vunpack.c.l.b16 %v2830
    %v3111 = vunpack.c.l.b16 %v2831
    %v3112 = vunpack.c.l.b16 %v2832
    %v3113 = vunpack.c.l.b16 %v2833
    %v3114 = vunpack.c.l.b16 %v2834
    %v3115 = vunpack.c.l.b16 %v2835
    %v3116 = vunpack.c.l.b16 %v2836
    %v3117 = vunpack.c.l.b16 %v2837
    %v3118 = vpack.c.b16 %v2983, %v2982
    %v3119 = vpack.c.b16 %v2985, %v2984
    %v3120 = vpack.c.b16 %v2987, %v2986
    %v3121 = vpack.c.b16 %v2989, %v2988
    %v3122 = vpack.c.b16 %v2991, %v2990
    %v3123 = vpack.c.b16 %v2993, %v2992
    %v3124 = vpack.c.b16 %v2995, %v2994
    %v3125 = vpack.c.b16 %v2997, %v2996
    %v3126 = vpack.c.b16 %v2999, %v2998
    %v3127 = vpack.c.b16 %v3001, %v3000
    %v3128 = vpack.c.b16 %v3003, %v3002
    %v3129 = vpack.c.b16 %v3005, %v3004
    %v3130 = vpack.c.b16 %v3007, %v3006
    %v3131 = vpack.c.b16 %v3009, %v3008
    %v3132 = vpack.c.b16 %v3011, %v3010
    %v3133 = vpack.c.b16 %v3013, %v3012
    %v3134 = vpack.c.b16 %v3015, %v3014
    %v3135 = vpack.c.b16 %v3017, %v3016
    %v3136 = vpack.c.b16 %v3019, %v3018
    %v3137 = vpack.c.b16 %v3021, %v3020
    %v3138 = vpack.c.b16 %v3023, %v3022
    %v3139 = vpack.c.b16 %v3025, %v3024
    %v3140 = vpack.c.b16 %v3027, %v3026
    %v3141 = vpack.c.b16 %v3029, %v3028
    %v3142 = vpack.c.b16 %v3031, %v3030
    %v3143 = vpack.c.b16 %v3033, %v3032
    %v3144 = vpack.c.b16 %v3035, %v3034
    %v3145 = vpack.c.b16 %v3037, %v3036
    %v3146 = vpack.c.b16 %v3039, %v3038
    %v3147 = vpack.c.b16 %v3041, %v3040
    %v3148 = vpack.c.b16 %v3043, %v3042
    %v3149 = vpack.c.b16 %v3045, %v3044
    %v3150 = vpack.c.b16 %v3047, %v3046
    %v3151 = vpack.c.b16 %v3049, %v3048
    %v3152 = vpack.c.b16 %v3051, %v3050
    %v3153 = vpack.c.b16 %v3053, %v3052
    %v3154 = vpack.c.b16 %v3055, %v3054
    %v3155 = vpack.c.b16 %v3057, %v3056
    %v3156 = vpack.c.b16 %v3059, %v3058
    %v3157 = vpack.c.b16 %v3061, %v3060
    %v3158 = vpack.c.b16 %v3063, %v3062
    %v3159 = vpack.c.b16 %v3065, %v3064
    %v3160 = vpack.c.b16 %v3067, %v3066
    %v3161 = vpack.c.b16 %v3069, %v3068
    %v3162 = vpack.c.b16 %v3071, %v3070
    %v3163 = vpack.c.b16 %v3073, %v3072
    %v3164 = vpack.c.b16 %v3075, %v3074
    %v3165 = vpack.c.b16 %v3077, %v3076
    %v3166 = vpack.c.b16 %v3079, %v3078
    %v3167 = vpack.c.b16 %v3081, %v3080
    %v3168 = vpack.c.b16 %v3083, %v3082
    %v3169 = vpack.c.b16 %v3085, %v3084
    %v3170 = vpack.c.b16 %v3087, %v3086
    %v3171 = vpack.c.b16 %v3089, %v3088
    %v3172 = vpack.c.b16 %v3091, %v3090
    %v3173 = vpack.c.b16 %v3093, %v3092
    %v3174 = vpack.c.b16 %v3095, %v3094
    %v3175 = vpack.c.b16 %v3097, %v3096
    %v3176 = vpack.c.b16 %v3099, %v3098
    %v3177 = vpack.c.b16 %v3101, %v3100
    %v3178 = vpack.c.b16 %v3103, %v3102
    %v3179 = vpack.c.b16 %v3105, %v3104
    %v3180 = vpack.c.b16 %v3107, %v3106
    %v3181 = vpack.c.b16 %v3109, %v3108
    %v3182 = vpack.c.b16 %v3111, %v3110
    %v3183 = vpack.c.b16 %v3113, %v3112
    %v3184 = vpack.c.b16 %v3115, %v3114
    %v3185 = vpack.c.b16 %v3117, %v3116
    %v3194 = vunpack.c.l.b16 %v2838
    %v3195 = vunpack.c.l.b16 %v2839
    %v3196 = vunpack.c.l.b16 %v2840
    %v3197 = vunpack.c.l.b16 %v2841
    %v3198 = vunpack.c.l.b16 %v2842
    %v3199 = vunpack.c.l.b16 %v2843
    %v3200 = vunpack.c.l.b16 %v2844
    %v3201 = vunpack.c.l.b16 %v2845
    %v3202 = vpack.c.b16 %v3195, %v3194
    %v3203 = vpack.c.b16 %v3197, %v3196
    %v3204 = vpack.c.b16 %v3199, %v3198
    %v3205 = vpack.c.b16 %v3201, %v3200
    %v3211 = vsel %vm555, %v3118, 0
    %v3214 = vsel %vm555, %v3119, 0
    %v3217 = vsel %vm555, %v3120, 0
    %v3220 = vsel %vm555, %v3121, 0
    %v3223 = vsel %vm555, %v3122, 0
    %v3226 = vsel %vm555, %v3123, 0
    %v3229 = vsel %vm555, %v3124, 0
    %v3232 = vsel %vm555, %v3125, 0
    %v3235 = vsel %vm555, %v3126, 0
    %v3238 = vsel %vm555, %v3127, 0
    %v3241 = vsel %vm555, %v3128, 0
    %v3244 = vsel %vm555, %v3129, 0
    %v3247 = vsel %vm555, %v3130, 0
    %v3250 = vsel %vm555, %v3131, 0
    %v3253 = vsel %vm555, %v3132, 0
    %v3256 = vsel %vm555, %v3133, 0
    %v3259 = vsel %vm555, %v3134, 0
    %v3262 = vsel %vm555, %v3135, 0
    %v3265 = vsel %vm555, %v3136, 0
    %v3268 = vsel %vm555, %v3137, 0
    %v3271 = vsel %vm555, %v3138, 0
    %v3274 = vsel %vm555, %v3139, 0
    %v3277 = vsel %vm555, %v3140, 0
    %v3280 = vsel %vm555, %v3141, 0
    %v3283 = vsel %vm555, %v3142, 0
    %v3286 = vsel %vm555, %v3143, 0
    %v3289 = vsel %vm555, %v3144, 0
    %v3292 = vsel %vm555, %v3145, 0
    %v3295 = vsel %vm555, %v3146, 0
    %v3298 = vsel %vm555, %v3147, 0
    %v3301 = vsel %vm555, %v3148, 0
    %v3304 = vsel %vm555, %v3149, 0
    %v3307 = vsel %vm555, %v3150, 0
    %v3310 = vsel %vm555, %v3151, 0
    %v3313 = vsel %vm555, %v3152, 0
    %v3316 = vsel %vm555, %v3153, 0
    %v3319 = vsel %vm555, %v3154, 0
    %v3322 = vsel %vm555, %v3155, 0
    %v3325 = vsel %vm555, %v3156, 0
    %v3328 = vsel %vm555, %v3157, 0
    %v3331 = vsel %vm555, %v3158, 0
    %v3334 = vsel %vm555, %v3159, 0
    %v3337 = vsel %vm555, %v3160, 0
    %v3340 = vsel %vm555, %v3161, 0
    %v3343 = vsel %vm555, %v3162, 0
    %v3346 = vsel %vm555, %v3163, 0
    %v3349 = vsel %vm555, %v3164, 0
    %v3352 = vsel %vm555, %v3165, 0
    %v3355 = vsel %vm555, %v3166, 0
    %v3358 = vsel %vm555, %v3167, 0
    %v3361 = vsel %vm555, %v3168, 0
    %v3364 = vsel %vm555, %v3169, 0
    %v3367 = vsel %vm555, %v3170, 0
    %v3370 = vsel %vm555, %v3171, 0
    %v3373 = vsel %vm555, %v3172, 0
    %v3376 = vsel %vm555, %v3173, 0
    %v3379 = vsel %vm555, %v3174, 0
    %v3382 = vsel %vm555, %v3175, 0
    %v3385 = vsel %vm555, %v3176, 0
    %v3388 = vsel %vm555, %v3177, 0
    %v3391 = vsel %vm555, %v3178, 0
    %v3394 = vsel %vm555, %v3179, 0
    %v3397 = vsel %vm555, %v3180, 0
    %v3400 = vsel %vm555, %v3181, 0
    %v3403 = vsel %vm555, %v3182, 0
    %v3406 = vsel %vm555, %v3183, 0
    %v3409 = vsel %vm555, %v3184, 0
    %v3412 = vsel %vm555, %v3185, 0
    %3414 = vmatpush.bf16.msra.mxu0 0
    %3415 = vmatpush.bf16.msra.mxu0 0
    %3416 = vmatpush.bf16.msra.mxu0 0
    %3417 = vmatpush.bf16.msra.mxu0 0
    %3418 = vmatpush.bf16.msra.mxu0 %v3205
    %3419 = vmatpush.bf16.msra.mxu0 %v3204
    %3420 = vmatpush.bf16.msra.mxu0 %v3203
    %3421 = vmatpush.bf16.msra.mxu0 %v3202
    %3422 = vmatmul.bf16.gmra.mxu0 %v3211
    %v3423 = vpop.f32.mrf.mxu0
    %v3424 = vadd.f32 0.0, %v3423
    %v3425 = vpop.f32.mrf.mxu0
    %v3426 = vadd.f32 0.0, %v3425
    %3427 = vmatmul.bf16.gmra.mxu0 %v3214
    %v3428 = vpop.f32.mrf.mxu0
    %v3429 = vpop.f32.mrf.mxu0
    %3430 = vmatmul.bf16.gmra.mxu0 %v3217
    %v3431 = vpop.f32.mrf.mxu0
    %v3432 = vadd.f32 0.0, %v3431
    %v3433 = vpop.f32.mrf.mxu0
    %v3434 = vadd.f32 0.0, %v3433
    %3435 = vmatmul.bf16.gmra.mxu0 %v3220
    %v3436 = vpop.f32.mrf.mxu0
    %v3437 = vpop.f32.mrf.mxu0
    %3438 = vmatmul.bf16.gmra.mxu0 %v3223
    %v3439 = vpop.f32.mrf.mxu0
    %v3440 = vadd.f32 0.0, %v3439
    %v3441 = vpop.f32.mrf.mxu0
    %v3442 = vadd.f32 0.0, %v3441
    %3443 = vmatmul.bf16.gmra.mxu0 %v3226
    %v3444 = vpop.f32.mrf.mxu0
    %v3445 = vpop.f32.mrf.mxu0
    %3446 = vmatmul.bf16.gmra.mxu0 %v3229
    %v3447 = vpop.f32.mrf.mxu0
    %v3448 = vadd.f32 0.0, %v3447
    %v3449 = vpop.f32.mrf.mxu0
    %v3450 = vadd.f32 0.0, %v3449
    %3451 = vmatmul.bf16.gmra.mxu0 %v3232
    %v3452 = vpop.f32.mrf.mxu0
    %v3453 = vpop.f32.mrf.mxu0
    %3454 = vmatmul.bf16.gmra.mxu0 %v3235
    %v3455 = vpop.f32.mrf.mxu0
    %v3456 = vadd.f32 0.0, %v3455
    %v3457 = vpop.f32.mrf.mxu0
    %v3458 = vadd.f32 0.0, %v3457
    %3459 = vmatmul.bf16.gmra.mxu0 %v3238
    %v3460 = vpop.f32.mrf.mxu0
    %v3461 = vpop.f32.mrf.mxu0
    %3462 = vmatmul.bf16.gmra.mxu0 %v3241
    %v3463 = vpop.f32.mrf.mxu0
    %v3464 = vadd.f32 0.0, %v3463
    %v3465 = vpop.f32.mrf.mxu0
    %v3466 = vadd.f32 0.0, %v3465
    %3467 = vmatmul.bf16.gmra.mxu0 %v3244
    %v3468 = vpop.f32.mrf.mxu0
    %v3469 = vpop.f32.mrf.mxu0
    %3470 = vmatmul.bf16.gmra.mxu0 %v3247
    %v3471 = vpop.f32.mrf.mxu0
    %v3472 = vadd.f32 0.0, %v3471
    %v3473 = vpop.f32.mrf.mxu0
    %v3474 = vadd.f32 0.0, %v3473
    %3475 = vmatmul.bf16.gmra.mxu0 %v3250
    %v3476 = vpop.f32.mrf.mxu0
    %v3477 = vpop.f32.mrf.mxu0
    %3478 = vmatmul.bf16.gmra.mxu0 %v3253
    %v3479 = vpop.f32.mrf.mxu0
    %v3480 = vadd.f32 0.0, %v3479
    %v3481 = vpop.f32.mrf.mxu0
    %v3482 = vadd.f32 0.0, %v3481
    %3483 = vmatmul.bf16.gmra.mxu0 %v3256
    %v3484 = vpop.f32.mrf.mxu0
    %v3485 = vpop.f32.mrf.mxu0
    %3486 = vmatmul.bf16.gmra.mxu0 %v3259
    %v3487 = vpop.f32.mrf.mxu0
    %v3488 = vadd.f32 0.0, %v3487
    %v3489 = vpop.f32.mrf.mxu0
    %v3490 = vadd.f32 0.0, %v3489
    %3491 = vmatmul.bf16.gmra.mxu0 %v3262
    %v3492 = vpop.f32.mrf.mxu0
    %v3493 = vpop.f32.mrf.mxu0
    %3494 = vmatmul.bf16.gmra.mxu0 %v3265
    %v3495 = vpop.f32.mrf.mxu0
    %v3496 = vadd.f32 0.0, %v3495
    %v3497 = vpop.f32.mrf.mxu0
    %v3498 = vadd.f32 0.0, %v3497
    %3499 = vmatmul.bf16.gmra.mxu0 %v3268
    %v3500 = vpop.f32.mrf.mxu0
    %v3501 = vpop.f32.mrf.mxu0
    %3502 = vmatmul.bf16.gmra.mxu0 %v3271
    %v3503 = vpop.f32.mrf.mxu0
    %v3504 = vadd.f32 0.0, %v3503
    %v3505 = vpop.f32.mrf.mxu0
    %v3506 = vadd.f32 0.0, %v3505
    %3507 = vmatmul.bf16.gmra.mxu0 %v3274
    %v3508 = vpop.f32.mrf.mxu0
    %v3509 = vpop.f32.mrf.mxu0
    %3510 = vmatmul.bf16.gmra.mxu0 %v3277
    %v3511 = vpop.f32.mrf.mxu0
    %v3512 = vadd.f32 0.0, %v3511
    %v3513 = vpop.f32.mrf.mxu0
    %v3514 = vadd.f32 0.0, %v3513
    %3515 = vmatmul.bf16.gmra.mxu0 %v3280
    %v3516 = vpop.f32.mrf.mxu0
    %v3517 = vpop.f32.mrf.mxu0
    %3518 = vmatmul.bf16.gmra.mxu0 %v3283
    %v3519 = vpop.f32.mrf.mxu0
    %v3520 = vadd.f32 0.0, %v3519
    %v3521 = vpop.f32.mrf.mxu0
    %v3522 = vadd.f32 0.0, %v3521
    %3523 = vmatmul.bf16.gmra.mxu0 %v3286
    %v3524 = vpop.f32.mrf.mxu0
    %v3525 = vpop.f32.mrf.mxu0
    %3526 = vmatmul.bf16.gmra.mxu0 %v3289
    %v3527 = vpop.f32.mrf.mxu0
    %v3528 = vadd.f32 0.0, %v3527
    %v3529 = vpop.f32.mrf.mxu0
    %v3530 = vadd.f32 0.0, %v3529
    %3531 = vmatmul.bf16.gmra.mxu0 %v3292
    %v3532 = vpop.f32.mrf.mxu0
    %v3533 = vpop.f32.mrf.mxu0
    %3534 = vmatmul.bf16.gmra.mxu0 %v3295
    %v3535 = vpop.f32.mrf.mxu0
    %v3536 = vadd.f32 0.0, %v3535
    %v3537 = vpop.f32.mrf.mxu0
    %v3538 = vadd.f32 0.0, %v3537
    %3539 = vmatmul.bf16.gmra.mxu0 %v3298
    %v3540 = vpop.f32.mrf.mxu0
    %v3541 = vpop.f32.mrf.mxu0
    %3542 = vmatmul.bf16.gmra.mxu0 %v3301
    %v3543 = vpop.f32.mrf.mxu0
    %v3544 = vadd.f32 0.0, %v3543
    %v3545 = vpop.f32.mrf.mxu0
    %v3546 = vadd.f32 0.0, %v3545
    %3547 = vmatmul.bf16.gmra.mxu0 %v3304
    %v3548 = vpop.f32.mrf.mxu0
    %v3549 = vpop.f32.mrf.mxu0
    %3550 = vmatmul.bf16.gmra.mxu0 %v3307
    %v3551 = vpop.f32.mrf.mxu0
    %v3552 = vpop.f32.mrf.mxu0
    %3553 = vmatmul.bf16.gmra.mxu0 %v3310
    %v3554 = vpop.f32.mrf.mxu0
    %v3555 = vpop.f32.mrf.mxu0
    %3556 = vmatmul.bf16.gmra.mxu0 %v3313
    %v3557 = vpop.f32.mrf.mxu0
    %v3558 = vpop.f32.mrf.mxu0
    %3559 = vmatmul.bf16.gmra.mxu0 %v3316
    %v3560 = vpop.f32.mrf.mxu0
    %v3561 = vpop.f32.mrf.mxu0
    %3562 = vmatmul.bf16.gmra.mxu0 %v3319
    %v3563 = vpop.f32.mrf.mxu0
    %v3564 = vadd.f32 0.0, %v3563
    %v3565 = vpop.f32.mrf.mxu0
    %v3566 = vadd.f32 0.0, %v3565
    %3567 = vmatmul.bf16.gmra.mxu0 %v3322
    %v3568 = vpop.f32.mrf.mxu0
    %v3569 = vpop.f32.mrf.mxu0
    %3570 = vmatmul.bf16.gmra.mxu0 %v3325
    %v3571 = vpop.f32.mrf.mxu0
    %v3572 = vadd.f32 0.0, %v3571
    %v3573 = vpop.f32.mrf.mxu0
    %v3574 = vadd.f32 0.0, %v3573
    %3575 = vmatmul.bf16.gmra.mxu0 %v3328
    %v3576 = vpop.f32.mrf.mxu0
    %v3577 = vpop.f32.mrf.mxu0
    %3578 = vmatmul.bf16.gmra.mxu0 %v3331
    %v3579 = vpop.f32.mrf.mxu0
    %v3580 = vadd.f32 0.0, %v3579
    %v3581 = vpop.f32.mrf.mxu0
    %v3582 = vadd.f32 0.0, %v3581
    %3583 = vmatmul.bf16.gmra.mxu0 %v3334
    %v3584 = vpop.f32.mrf.mxu0
    %v3585 = vpop.f32.mrf.mxu0
    %3586 = vmatmul.bf16.gmra.mxu0 %v3337
    %v3587 = vpop.f32.mrf.mxu0
    %v3588 = vadd.f32 0.0, %v3587
    %v3589 = vpop.f32.mrf.mxu0
    %v3590 = vadd.f32 0.0, %v3589
    %3591 = vmatmul.bf16.gmra.mxu0 %v3340
    %v3592 = vpop.f32.mrf.mxu0
    %v3593 = vpop.f32.mrf.mxu0
    %3594 = vmatmul.bf16.gmra.mxu0 %v3343
    %v3595 = vpop.f32.mrf.mxu0
    %v3596 = vadd.f32 0.0, %v3595
    %v3597 = vpop.f32.mrf.mxu0
    %v3598 = vadd.f32 0.0, %v3597
    %3599 = vmatmul.bf16.gmra.mxu0 %v3346
    %v3600 = vpop.f32.mrf.mxu0
    %v3601 = vpop.f32.mrf.mxu0
    %3602 = vmatmul.bf16.gmra.mxu0 %v3349
    %v3603 = vpop.f32.mrf.mxu0
    %v3604 = vadd.f32 0.0, %v3603
    %v3605 = vpop.f32.mrf.mxu0
    %v3606 = vadd.f32 0.0, %v3605
    %3607 = vmatmul.bf16.gmra.mxu0 %v3352
    %v3608 = vpop.f32.mrf.mxu0
    %v3609 = vpop.f32.mrf.mxu0
    %3610 = vmatmul.bf16.gmra.mxu0 %v3355
    %v3611 = vpop.f32.mrf.mxu0
    %v3612 = vadd.f32 0.0, %v3611
    %v3613 = vpop.f32.mrf.mxu0
    %v3614 = vadd.f32 0.0, %v3613
    %3615 = vmatmul.bf16.gmra.mxu0 %v3358
    %v3616 = vpop.f32.mrf.mxu0
    %v3617 = vpop.f32.mrf.mxu0
    %3618 = vmatmul.bf16.gmra.mxu0 %v3361
    %v3619 = vpop.f32.mrf.mxu0
    %v3620 = vadd.f32 0.0, %v3619
    %v3621 = vpop.f32.mrf.mxu0
    %v3622 = vadd.f32 0.0, %v3621
    %3623 = vmatmul.bf16.gmra.mxu0 %v3364
    %v3624 = vpop.f32.mrf.mxu0
    %v3625 = vpop.f32.mrf.mxu0
    %3626 = vmatmul.bf16.gmra.mxu0 %v3367
    %v3627 = vpop.f32.mrf.mxu0
    %v3628 = vadd.f32 0.0, %v3627
    %v3629 = vpop.f32.mrf.mxu0
    %v3630 = vadd.f32 0.0, %v3629
    %3631 = vmatmul.bf16.gmra.mxu0 %v3370
    %v3632 = vpop.f32.mrf.mxu0
    %v3633 = vpop.f32.mrf.mxu0
    %3634 = vmatmul.bf16.gmra.mxu0 %v3373
    %v3635 = vpop.f32.mrf.mxu0
    %v3636 = vadd.f32 0.0, %v3635
    %v3637 = vpop.f32.mrf.mxu0
    %v3638 = vadd.f32 0.0, %v3637
    %3639 = vmatmul.bf16.gmra.mxu0 %v3376
    %v3640 = vpop.f32.mrf.mxu0
    %v3641 = vpop.f32.mrf.mxu0
    %3642 = vmatmul.bf16.gmra.mxu0 %v3379
    %v3643 = vpop.f32.mrf.mxu0
    %v3644 = vadd.f32 0.0, %v3643
    %v3645 = vpop.f32.mrf.mxu0
    %v3646 = vadd.f32 0.0, %v3645
    %3647 = vmatmul.bf16.gmra.mxu0 %v3382
    %v3648 = vpop.f32.mrf.mxu0
    %v3649 = vpop.f32.mrf.mxu0
    %3650 = vmatmul.bf16.gmra.mxu0 %v3385
    %v3651 = vpop.f32.mrf.mxu0
    %v3652 = vadd.f32 0.0, %v3651
    %v3653 = vpop.f32.mrf.mxu0
    %v3654 = vadd.f32 0.0, %v3653
    %3655 = vmatmul.bf16.gmra.mxu0 %v3388
    %v3656 = vpop.f32.mrf.mxu0
    %v3657 = vpop.f32.mrf.mxu0
    %3658 = vmatmul.bf16.gmra.mxu0 %v3391
    %v3659 = vpop.f32.mrf.mxu0
    %v3660 = vadd.f32 0.0, %v3659
    %v3661 = vpop.f32.mrf.mxu0
    %v3662 = vadd.f32 0.0, %v3661
    %3663 = vmatmul.bf16.gmra.mxu0 %v3394
    %v3664 = vpop.f32.mrf.mxu0
    %v3665 = vpop.f32.mrf.mxu0
    %3666 = vmatmul.bf16.gmra.mxu0 %v3397
    %v3667 = vpop.f32.mrf.mxu0
    %v3668 = vadd.f32 0.0, %v3667
    %v3669 = vpop.f32.mrf.mxu0
    %v3670 = vadd.f32 0.0, %v3669
    %3671 = vmatmul.bf16.gmra.mxu0 %v3400
    %v3672 = vpop.f32.mrf.mxu0
    %v3673 = vpop.f32.mrf.mxu0
    %3674 = vmatmul.bf16.gmra.mxu0 %v3403
    %v3675 = vpop.f32.mrf.mxu0
    %v3676 = vadd.f32 0.0, %v3675
    %v3677 = vpop.f32.mrf.mxu0
    %v3678 = vadd.f32 0.0, %v3677
    %3679 = vmatmul.bf16.gmra.mxu0 %v3406
    %v3680 = vpop.f32.mrf.mxu0
    %v3681 = vpop.f32.mrf.mxu0
    %3682 = vmatmul.bf16.gmra.mxu0 %v3409
    %v3683 = vpop.f32.mrf.mxu0
    %v3684 = vadd.f32 0.0, %v3683
    %v3685 = vpop.f32.mrf.mxu0
    %v3686 = vadd.f32 0.0, %v3685
    %3687 = vmatmul.bf16.gmra.mxu0 %v3412
    %v3688 = vpop.f32.mrf.mxu0
    %v3689 = vpop.f32.mrf.mxu0
    %3690 = vdwg.mxu0
    %v3691 = vadd.f32 %v1087, %v3424
    %v3692 = vadd.f32 %v1089, %v3426
    %v3693 = vadd.f32 %v1095, %v3432
    %v3694 = vadd.f32 %v1097, %v3434
    %v3695 = vadd.f32 %v1103, %v3440
    %v3696 = vadd.f32 %v1105, %v3442
    %v3697 = vadd.f32 %v1111, %v3448
    %v3698 = vadd.f32 %v1113, %v3450
    %v3699 = vadd.f32 %v1119, %v3456
    %v3700 = vadd.f32 %v1121, %v3458
    %v3701 = vadd.f32 %v1127, %v3464
    %v3702 = vadd.f32 %v1129, %v3466
    %v3703 = vadd.f32 %v1135, %v3472
    %v3704 = vadd.f32 %v1137, %v3474
    %v3705 = vadd.f32 %v1143, %v3480
    %v3706 = vadd.f32 %v1145, %v3482
    %v3707 = vadd.f32 %v1151, %v3488
    %v3708 = vadd.f32 %v1153, %v3490
    %v3709 = vadd.f32 %v1159, %v3496
    %v3710 = vadd.f32 %v1161, %v3498
    %v3711 = vadd.f32 %v1167, %v3504
    %v3712 = vadd.f32 %v1169, %v3506
    %v3713 = vadd.f32 %v1175, %v3512
    %v3714 = vadd.f32 %v1177, %v3514
    %v3715 = vadd.f32 %v1183, %v3520
    %v3716 = vadd.f32 %v1185, %v3522
    %v3717 = vadd.f32 %v1191, %v3528
    %v3718 = vadd.f32 %v1193, %v3530
    %v3719 = vadd.f32 %v1199, %v3536
    %v3720 = vadd.f32 %v1201, %v3538
    %v3721 = vadd.f32 %v1207, %v3544
    %v3722 = vadd.f32 %v1209, %v3546
    %v3723 = vadd.f32 %v1227, %v3564
    %v3724 = vadd.f32 %v1229, %v3566
    %v3725 = vadd.f32 %v1235, %v3572
    %v3726 = vadd.f32 %v1237, %v3574
    %v3727 = vadd.f32 %v1243, %v3580
    %v3728 = vadd.f32 %v1245, %v3582
    %v3729 = vadd.f32 %v1251, %v3588
    %v3730 = vadd.f32 %v1253, %v3590
    %v3731 = vadd.f32 %v1259, %v3596
    %v3732 = vadd.f32 %v1261, %v3598
    %v3733 = vadd.f32 %v1267, %v3604
    %v3734 = vadd.f32 %v1269, %v3606
    %v3735 = vadd.f32 %v1275, %v3612
    %v3736 = vadd.f32 %v1277, %v3614
    %v3737 = vadd.f32 %v1283, %v3620
    %v3738 = vadd.f32 %v1285, %v3622
    %v3739 = vadd.f32 %v1291, %v3628
    %v3740 = vadd.f32 %v1293, %v3630
    %v3741 = vadd.f32 %v1299, %v3636
    %v3742 = vadd.f32 %v1301, %v3638
    %v3743 = vadd.f32 %v1307, %v3644
    %v3744 = vadd.f32 %v1309, %v3646
    %v3745 = vadd.f32 %v1315, %v3652
    %v3746 = vadd.f32 %v1317, %v3654
    %v3747 = vadd.f32 %v1323, %v3660
    %v3748 = vadd.f32 %v1325, %v3662
    %v3749 = vadd.f32 %v1331, %v3668
    %v3750 = vadd.f32 %v1333, %v3670
    %v3751 = vadd.f32 %v1339, %v3676
    %v3752 = vadd.f32 %v1341, %v3678
    %v3753 = vadd.f32 %v1347, %v3684
    %v3754 = vadd.f32 %v1349, %v3686
    %v3755 = vld [vmem:[%s2 + $0xe0] sm:$0xf]
    %v3756 = vld [vmem:[%s2 + $0xe4] sm:$0xf]
    %v3757 = vld [vmem:[%s2 + $0xe8] sm:$0xf]
    %v3758 = vld [vmem:[%s2 + $0xec] sm:$0xf]
    %v3759 = vld [vmem:[%s2 + $0xf0] sm:$0xf]
    %v3760 = vld [vmem:[%s2 + $0xf4] sm:$0xf]
    %v3761 = vld [vmem:[%s2 + $0xf8] sm:$0xf]
    %v3762 = vld [vmem:[%s2 + $0xfc] sm:$0xf]
    %v3771 = vunpack.c.l.b16 %v3755
    %v3772 = vunpack.c.l.b16 %v3756
    %v3773 = vunpack.c.l.b16 %v3757
    %v3774 = vunpack.c.l.b16 %v3758
    %v3775 = vunpack.c.l.b16 %v3759
    %v3776 = vunpack.c.l.b16 %v3760
    %v3777 = vunpack.c.l.b16 %v3761
    %v3778 = vunpack.c.l.b16 %v3762
    %v3779 = vpack.c.b16 %v3772, %v3771
    %v3780 = vpack.c.b16 %v3774, %v3773
    %v3781 = vpack.c.b16 %v3776, %v3775
    %v3782 = vpack.c.b16 %v3778, %v3777
    %3787 = vmatpush.bf16.msra.mxu0 0
    %3788 = vmatpush.bf16.msra.mxu0 0
    %3789 = vmatpush.bf16.msra.mxu0 0
    %3790 = vmatpush.bf16.msra.mxu0 0
    %3791 = vmatpush.bf16.msra.mxu0 %v3782
    %3792 = vmatpush.bf16.msra.mxu0 %v3781
    %3793 = vmatpush.bf16.msra.mxu0 %v3780
    %3794 = vmatpush.bf16.msra.mxu0 %v3779
    %3795 = vmatmul.bf16.gmra.mxu0 %v3211
    %v3796 = vpop.f32.mrf.mxu0
    %v3797 = vadd.f32 0.0, %v3796
    %v3798 = vpop.f32.mrf.mxu0
    %v3799 = vadd.f32 0.0, %v3798
    %3800 = vmatmul.bf16.gmra.mxu0 %v3214
    %v3801 = vpop.f32.mrf.mxu0
    %v3802 = vadd.f32 0.0, %v3801
    %v3803 = vpop.f32.mrf.mxu0
    %3804 = vmatmul.bf16.gmra.mxu0 %v3217
    %v3805 = vpop.f32.mrf.mxu0
    %v3806 = vadd.f32 0.0, %v3805
    %v3807 = vpop.f32.mrf.mxu0
    %v3808 = vadd.f32 0.0, %v3807
    %3809 = vmatmul.bf16.gmra.mxu0 %v3220
    %v3810 = vpop.f32.mrf.mxu0
    %v3811 = vadd.f32 0.0, %v3810
    %v3812 = vpop.f32.mrf.mxu0
    %3813 = vmatmul.bf16.gmra.mxu0 %v3223
    %v3814 = vpop.f32.mrf.mxu0
    %v3815 = vadd.f32 0.0, %v3814
    %v3816 = vpop.f32.mrf.mxu0
    %v3817 = vadd.f32 0.0, %v3816
    %3818 = vmatmul.bf16.gmra.mxu0 %v3226
    %v3819 = vpop.f32.mrf.mxu0
    %v3820 = vadd.f32 0.0, %v3819
    %v3821 = vpop.f32.mrf.mxu0
    %3822 = vmatmul.bf16.gmra.mxu0 %v3229
    %v3823 = vpop.f32.mrf.mxu0
    %v3824 = vadd.f32 0.0, %v3823
    %v3825 = vpop.f32.mrf.mxu0
    %v3826 = vadd.f32 0.0, %v3825
    %3827 = vmatmul.bf16.gmra.mxu0 %v3232
    %v3828 = vpop.f32.mrf.mxu0
    %v3829 = vadd.f32 0.0, %v3828
    %v3830 = vpop.f32.mrf.mxu0
    %3831 = vmatmul.bf16.gmra.mxu0 %v3235
    %v3832 = vpop.f32.mrf.mxu0
    %v3833 = vadd.f32 0.0, %v3832
    %v3834 = vpop.f32.mrf.mxu0
    %v3835 = vadd.f32 0.0, %v3834
    %3836 = vmatmul.bf16.gmra.mxu0 %v3238
    %v3837 = vpop.f32.mrf.mxu0
    %v3838 = vadd.f32 0.0, %v3837
    %v3839 = vpop.f32.mrf.mxu0
    %3840 = vmatmul.bf16.gmra.mxu0 %v3241
    %v3841 = vpop.f32.mrf.mxu0
    %v3842 = vadd.f32 0.0, %v3841
    %v3843 = vpop.f32.mrf.mxu0
    %v3844 = vadd.f32 0.0, %v3843
    %3845 = vmatmul.bf16.gmra.mxu0 %v3244
    %v3846 = vpop.f32.mrf.mxu0
    %v3847 = vadd.f32 0.0, %v3846
    %v3848 = vpop.f32.mrf.mxu0
    %3849 = vmatmul.bf16.gmra.mxu0 %v3247
    %v3850 = vpop.f32.mrf.mxu0
    %v3851 = vadd.f32 0.0, %v3850
    %v3852 = vpop.f32.mrf.mxu0
    %v3853 = vadd.f32 0.0, %v3852
    %3854 = vmatmul.bf16.gmra.mxu0 %v3250
    %v3855 = vpop.f32.mrf.mxu0
    %v3856 = vadd.f32 0.0, %v3855
    %v3857 = vpop.f32.mrf.mxu0
    %3858 = vmatmul.bf16.gmra.mxu0 %v3253
    %v3859 = vpop.f32.mrf.mxu0
    %v3860 = vadd.f32 0.0, %v3859
    %v3861 = vpop.f32.mrf.mxu0
    %v3862 = vadd.f32 0.0, %v3861
    %3863 = vmatmul.bf16.gmra.mxu0 %v3256
    %v3864 = vpop.f32.mrf.mxu0
    %v3865 = vadd.f32 0.0, %v3864
    %v3866 = vpop.f32.mrf.mxu0
    %3867 = vmatmul.bf16.gmra.mxu0 %v3259
    %v3868 = vpop.f32.mrf.mxu0
    %v3869 = vadd.f32 0.0, %v3868
    %v3870 = vpop.f32.mrf.mxu0
    %v3871 = vadd.f32 0.0, %v3870
    %3872 = vmatmul.bf16.gmra.mxu0 %v3262
    %v3873 = vpop.f32.mrf.mxu0
    %v3874 = vadd.f32 0.0, %v3873
    %v3875 = vpop.f32.mrf.mxu0
    %3876 = vmatmul.bf16.gmra.mxu0 %v3265
    %v3877 = vpop.f32.mrf.mxu0
    %v3878 = vadd.f32 0.0, %v3877
    %v3879 = vpop.f32.mrf.mxu0
    %v3880 = vadd.f32 0.0, %v3879
    %3881 = vmatmul.bf16.gmra.mxu0 %v3268
    %v3882 = vpop.f32.mrf.mxu0
    %v3883 = vadd.f32 0.0, %v3882
    %v3884 = vpop.f32.mrf.mxu0
    %3885 = vmatmul.bf16.gmra.mxu0 %v3271
    %v3886 = vpop.f32.mrf.mxu0
    %v3887 = vadd.f32 0.0, %v3886
    %v3888 = vpop.f32.mrf.mxu0
    %v3889 = vadd.f32 0.0, %v3888
    %3890 = vmatmul.bf16.gmra.mxu0 %v3274
    %v3891 = vpop.f32.mrf.mxu0
    %v3892 = vadd.f32 0.0, %v3891
    %v3893 = vpop.f32.mrf.mxu0
    %3894 = vmatmul.bf16.gmra.mxu0 %v3277
    %v3895 = vpop.f32.mrf.mxu0
    %v3896 = vadd.f32 0.0, %v3895
    %v3897 = vpop.f32.mrf.mxu0
    %v3898 = vadd.f32 0.0, %v3897
    %3899 = vmatmul.bf16.gmra.mxu0 %v3280
    %v3900 = vpop.f32.mrf.mxu0
    %v3901 = vadd.f32 0.0, %v3900
    %v3902 = vpop.f32.mrf.mxu0
    %3903 = vmatmul.bf16.gmra.mxu0 %v3283
    %v3904 = vpop.f32.mrf.mxu0
    %v3905 = vadd.f32 0.0, %v3904
    %v3906 = vpop.f32.mrf.mxu0
    %v3907 = vadd.f32 0.0, %v3906
    %3908 = vmatmul.bf16.gmra.mxu0 %v3286
    %v3909 = vpop.f32.mrf.mxu0
    %v3910 = vadd.f32 0.0, %v3909
    %v3911 = vpop.f32.mrf.mxu0
    %3912 = vmatmul.bf16.gmra.mxu0 %v3289
    %v3913 = vpop.f32.mrf.mxu0
    %v3914 = vadd.f32 0.0, %v3913
    %v3915 = vpop.f32.mrf.mxu0
    %v3916 = vadd.f32 0.0, %v3915
    %3917 = vmatmul.bf16.gmra.mxu0 %v3292
    %v3918 = vpop.f32.mrf.mxu0
    %v3919 = vadd.f32 0.0, %v3918
    %v3920 = vpop.f32.mrf.mxu0
    %3921 = vmatmul.bf16.gmra.mxu0 %v3295
    %v3922 = vpop.f32.mrf.mxu0
    %v3923 = vadd.f32 0.0, %v3922
    %v3924 = vpop.f32.mrf.mxu0
    %v3925 = vadd.f32 0.0, %v3924
    %3926 = vmatmul.bf16.gmra.mxu0 %v3298
    %v3927 = vpop.f32.mrf.mxu0
    %v3928 = vadd.f32 0.0, %v3927
    %v3929 = vpop.f32.mrf.mxu0
    %3930 = vmatmul.bf16.gmra.mxu0 %v3301
    %v3931 = vpop.f32.mrf.mxu0
    %v3932 = vadd.f32 0.0, %v3931
    %v3933 = vpop.f32.mrf.mxu0
    %v3934 = vadd.f32 0.0, %v3933
    %3935 = vmatmul.bf16.gmra.mxu0 %v3304
    %v3936 = vpop.f32.mrf.mxu0
    %v3937 = vadd.f32 0.0, %v3936
    %v3938 = vpop.f32.mrf.mxu0
    %3939 = vmatmul.bf16.gmra.mxu0 %v3307
    %v3940 = vpop.f32.mrf.mxu0
    %v3941 = vpop.f32.mrf.mxu0
    %3942 = vmatmul.bf16.gmra.mxu0 %v3310
    %v3943 = vpop.f32.mrf.mxu0
    %v3944 = vpop.f32.mrf.mxu0
    %3945 = vmatmul.bf16.gmra.mxu0 %v3313
    %v3946 = vpop.f32.mrf.mxu0
    %v3947 = vpop.f32.mrf.mxu0
    %3948 = vmatmul.bf16.gmra.mxu0 %v3316
    %v3949 = vpop.f32.mrf.mxu0
    %v3950 = vpop.f32.mrf.mxu0
    %3951 = vmatmul.bf16.gmra.mxu0 %v3319
    %v3952 = vpop.f32.mrf.mxu0
    %v3953 = vadd.f32 0.0, %v3952
    %v3954 = vpop.f32.mrf.mxu0
    %v3955 = vadd.f32 0.0, %v3954
    %3956 = vmatmul.bf16.gmra.mxu0 %v3322
    %v3957 = vpop.f32.mrf.mxu0
    %v3958 = vadd.f32 0.0, %v3957
    %v3959 = vpop.f32.mrf.mxu0
    %3960 = vmatmul.bf16.gmra.mxu0 %v3325
    %v3961 = vpop.f32.mrf.mxu0
    %v3962 = vadd.f32 0.0, %v3961
    %v3963 = vpop.f32.mrf.mxu0
    %v3964 = vadd.f32 0.0, %v3963
    %3965 = vmatmul.bf16.gmra.mxu0 %v3328
    %v3966 = vpop.f32.mrf.mxu0
    %v3967 = vadd.f32 0.0, %v3966
    %v3968 = vpop.f32.mrf.mxu0
    %3969 = vmatmul.bf16.gmra.mxu0 %v3331
    %v3970 = vpop.f32.mrf.mxu0
    %v3971 = vadd.f32 0.0, %v3970
    %v3972 = vpop.f32.mrf.mxu0
    %v3973 = vadd.f32 0.0, %v3972
    %3974 = vmatmul.bf16.gmra.mxu0 %v3334
    %v3975 = vpop.f32.mrf.mxu0
    %v3976 = vadd.f32 0.0, %v3975
    %v3977 = vpop.f32.mrf.mxu0
    %3978 = vmatmul.bf16.gmra.mxu0 %v3337
    %v3979 = vpop.f32.mrf.mxu0
    %v3980 = vadd.f32 0.0, %v3979
    %v3981 = vpop.f32.mrf.mxu0
    %v3982 = vadd.f32 0.0, %v3981
    %3983 = vmatmul.bf16.gmra.mxu0 %v3340
    %v3984 = vpop.f32.mrf.mxu0
    %v3985 = vadd.f32 0.0, %v3984
    %v3986 = vpop.f32.mrf.mxu0
    %3987 = vmatmul.bf16.gmra.mxu0 %v3343
    %v3988 = vpop.f32.mrf.mxu0
    %v3989 = vadd.f32 0.0, %v3988
    %v3990 = vpop.f32.mrf.mxu0
    %v3991 = vadd.f32 0.0, %v3990
    %3992 = vmatmul.bf16.gmra.mxu0 %v3346
    %v3993 = vpop.f32.mrf.mxu0
    %v3994 = vadd.f32 0.0, %v3993
    %v3995 = vpop.f32.mrf.mxu0
    %3996 = vmatmul.bf16.gmra.mxu0 %v3349
    %v3997 = vpop.f32.mrf.mxu0
    %v3998 = vadd.f32 0.0, %v3997
    %v3999 = vpop.f32.mrf.mxu0
    %v4000 = vadd.f32 0.0, %v3999
    %4001 = vmatmul.bf16.gmra.mxu0 %v3352
    %v4002 = vpop.f32.mrf.mxu0
    %v4003 = vadd.f32 0.0, %v4002
    %v4004 = vpop.f32.mrf.mxu0
    %4005 = vmatmul.bf16.gmra.mxu0 %v3355
    %v4006 = vpop.f32.mrf.mxu0
    %v4007 = vadd.f32 0.0, %v4006
    %v4008 = vpop.f32.mrf.mxu0
    %v4009 = vadd.f32 0.0, %v4008
    %4010 = vmatmul.bf16.gmra.mxu0 %v3358
    %v4011 = vpop.f32.mrf.mxu0
    %v4012 = vadd.f32 0.0, %v4011
    %v4013 = vpop.f32.mrf.mxu0
    %4014 = vmatmul.bf16.gmra.mxu0 %v3361
    %v4015 = vpop.f32.mrf.mxu0
    %v4016 = vadd.f32 0.0, %v4015
    %v4017 = vpop.f32.mrf.mxu0
    %v4018 = vadd.f32 0.0, %v4017
    %4019 = vmatmul.bf16.gmra.mxu0 %v3364
    %v4020 = vpop.f32.mrf.mxu0
    %v4021 = vadd.f32 0.0, %v4020
    %v4022 = vpop.f32.mrf.mxu0
    %4023 = vmatmul.bf16.gmra.mxu0 %v3367
    %v4024 = vpop.f32.mrf.mxu0
    %v4025 = vadd.f32 0.0, %v4024
    %v4026 = vpop.f32.mrf.mxu0
    %v4027 = vadd.f32 0.0, %v4026
    %4028 = vmatmul.bf16.gmra.mxu0 %v3370
    %v4029 = vpop.f32.mrf.mxu0
    %v4030 = vadd.f32 0.0, %v4029
    %v4031 = vpop.f32.mrf.mxu0
    %4032 = vmatmul.bf16.gmra.mxu0 %v3373
    %v4033 = vpop.f32.mrf.mxu0
    %v4034 = vadd.f32 0.0, %v4033
    %v4035 = vpop.f32.mrf.mxu0
    %v4036 = vadd.f32 0.0, %v4035
    %4037 = vmatmul.bf16.gmra.mxu0 %v3376
    %v4038 = vpop.f32.mrf.mxu0
    %v4039 = vadd.f32 0.0, %v4038
    %v4040 = vpop.f32.mrf.mxu0
    %4041 = vmatmul.bf16.gmra.mxu0 %v3379
    %v4042 = vpop.f32.mrf.mxu0
    %v4043 = vadd.f32 0.0, %v4042
    %v4044 = vpop.f32.mrf.mxu0
    %v4045 = vadd.f32 0.0, %v4044
    %4046 = vmatmul.bf16.gmra.mxu0 %v3382
    %v4047 = vpop.f32.mrf.mxu0
    %v4048 = vadd.f32 0.0, %v4047
    %v4049 = vpop.f32.mrf.mxu0
    %4050 = vmatmul.bf16.gmra.mxu0 %v3385
    %v4051 = vpop.f32.mrf.mxu0
    %v4052 = vadd.f32 0.0, %v4051
    %v4053 = vpop.f32.mrf.mxu0
    %v4054 = vadd.f32 0.0, %v4053
    %4055 = vmatmul.bf16.gmra.mxu0 %v3388
    %v4056 = vpop.f32.mrf.mxu0
    %v4057 = vadd.f32 0.0, %v4056
    %v4058 = vpop.f32.mrf.mxu0
    %4059 = vmatmul.bf16.gmra.mxu0 %v3391
    %v4060 = vpop.f32.mrf.mxu0
    %v4061 = vadd.f32 0.0, %v4060
    %v4062 = vpop.f32.mrf.mxu0
    %v4063 = vadd.f32 0.0, %v4062
    %4064 = vmatmul.bf16.gmra.mxu0 %v3394
    %v4065 = vpop.f32.mrf.mxu0
    %v4066 = vadd.f32 0.0, %v4065
    %v4067 = vpop.f32.mrf.mxu0
    %4068 = vmatmul.bf16.gmra.mxu0 %v3397
    %v4069 = vpop.f32.mrf.mxu0
    %v4070 = vadd.f32 0.0, %v4069
    %v4071 = vpop.f32.mrf.mxu0
    %v4072 = vadd.f32 0.0, %v4071
    %4073 = vmatmul.bf16.gmra.mxu0 %v3400
    %v4074 = vpop.f32.mrf.mxu0
    %v4075 = vadd.f32 0.0, %v4074
    %v4076 = vpop.f32.mrf.mxu0
    %4077 = vmatmul.bf16.gmra.mxu0 %v3403
    %v4078 = vpop.f32.mrf.mxu0
    %v4079 = vadd.f32 0.0, %v4078
    %v4080 = vpop.f32.mrf.mxu0
    %v4081 = vadd.f32 0.0, %v4080
    %4082 = vmatmul.bf16.gmra.mxu0 %v3406
    %v4083 = vpop.f32.mrf.mxu0
    %v4084 = vadd.f32 0.0, %v4083
    %v4085 = vpop.f32.mrf.mxu0
    %4086 = vmatmul.bf16.gmra.mxu0 %v3409
    %v4087 = vpop.f32.mrf.mxu0
    %v4088 = vadd.f32 0.0, %v4087
    %v4089 = vpop.f32.mrf.mxu0
    %v4090 = vadd.f32 0.0, %v4089
    %4091 = vmatmul.bf16.gmra.mxu0 %v3412
    %v4092 = vpop.f32.mrf.mxu0
    %v4093 = vadd.f32 0.0, %v4092
    %v4094 = vpop.f32.mrf.mxu0
    %4095 = vdwg.mxu0
    %v4096 = vadd.f32 %v1729, %v3797
    %v4097 = vadd.f32 %v1731, %v3799
    %v4098 = vadd.f32 %v1734, %v3802
    %v4099 = vadd.f32 %v1738, %v3806
    %v4100 = vadd.f32 %v1740, %v3808
    %v4101 = vadd.f32 %v1743, %v3811
    %v4102 = vadd.f32 %v1747, %v3815
    %v4103 = vadd.f32 %v1749, %v3817
    %v4104 = vadd.f32 %v1752, %v3820
    %v4105 = vadd.f32 %v1756, %v3824
    %v4106 = vadd.f32 %v1758, %v3826
    %v4107 = vadd.f32 %v1761, %v3829
    %v4108 = vadd.f32 %v1765, %v3833
    %v4109 = vadd.f32 %v1767, %v3835
    %v4110 = vadd.f32 %v1770, %v3838
    %v4111 = vadd.f32 %v1774, %v3842
    %v4112 = vadd.f32 %v1776, %v3844
    %v4113 = vadd.f32 %v1779, %v3847
    %v4114 = vadd.f32 %v1783, %v3851
    %v4115 = vadd.f32 %v1785, %v3853
    %v4116 = vadd.f32 %v1788, %v3856
    %v4117 = vadd.f32 %v1792, %v3860
    %v4118 = vadd.f32 %v1794, %v3862
    %v4119 = vadd.f32 %v1797, %v3865
    %v4120 = vadd.f32 %v1801, %v3869
    %v4121 = vadd.f32 %v1803, %v3871
    %v4122 = vadd.f32 %v1806, %v3874
    %v4123 = vadd.f32 %v1810, %v3878
    %v4124 = vadd.f32 %v1812, %v3880
    %v4125 = vadd.f32 %v1815, %v3883
    %v4126 = vadd.f32 %v1819, %v3887
    %v4127 = vadd.f32 %v1821, %v3889
    %v4128 = vadd.f32 %v1824, %v3892
    %v4129 = vadd.f32 %v1828, %v3896
    %v4130 = vadd.f32 %v1830, %v3898
    %v4131 = vadd.f32 %v1833, %v3901
    %v4132 = vadd.f32 %v1837, %v3905
    %v4133 = vadd.f32 %v1839, %v3907
    %v4134 = vadd.f32 %v1842, %v3910
    %v4135 = vadd.f32 %v1846, %v3914
    %v4136 = vadd.f32 %v1848, %v3916
    %v4137 = vadd.f32 %v1851, %v3919
    %v4138 = vadd.f32 %v1855, %v3923
    %v4139 = vadd.f32 %v1857, %v3925
    %v4140 = vadd.f32 %v1860, %v3928
    %v4141 = vadd.f32 %v1864, %v3932
    %v4142 = vadd.f32 %v1866, %v3934
    %v4143 = vadd.f32 %v1869, %v3937
    %v4144 = vadd.f32 %v1885, %v3953
    %v4145 = vadd.f32 %v1887, %v3955
    %v4146 = vadd.f32 %v1890, %v3958
    %v4147 = vadd.f32 %v1894, %v3962
    %v4148 = vadd.f32 %v1896, %v3964
    %v4149 = vadd.f32 %v1899, %v3967
    %v4150 = vadd.f32 %v1903, %v3971
    %v4151 = vadd.f32 %v1905, %v3973
    %v4152 = vadd.f32 %v1908, %v3976
    %v4153 = vadd.f32 %v1912, %v3980
    %v4154 = vadd.f32 %v1914, %v3982
    %v4155 = vadd.f32 %v1917, %v3985
    %v4156 = vadd.f32 %v1921, %v3989
    %v4157 = vadd.f32 %v1923, %v3991
    %v4158 = vadd.f32 %v1926, %v3994
    %v4159 = vadd.f32 %v1930, %v3998
    %v4160 = vadd.f32 %v1932, %v4000
    %v4161 = vadd.f32 %v1935, %v4003
    %v4162 = vadd.f32 %v1939, %v4007
    %v4163 = vadd.f32 %v1941, %v4009
    %v4164 = vadd.f32 %v1944, %v4012
    %v4165 = vadd.f32 %v1948, %v4016
    %v4166 = vadd.f32 %v1950, %v4018
    %v4167 = vadd.f32 %v1953, %v4021
    %v4168 = vadd.f32 %v1957, %v4025
    %v4169 = vadd.f32 %v1959, %v4027
    %v4170 = vadd.f32 %v1962, %v4030
    %v4171 = vadd.f32 %v1966, %v4034
    %v4172 = vadd.f32 %v1968, %v4036
    %v4173 = vadd.f32 %v1971, %v4039
    %v4174 = vadd.f32 %v1975, %v4043
    %v4175 = vadd.f32 %v1977, %v4045
    %v4176 = vadd.f32 %v1980, %v4048
    %v4177 = vadd.f32 %v1984, %v4052
    %v4178 = vadd.f32 %v1986, %v4054
    %v4179 = vadd.f32 %v1989, %v4057
    %v4180 = vadd.f32 %v1993, %v4061
    %v4181 = vadd.f32 %v1995, %v4063
    %v4182 = vadd.f32 %v1998, %v4066
    %v4183 = vadd.f32 %v2002, %v4070
    %v4184 = vadd.f32 %v2004, %v4072
    %v4185 = vadd.f32 %v2007, %v4075
    %v4186 = vadd.f32 %v2011, %v4079
    %v4187 = vadd.f32 %v2013, %v4081
    %v4188 = vadd.f32 %v2016, %v4084
    %v4189 = vadd.f32 %v2020, %v4088
    %v4190 = vadd.f32 %v2022, %v4090
    %v4191 = vadd.f32 %v2025, %v4093
    %v4192 = vld [vmem:[%s2 + $0x100] sm:$0xf]
    %v4193 = vld [vmem:[%s2 + $0x104] sm:$0xf]
    %v4194 = vld [vmem:[%s2 + $0x108] sm:$0xf]
    %v4195 = vld [vmem:[%s2 + $0x10c] sm:$0xf]
    %v4196 = vld [vmem:[%s2 + $0x110] sm:$0xf]
    %v4197 = vld [vmem:[%s2 + $0x114] sm:$0xf]
    %v4198 = vld [vmem:[%s2 + $0x118] sm:$0xf]
    %v4199 = vld [vmem:[%s2 + $0x11c] sm:$0xf]
    %v4208 = vunpack.c.l.b16 %v4192
    %v4209 = vunpack.c.l.b16 %v4193
    %v4210 = vunpack.c.l.b16 %v4194
    %v4211 = vunpack.c.l.b16 %v4195
    %v4212 = vunpack.c.l.b16 %v4196
    %v4213 = vunpack.c.l.b16 %v4197
    %v4214 = vunpack.c.l.b16 %v4198
    %v4215 = vunpack.c.l.b16 %v4199
    %v4216 = vpack.c.b16 %v4209, %v4208
    %v4217 = vpack.c.b16 %v4211, %v4210
    %v4218 = vpack.c.b16 %v4213, %v4212
    %v4219 = vpack.c.b16 %v4215, %v4214
    %4224 = vmatpush.bf16.msra.mxu0 0
    %4225 = vmatpush.bf16.msra.mxu0 0
    %4226 = vmatpush.bf16.msra.mxu0 0
    %4227 = vmatpush.bf16.msra.mxu0 0
    %4228 = vmatpush.bf16.msra.mxu0 %v4219
    %4229 = vmatpush.bf16.msra.mxu0 %v4218
    %4230 = vmatpush.bf16.msra.mxu0 %v4217
    %4231 = vmatpush.bf16.msra.mxu0 %v4216
    %4232 = vmatmul.bf16.gmra.mxu0 %v3211
    %v4233 = vpop.f32.mrf.mxu0
    %v4234 = vadd.f32 0.0, %v4233
    %v4235 = vpop.f32.mrf.mxu0
    %v4236 = vadd.f32 0.0, %v4235
    %4237 = vmatmul.bf16.gmra.mxu0 %v3214
    %v4238 = vpop.f32.mrf.mxu0
    %v4239 = vadd.f32 0.0, %v4238
    %v4240 = vpop.f32.mrf.mxu0
    %4241 = vmatmul.bf16.gmra.mxu0 %v3217
    %v4242 = vpop.f32.mrf.mxu0
    %v4243 = vadd.f32 0.0, %v4242
    %v4244 = vpop.f32.mrf.mxu0
    %v4245 = vadd.f32 0.0, %v4244
    %4246 = vmatmul.bf16.gmra.mxu0 %v3220
    %v4247 = vpop.f32.mrf.mxu0
    %v4248 = vadd.f32 0.0, %v4247
    %v4249 = vpop.f32.mrf.mxu0
    %4250 = vmatmul.bf16.gmra.mxu0 %v3223
    %v4251 = vpop.f32.mrf.mxu0
    %v4252 = vadd.f32 0.0, %v4251
    %v4253 = vpop.f32.mrf.mxu0
    %v4254 = vadd.f32 0.0, %v4253
    %4255 = vmatmul.bf16.gmra.mxu0 %v3226
    %v4256 = vpop.f32.mrf.mxu0
    %v4257 = vadd.f32 0.0, %v4256
    %v4258 = vpop.f32.mrf.mxu0
    %4259 = vmatmul.bf16.gmra.mxu0 %v3229
    %v4260 = vpop.f32.mrf.mxu0
    %v4261 = vadd.f32 0.0, %v4260
    %v4262 = vpop.f32.mrf.mxu0
    %v4263 = vadd.f32 0.0, %v4262
    %4264 = vmatmul.bf16.gmra.mxu0 %v3232
    %v4265 = vpop.f32.mrf.mxu0
    %v4266 = vadd.f32 0.0, %v4265
    %v4267 = vpop.f32.mrf.mxu0
    %4268 = vmatmul.bf16.gmra.mxu0 %v3235
    %v4269 = vpop.f32.mrf.mxu0
    %v4270 = vadd.f32 0.0, %v4269
    %v4271 = vpop.f32.mrf.mxu0
    %v4272 = vadd.f32 0.0, %v4271
    %4273 = vmatmul.bf16.gmra.mxu0 %v3238
    %v4274 = vpop.f32.mrf.mxu0
    %v4275 = vadd.f32 0.0, %v4274
    %v4276 = vpop.f32.mrf.mxu0
    %4277 = vmatmul.bf16.gmra.mxu0 %v3241
    %v4278 = vpop.f32.mrf.mxu0
    %v4279 = vadd.f32 0.0, %v4278
    %v4280 = vpop.f32.mrf.mxu0
    %v4281 = vadd.f32 0.0, %v4280
    %4282 = vmatmul.bf16.gmra.mxu0 %v3244
    %v4283 = vpop.f32.mrf.mxu0
    %v4284 = vadd.f32 0.0, %v4283
    %v4285 = vpop.f32.mrf.mxu0
    %4286 = vmatmul.bf16.gmra.mxu0 %v3247
    %v4287 = vpop.f32.mrf.mxu0
    %v4288 = vadd.f32 0.0, %v4287
    %v4289 = vpop.f32.mrf.mxu0
    %v4290 = vadd.f32 0.0, %v4289
    %4291 = vmatmul.bf16.gmra.mxu0 %v3250
    %v4292 = vpop.f32.mrf.mxu0
    %v4293 = vadd.f32 0.0, %v4292
    %v4294 = vpop.f32.mrf.mxu0
    %4295 = vmatmul.bf16.gmra.mxu0 %v3253
    %v4296 = vpop.f32.mrf.mxu0
    %v4297 = vadd.f32 0.0, %v4296
    %v4298 = vpop.f32.mrf.mxu0
    %v4299 = vadd.f32 0.0, %v4298
    %4300 = vmatmul.bf16.gmra.mxu0 %v3256
    %v4301 = vpop.f32.mrf.mxu0
    %v4302 = vadd.f32 0.0, %v4301
    %v4303 = vpop.f32.mrf.mxu0
    %4304 = vmatmul.bf16.gmra.mxu0 %v3259
    %v4305 = vpop.f32.mrf.mxu0
    %v4306 = vadd.f32 0.0, %v4305
    %v4307 = vpop.f32.mrf.mxu0
    %v4308 = vadd.f32 0.0, %v4307
    %4309 = vmatmul.bf16.gmra.mxu0 %v3262
    %v4310 = vpop.f32.mrf.mxu0
    %v4311 = vadd.f32 0.0, %v4310
    %v4312 = vpop.f32.mrf.mxu0
    %4313 = vmatmul.bf16.gmra.mxu0 %v3265
    %v4314 = vpop.f32.mrf.mxu0
    %v4315 = vadd.f32 0.0, %v4314
    %v4316 = vpop.f32.mrf.mxu0
    %v4317 = vadd.f32 0.0, %v4316
    %4318 = vmatmul.bf16.gmra.mxu0 %v3268
    %v4319 = vpop.f32.mrf.mxu0
    %v4320 = vadd.f32 0.0, %v4319
    %v4321 = vpop.f32.mrf.mxu0
    %4322 = vmatmul.bf16.gmra.mxu0 %v3271
    %v4323 = vpop.f32.mrf.mxu0
    %v4324 = vadd.f32 0.0, %v4323
    %v4325 = vpop.f32.mrf.mxu0
    %v4326 = vadd.f32 0.0, %v4325
    %4327 = vmatmul.bf16.gmra.mxu0 %v3274
    %v4328 = vpop.f32.mrf.mxu0
    %v4329 = vadd.f32 0.0, %v4328
    %v4330 = vpop.f32.mrf.mxu0
    %4331 = vmatmul.bf16.gmra.mxu0 %v3277
    %v4332 = vpop.f32.mrf.mxu0
    %v4333 = vadd.f32 0.0, %v4332
    %v4334 = vpop.f32.mrf.mxu0
    %v4335 = vadd.f32 0.0, %v4334
    %4336 = vmatmul.bf16.gmra.mxu0 %v3280
    %v4337 = vpop.f32.mrf.mxu0
    %v4338 = vadd.f32 0.0, %v4337
    %v4339 = vpop.f32.mrf.mxu0
    %4340 = vmatmul.bf16.gmra.mxu0 %v3283
    %v4341 = vpop.f32.mrf.mxu0
    %v4342 = vadd.f32 0.0, %v4341
    %v4343 = vpop.f32.mrf.mxu0
    %v4344 = vadd.f32 0.0, %v4343
    %4345 = vmatmul.bf16.gmra.mxu0 %v3286
    %v4346 = vpop.f32.mrf.mxu0
    %v4347 = vadd.f32 0.0, %v4346
    %v4348 = vpop.f32.mrf.mxu0
    %4349 = vmatmul.bf16.gmra.mxu0 %v3289
    %v4350 = vpop.f32.mrf.mxu0
    %v4351 = vadd.f32 0.0, %v4350
    %v4352 = vpop.f32.mrf.mxu0
    %v4353 = vadd.f32 0.0, %v4352
    %4354 = vmatmul.bf16.gmra.mxu0 %v3292
    %v4355 = vpop.f32.mrf.mxu0
    %v4356 = vadd.f32 0.0, %v4355
    %v4357 = vpop.f32.mrf.mxu0
    %4358 = vmatmul.bf16.gmra.mxu0 %v3295
    %v4359 = vpop.f32.mrf.mxu0
    %v4360 = vadd.f32 0.0, %v4359
    %v4361 = vpop.f32.mrf.mxu0
    %v4362 = vadd.f32 0.0, %v4361
    %4363 = vmatmul.bf16.gmra.mxu0 %v3298
    %v4364 = vpop.f32.mrf.mxu0
    %v4365 = vadd.f32 0.0, %v4364
    %v4366 = vpop.f32.mrf.mxu0
    %4367 = vmatmul.bf16.gmra.mxu0 %v3301
    %v4368 = vpop.f32.mrf.mxu0
    %v4369 = vadd.f32 0.0, %v4368
    %v4370 = vpop.f32.mrf.mxu0
    %v4371 = vadd.f32 0.0, %v4370
    %4372 = vmatmul.bf16.gmra.mxu0 %v3304
    %v4373 = vpop.f32.mrf.mxu0
    %v4374 = vadd.f32 0.0, %v4373
    %v4375 = vpop.f32.mrf.mxu0
    %4376 = vmatmul.bf16.gmra.mxu0 %v3307
    %v4377 = vpop.f32.mrf.mxu0
    %v4378 = vpop.f32.mrf.mxu0
    %4379 = vmatmul.bf16.gmra.mxu0 %v3310
    %v4380 = vpop.f32.mrf.mxu0
    %v4381 = vpop.f32.mrf.mxu0
    %4382 = vmatmul.bf16.gmra.mxu0 %v3313
    %v4383 = vpop.f32.mrf.mxu0
    %v4384 = vpop.f32.mrf.mxu0
    %4385 = vmatmul.bf16.gmra.mxu0 %v3316
    %v4386 = vpop.f32.mrf.mxu0
    %v4387 = vpop.f32.mrf.mxu0
    %4388 = vmatmul.bf16.gmra.mxu0 %v3319
    %v4389 = vpop.f32.mrf.mxu0
    %v4390 = vadd.f32 0.0, %v4389
    %v4391 = vpop.f32.mrf.mxu0
    %v4392 = vadd.f32 0.0, %v4391
    %4393 = vmatmul.bf16.gmra.mxu0 %v3322
    %v4394 = vpop.f32.mrf.mxu0
    %v4395 = vadd.f32 0.0, %v4394
    %v4396 = vpop.f32.mrf.mxu0
    %4397 = vmatmul.bf16.gmra.mxu0 %v3325
    %v4398 = vpop.f32.mrf.mxu0
    %v4399 = vadd.f32 0.0, %v4398
    %v4400 = vpop.f32.mrf.mxu0
    %v4401 = vadd.f32 0.0, %v4400
    %4402 = vmatmul.bf16.gmra.mxu0 %v3328
    %v4403 = vpop.f32.mrf.mxu0
    %v4404 = vadd.f32 0.0, %v4403
    %v4405 = vpop.f32.mrf.mxu0
    %4406 = vmatmul.bf16.gmra.mxu0 %v3331
    %v4407 = vpop.f32.mrf.mxu0
    %v4408 = vadd.f32 0.0, %v4407
    %v4409 = vpop.f32.mrf.mxu0
    %v4410 = vadd.f32 0.0, %v4409
    %4411 = vmatmul.bf16.gmra.mxu0 %v3334
    %v4412 = vpop.f32.mrf.mxu0
    %v4413 = vadd.f32 0.0, %v4412
    %v4414 = vpop.f32.mrf.mxu0
    %4415 = vmatmul.bf16.gmra.mxu0 %v3337
    %v4416 = vpop.f32.mrf.mxu0
    %v4417 = vadd.f32 0.0, %v4416
    %v4418 = vpop.f32.mrf.mxu0
    %v4419 = vadd.f32 0.0, %v4418
    %4420 = vmatmul.bf16.gmra.mxu0 %v3340
    %v4421 = vpop.f32.mrf.mxu0
    %v4422 = vadd.f32 0.0, %v4421
    %v4423 = vpop.f32.mrf.mxu0
    %4424 = vmatmul.bf16.gmra.mxu0 %v3343
    %v4425 = vpop.f32.mrf.mxu0
    %v4426 = vadd.f32 0.0, %v4425
    %v4427 = vpop.f32.mrf.mxu0
    %v4428 = vadd.f32 0.0, %v4427
    %4429 = vmatmul.bf16.gmra.mxu0 %v3346
    %v4430 = vpop.f32.mrf.mxu0
    %v4431 = vadd.f32 0.0, %v4430
    %v4432 = vpop.f32.mrf.mxu0
    %4433 = vmatmul.bf16.gmra.mxu0 %v3349
    %v4434 = vpop.f32.mrf.mxu0
    %v4435 = vadd.f32 0.0, %v4434
    %v4436 = vpop.f32.mrf.mxu0
    %v4437 = vadd.f32 0.0, %v4436
    %4438 = vmatmul.bf16.gmra.mxu0 %v3352
    %v4439 = vpop.f32.mrf.mxu0
    %v4440 = vadd.f32 0.0, %v4439
    %v4441 = vpop.f32.mrf.mxu0
    %4442 = vmatmul.bf16.gmra.mxu0 %v3355
    %v4443 = vpop.f32.mrf.mxu0
    %v4444 = vadd.f32 0.0, %v4443
    %v4445 = vpop.f32.mrf.mxu0
    %v4446 = vadd.f32 0.0, %v4445
    %4447 = vmatmul.bf16.gmra.mxu0 %v3358
    %v4448 = vpop.f32.mrf.mxu0
    %v4449 = vadd.f32 0.0, %v4448
    %v4450 = vpop.f32.mrf.mxu0
    %4451 = vmatmul.bf16.gmra.mxu0 %v3361
    %v4452 = vpop.f32.mrf.mxu0
    %v4453 = vadd.f32 0.0, %v4452
    %v4454 = vpop.f32.mrf.mxu0
    %v4455 = vadd.f32 0.0, %v4454
    %4456 = vmatmul.bf16.gmra.mxu0 %v3364
    %v4457 = vpop.f32.mrf.mxu0
    %v4458 = vadd.f32 0.0, %v4457
    %v4459 = vpop.f32.mrf.mxu0
    %4460 = vmatmul.bf16.gmra.mxu0 %v3367
    %v4461 = vpop.f32.mrf.mxu0
    %v4462 = vadd.f32 0.0, %v4461
    %v4463 = vpop.f32.mrf.mxu0
    %v4464 = vadd.f32 0.0, %v4463
    %4465 = vmatmul.bf16.gmra.mxu0 %v3370
    %v4466 = vpop.f32.mrf.mxu0
    %v4467 = vadd.f32 0.0, %v4466
    %v4468 = vpop.f32.mrf.mxu0
    %4469 = vmatmul.bf16.gmra.mxu0 %v3373
    %v4470 = vpop.f32.mrf.mxu0
    %v4471 = vadd.f32 0.0, %v4470
    %v4472 = vpop.f32.mrf.mxu0
    %v4473 = vadd.f32 0.0, %v4472
    %4474 = vmatmul.bf16.gmra.mxu0 %v3376
    %v4475 = vpop.f32.mrf.mxu0
    %v4476 = vadd.f32 0.0, %v4475
    %v4477 = vpop.f32.mrf.mxu0
    %4478 = vmatmul.bf16.gmra.mxu0 %v3379
    %v4479 = vpop.f32.mrf.mxu0
    %v4480 = vadd.f32 0.0, %v4479
    %v4481 = vpop.f32.mrf.mxu0
    %v4482 = vadd.f32 0.0, %v4481
    %4483 = vmatmul.bf16.gmra.mxu0 %v3382
    %v4484 = vpop.f32.mrf.mxu0
    %v4485 = vadd.f32 0.0, %v4484
    %v4486 = vpop.f32.mrf.mxu0
    %4487 = vmatmul.bf16.gmra.mxu0 %v3385
    %v4488 = vpop.f32.mrf.mxu0
    %v4489 = vadd.f32 0.0, %v4488
    %v4490 = vpop.f32.mrf.mxu0
    %v4491 = vadd.f32 0.0, %v4490
    %4492 = vmatmul.bf16.gmra.mxu0 %v3388
    %v4493 = vpop.f32.mrf.mxu0
    %v4494 = vadd.f32 0.0, %v4493
    %v4495 = vpop.f32.mrf.mxu0
    %4496 = vmatmul.bf16.gmra.mxu0 %v3391
    %v4497 = vpop.f32.mrf.mxu0
    %v4498 = vadd.f32 0.0, %v4497
    %v4499 = vpop.f32.mrf.mxu0
    %v4500 = vadd.f32 0.0, %v4499
    %4501 = vmatmul.bf16.gmra.mxu0 %v3394
    %v4502 = vpop.f32.mrf.mxu0
    %v4503 = vadd.f32 0.0, %v4502
    %v4504 = vpop.f32.mrf.mxu0
    %4505 = vmatmul.bf16.gmra.mxu0 %v3397
    %v4506 = vpop.f32.mrf.mxu0
    %v4507 = vadd.f32 0.0, %v4506
    %v4508 = vpop.f32.mrf.mxu0
    %v4509 = vadd.f32 0.0, %v4508
    %4510 = vmatmul.bf16.gmra.mxu0 %v3400
    %v4511 = vpop.f32.mrf.mxu0
    %v4512 = vadd.f32 0.0, %v4511
    %v4513 = vpop.f32.mrf.mxu0
    %4514 = vmatmul.bf16.gmra.mxu0 %v3403
    %v4515 = vpop.f32.mrf.mxu0
    %v4516 = vadd.f32 0.0, %v4515
    %v4517 = vpop.f32.mrf.mxu0
    %v4518 = vadd.f32 0.0, %v4517
    %4519 = vmatmul.bf16.gmra.mxu0 %v3406
    %v4520 = vpop.f32.mrf.mxu0
    %v4521 = vadd.f32 0.0, %v4520
    %v4522 = vpop.f32.mrf.mxu0
    %4523 = vmatmul.bf16.gmra.mxu0 %v3409
    %v4524 = vpop.f32.mrf.mxu0
    %v4525 = vadd.f32 0.0, %v4524
    %v4526 = vpop.f32.mrf.mxu0
    %v4527 = vadd.f32 0.0, %v4526
    %4528 = vmatmul.bf16.gmra.mxu0 %v3412
    %v4529 = vpop.f32.mrf.mxu0
    %v4530 = vadd.f32 0.0, %v4529
    %v4531 = vpop.f32.mrf.mxu0
    %4532 = vdwg.mxu0
    %v4533 = vadd.f32 %v2403, %v4234
    %v4534 = vadd.f32 %v2405, %v4236
    %v4535 = vadd.f32 %v2408, %v4239
    %v4536 = vadd.f32 %v2412, %v4243
    %v4537 = vadd.f32 %v2414, %v4245
    %v4538 = vadd.f32 %v2417, %v4248
    %v4539 = vadd.f32 %v2421, %v4252
    %v4540 = vadd.f32 %v2423, %v4254
    %v4541 = vadd.f32 %v2426, %v4257
    %v4542 = vadd.f32 %v2430, %v4261
    %v4543 = vadd.f32 %v2432, %v4263
    %v4544 = vadd.f32 %v2435, %v4266
    %v4545 = vadd.f32 %v2439, %v4270
    %v4546 = vadd.f32 %v2441, %v4272
    %v4547 = vadd.f32 %v2444, %v4275
    %v4548 = vadd.f32 %v2448, %v4279
    %v4549 = vadd.f32 %v2450, %v4281
    %v4550 = vadd.f32 %v2453, %v4284
    %v4551 = vadd.f32 %v2457, %v4288
    %v4552 = vadd.f32 %v2459, %v4290
    %v4553 = vadd.f32 %v2462, %v4293
    %v4554 = vadd.f32 %v2466, %v4297
    %v4555 = vadd.f32 %v2468, %v4299
    %v4556 = vadd.f32 %v2471, %v4302
    %v4557 = vadd.f32 %v2475, %v4306
    %v4558 = vadd.f32 %v2477, %v4308
    %v4559 = vadd.f32 %v2480, %v4311
    %v4560 = vadd.f32 %v2484, %v4315
    %v4561 = vadd.f32 %v2486, %v4317
    %v4562 = vadd.f32 %v2489, %v4320
    %v4563 = vadd.f32 %v2493, %v4324
    %v4564 = vadd.f32 %v2495, %v4326
    %v4565 = vadd.f32 %v2498, %v4329
    %v4566 = vadd.f32 %v2502, %v4333
    %v4567 = vadd.f32 %v2504, %v4335
    %v4568 = vadd.f32 %v2507, %v4338
    %v4569 = vadd.f32 %v2511, %v4342
    %v4570 = vadd.f32 %v2513, %v4344
    %v4571 = vadd.f32 %v2516, %v4347
    %v4572 = vadd.f32 %v2520, %v4351
    %v4573 = vadd.f32 %v2522, %v4353
    %v4574 = vadd.f32 %v2525, %v4356
    %v4575 = vadd.f32 %v2529, %v4360
    %v4576 = vadd.f32 %v2531, %v4362
    %v4577 = vadd.f32 %v2534, %v4365
    %v4578 = vadd.f32 %v2538, %v4369
    %v4579 = vadd.f32 %v2540, %v4371
    %v4580 = vadd.f32 %v2543, %v4374
    %v4581 = vadd.f32 %v2559, %v4390
    %v4582 = vadd.f32 %v2561, %v4392
    %v4583 = vadd.f32 %v2564, %v4395
    %v4584 = vadd.f32 %v2568, %v4399
    %v4585 = vadd.f32 %v2570, %v4401
    %v4586 = vadd.f32 %v2573, %v4404
    %v4587 = vadd.f32 %v2577, %v4408
    %v4588 = vadd.f32 %v2579, %v4410
    %v4589 = vadd.f32 %v2582, %v4413
    %v4590 = vadd.f32 %v2586, %v4417
    %v4591 = vadd.f32 %v2588, %v4419
    %v4592 = vadd.f32 %v2591, %v4422
    %v4593 = vadd.f32 %v2595, %v4426
    %v4594 = vadd.f32 %v2597, %v4428
    %v4595 = vadd.f32 %v2600, %v4431
    %v4596 = vadd.f32 %v2604, %v4435
    %v4597 = vadd.f32 %v2606, %v4437
    %v4598 = vadd.f32 %v2609, %v4440
    %v4599 = vadd.f32 %v2613, %v4444
    %v4600 = vadd.f32 %v2615, %v4446
    %v4601 = vadd.f32 %v2618, %v4449
    %v4602 = vadd.f32 %v2622, %v4453
    %v4603 = vadd.f32 %v2624, %v4455
    %v4604 = vadd.f32 %v2627, %v4458
    %v4605 = vadd.f32 %v2631, %v4462
    %v4606 = vadd.f32 %v2633, %v4464
    %v4607 = vadd.f32 %v2636, %v4467
    %v4608 = vadd.f32 %v2640, %v4471
    %v4609 = vadd.f32 %v2642, %v4473
    %v4610 = vadd.f32 %v2645, %v4476
    %v4611 = vadd.f32 %v2649, %v4480
    %v4612 = vadd.f32 %v2651, %v4482
    %v4613 = vadd.f32 %v2654, %v4485
    %v4614 = vadd.f32 %v2658, %v4489
    %v4615 = vadd.f32 %v2660, %v4491
    %v4616 = vadd.f32 %v2663, %v4494
    %v4617 = vadd.f32 %v2667, %v4498
    %v4618 = vadd.f32 %v2669, %v4500
    %v4619 = vadd.f32 %v2672, %v4503
    %v4620 = vadd.f32 %v2676, %v4507
    %v4621 = vadd.f32 %v2678, %v4509
    %v4622 = vadd.f32 %v2681, %v4512
    %v4623 = vadd.f32 %v2685, %v4516
    %v4624 = vadd.f32 %v2687, %v4518
    %v4625 = vadd.f32 %v2690, %v4521
    %v4626 = vadd.f32 %v2694, %v4525
    %v4627 = vadd.f32 %v2696, %v4527
    %v4628 = vadd.f32 %v2699, %v4530
    %vm4725 = vcmask 1046528
    %v4726 = vrot.slane %v4096, 1
    %v4727 = vrot.slane %v4097, 1
    %v4728 = vsel %vm4725, %v4726, %v4727
    %v4729 = vrot.slane %v4098, 1
    %v4730 = vsel %vm4725, %v4727, %v4729
    %v4731 = vrot.slane %v4099, 1
    %v4732 = vrot.slane %v4100, 1
    %v4733 = vsel %vm4725, %v4731, %v4732
    %v4734 = vrot.slane %v4101, 1
    %v4735 = vsel %vm4725, %v4732, %v4734
    %v4736 = vrot.slane %v4102, 1
    %v4737 = vrot.slane %v4103, 1
    %v4738 = vsel %vm4725, %v4736, %v4737
    %v4739 = vrot.slane %v4104, 1
    %v4740 = vsel %vm4725, %v4737, %v4739
    %v4741 = vrot.slane %v4105, 1
    %v4742 = vrot.slane %v4106, 1
    %v4743 = vsel %vm4725, %v4741, %v4742
    %v4744 = vrot.slane %v4107, 1
    %v4745 = vsel %vm4725, %v4742, %v4744
    %v4746 = vrot.slane %v4108, 1
    %v4747 = vrot.slane %v4109, 1
    %v4748 = vsel %vm4725, %v4746, %v4747
    %v4749 = vrot.slane %v4110, 1
    %v4750 = vsel %vm4725, %v4747, %v4749
    %v4751 = vrot.slane %v4111, 1
    %v4752 = vrot.slane %v4112, 1
    %v4753 = vsel %vm4725, %v4751, %v4752
    %v4754 = vrot.slane %v4113, 1
    %v4755 = vsel %vm4725, %v4752, %v4754
    %v4756 = vrot.slane %v4114, 1
    %v4757 = vrot.slane %v4115, 1
    %v4758 = vsel %vm4725, %v4756, %v4757
    %v4759 = vrot.slane %v4116, 1
    %v4760 = vsel %vm4725, %v4757, %v4759
    %v4761 = vrot.slane %v4117, 1
    %v4762 = vrot.slane %v4118, 1
    %v4763 = vsel %vm4725, %v4761, %v4762
    %v4764 = vrot.slane %v4119, 1
    %v4765 = vsel %vm4725, %v4762, %v4764
    %v4766 = vrot.slane %v4120, 1
    %v4767 = vrot.slane %v4121, 1
    %v4768 = vsel %vm4725, %v4766, %v4767
    %v4769 = vrot.slane %v4122, 1
    %v4770 = vsel %vm4725, %v4767, %v4769
    %v4771 = vrot.slane %v4123, 1
    %v4772 = vrot.slane %v4124, 1
    %v4773 = vsel %vm4725, %v4771, %v4772
    %v4774 = vrot.slane %v4125, 1
    %v4775 = vsel %vm4725, %v4772, %v4774
    %v4776 = vrot.slane %v4126, 1
    %v4777 = vrot.slane %v4127, 1
    %v4778 = vsel %vm4725, %v4776, %v4777
    %v4779 = vrot.slane %v4128, 1
    %v4780 = vsel %vm4725, %v4777, %v4779
    %v4781 = vrot.slane %v4129, 1
    %v4782 = vrot.slane %v4130, 1
    %v4783 = vsel %vm4725, %v4781, %v4782
    %v4784 = vrot.slane %v4131, 1
    %v4785 = vsel %vm4725, %v4782, %v4784
    %v4786 = vrot.slane %v4132, 1
    %v4787 = vrot.slane %v4133, 1
    %v4788 = vsel %vm4725, %v4786, %v4787
    %v4789 = vrot.slane %v4134, 1
    %v4790 = vsel %vm4725, %v4787, %v4789
    %v4791 = vrot.slane %v4135, 1
    %v4792 = vrot.slane %v4136, 1
    %v4793 = vsel %vm4725, %v4791, %v4792
    %v4794 = vrot.slane %v4137, 1
    %v4795 = vsel %vm4725, %v4792, %v4794
    %v4796 = vrot.slane %v4138, 1
    %v4797 = vrot.slane %v4139, 1
    %v4798 = vsel %vm4725, %v4796, %v4797
    %v4799 = vrot.slane %v4140, 1
    %v4800 = vsel %vm4725, %v4797, %v4799
    %v4801 = vrot.slane %v4141, 1
    %v4802 = vrot.slane %v4142, 1
    %v4803 = vsel %vm4725, %v4801, %v4802
    %v4804 = vrot.slane %v4143, 1
    %v4805 = vsel %vm4725, %v4802, %v4804
    %v4806 = vrot.slane %v4144, 1
    %v4807 = vrot.slane %v4145, 1
    %v4808 = vsel %vm4725, %v4806, %v4807
    %v4809 = vrot.slane %v4146, 1
    %v4810 = vsel %vm4725, %v4807, %v4809
    %v4811 = vrot.slane %v4147, 1
    %v4812 = vrot.slane %v4148, 1
    %v4813 = vsel %vm4725, %v4811, %v4812
    %v4814 = vrot.slane %v4149, 1
    %v4815 = vsel %vm4725, %v4812, %v4814
    %v4816 = vrot.slane %v4150, 1
    %v4817 = vrot.slane %v4151, 1
    %v4818 = vsel %vm4725, %v4816, %v4817
    %v4819 = vrot.slane %v4152, 1
    %v4820 = vsel %vm4725, %v4817, %v4819
    %v4821 = vrot.slane %v4153, 1
    %v4822 = vrot.slane %v4154, 1
    %v4823 = vsel %vm4725, %v4821, %v4822
    %v4824 = vrot.slane %v4155, 1
    %v4825 = vsel %vm4725, %v4822, %v4824
    %v4826 = vrot.slane %v4156, 1
    %v4827 = vrot.slane %v4157, 1
    %v4828 = vsel %vm4725, %v4826, %v4827
    %v4829 = vrot.slane %v4158, 1
    %v4830 = vsel %vm4725, %v4827, %v4829
    %v4831 = vrot.slane %v4159, 1
    %v4832 = vrot.slane %v4160, 1
    %v4833 = vsel %vm4725, %v4831, %v4832
    %v4834 = vrot.slane %v4161, 1
    %v4835 = vsel %vm4725, %v4832, %v4834
    %v4836 = vrot.slane %v4162, 1
    %v4837 = vrot.slane %v4163, 1
    %v4838 = vsel %vm4725, %v4836, %v4837
    %v4839 = vrot.slane %v4164, 1
    %v4840 = vsel %vm4725, %v4837, %v4839
    %v4841 = vrot.slane %v4165, 1
    %v4842 = vrot.slane %v4166, 1
    %v4843 = vsel %vm4725, %v4841, %v4842
    %v4844 = vrot.slane %v4167, 1
    %v4845 = vsel %vm4725, %v4842, %v4844
    %v4846 = vrot.slane %v4168, 1
    %v4847 = vrot.slane %v4169, 1
    %v4848 = vsel %vm4725, %v4846, %v4847
    %v4849 = vrot.slane %v4170, 1
    %v4850 = vsel %vm4725, %v4847, %v4849
    %v4851 = vrot.slane %v4171, 1
    %v4852 = vrot.slane %v4172, 1
    %v4853 = vsel %vm4725, %v4851, %v4852
    %v4854 = vrot.slane %v4173, 1
    %v4855 = vsel %vm4725, %v4852, %v4854
    %v4856 = vrot.slane %v4174, 1
    %v4857 = vrot.slane %v4175, 1
    %v4858 = vsel %vm4725, %v4856, %v4857
    %v4859 = vrot.slane %v4176, 1
    %v4860 = vsel %vm4725, %v4857, %v4859
    %v4861 = vrot.slane %v4177, 1
    %v4862 = vrot.slane %v4178, 1
    %v4863 = vsel %vm4725, %v4861, %v4862
    %v4864 = vrot.slane %v4179, 1
    %v4865 = vsel %vm4725, %v4862, %v4864
    %v4866 = vrot.slane %v4180, 1
    %v4867 = vrot.slane %v4181, 1
    %v4868 = vsel %vm4725, %v4866, %v4867
    %v4869 = vrot.slane %v4182, 1
    %v4870 = vsel %vm4725, %v4867, %v4869
    %v4871 = vrot.slane %v4183, 1
    %v4872 = vrot.slane %v4184, 1
    %v4873 = vsel %vm4725, %v4871, %v4872
    %v4874 = vrot.slane %v4185, 1
    %v4875 = vsel %vm4725, %v4872, %v4874
    %v4876 = vrot.slane %v4186, 1
    %v4877 = vrot.slane %v4187, 1
    %v4878 = vsel %vm4725, %v4876, %v4877
    %v4879 = vrot.slane %v4188, 1
    %v4880 = vsel %vm4725, %v4877, %v4879
    %v4881 = vrot.slane %v4189, 1
    %v4882 = vrot.slane %v4190, 1
    %v4883 = vsel %vm4725, %v4881, %v4882
    %v4884 = vrot.slane %v4191, 1
    %v4885 = vsel %vm4725, %v4882, %v4884
    %v4950 = vadd.f32 %v3691, %v4728
    %v4951 = vadd.f32 %v3692, %v4730
    %v4952 = vadd.f32 %v3693, %v4733
    %v4953 = vadd.f32 %v3694, %v4735
    %v4954 = vadd.f32 %v3695, %v4738
    %v4955 = vadd.f32 %v3696, %v4740
    %v4956 = vadd.f32 %v3697, %v4743
    %v4957 = vadd.f32 %v3698, %v4745
    %v4958 = vadd.f32 %v3699, %v4748
    %v4959 = vadd.f32 %v3700, %v4750
    %v4960 = vadd.f32 %v3701, %v4753
    %v4961 = vadd.f32 %v3702, %v4755
    %v4962 = vadd.f32 %v3703, %v4758
    %v4963 = vadd.f32 %v3704, %v4760
    %v4964 = vadd.f32 %v3705, %v4763
    %v4965 = vadd.f32 %v3706, %v4765
    %v4966 = vadd.f32 %v3707, %v4768
    %v4967 = vadd.f32 %v3708, %v4770
    %v4968 = vadd.f32 %v3709, %v4773
    %v4969 = vadd.f32 %v3710, %v4775
    %v4970 = vadd.f32 %v3711, %v4778
    %v4971 = vadd.f32 %v3712, %v4780
    %v4972 = vadd.f32 %v3713, %v4783
    %v4973 = vadd.f32 %v3714, %v4785
    %v4974 = vadd.f32 %v3715, %v4788
    %v4975 = vadd.f32 %v3716, %v4790
    %v4976 = vadd.f32 %v3717, %v4793
    %v4977 = vadd.f32 %v3718, %v4795
    %v4978 = vadd.f32 %v3719, %v4798
    %v4979 = vadd.f32 %v3720, %v4800
    %v4980 = vadd.f32 %v3721, %v4803
    %v4981 = vadd.f32 %v3722, %v4805
    %v4982 = vadd.f32 %v3723, %v4808
    %v4983 = vadd.f32 %v3724, %v4810
    %v4984 = vadd.f32 %v3725, %v4813
    %v4985 = vadd.f32 %v3726, %v4815
    %v4986 = vadd.f32 %v3727, %v4818
    %v4987 = vadd.f32 %v3728, %v4820
    %v4988 = vadd.f32 %v3729, %v4823
    %v4989 = vadd.f32 %v3730, %v4825
    %v4990 = vadd.f32 %v3731, %v4828
    %v4991 = vadd.f32 %v3732, %v4830
    %v4992 = vadd.f32 %v3733, %v4833
    %v4993 = vadd.f32 %v3734, %v4835
    %v4994 = vadd.f32 %v3735, %v4838
    %v4995 = vadd.f32 %v3736, %v4840
    %v4996 = vadd.f32 %v3737, %v4843
    %v4997 = vadd.f32 %v3738, %v4845
    %v4998 = vadd.f32 %v3739, %v4848
    %v4999 = vadd.f32 %v3740, %v4850
    %v5000 = vadd.f32 %v3741, %v4853
    %v5001 = vadd.f32 %v3742, %v4855
    %v5002 = vadd.f32 %v3743, %v4858
    %v5003 = vadd.f32 %v3744, %v4860
    %v5004 = vadd.f32 %v3745, %v4863
    %v5005 = vadd.f32 %v3746, %v4865
    %v5006 = vadd.f32 %v3747, %v4868
    %v5007 = vadd.f32 %v3748, %v4870
    %v5008 = vadd.f32 %v3749, %v4873
    %v5009 = vadd.f32 %v3750, %v4875
    %v5010 = vadd.f32 %v3751, %v4878
    %v5011 = vadd.f32 %v3752, %v4880
    %v5012 = vadd.f32 %v3753, %v4883
    %v5013 = vadd.f32 %v3754, %v4885
    %vm5110 = vcmask 1045504
    %v5111 = vrot.slane %v4533, 2
    %v5112 = vrot.slane %v4534, 2
    %v5113 = vsel %vm5110, %v5111, %v5112
    %v5114 = vrot.slane %v4535, 2
    %v5115 = vsel %vm5110, %v5112, %v5114
    %v5116 = vrot.slane %v4536, 2
    %v5117 = vrot.slane %v4537, 2
    %v5118 = vsel %vm5110, %v5116, %v5117
    %v5119 = vrot.slane %v4538, 2
    %v5120 = vsel %vm5110, %v5117, %v5119
    %v5121 = vrot.slane %v4539, 2
    %v5122 = vrot.slane %v4540, 2
    %v5123 = vsel %vm5110, %v5121, %v5122
    %v5124 = vrot.slane %v4541, 2
    %v5125 = vsel %vm5110, %v5122, %v5124
    %v5126 = vrot.slane %v4542, 2
    %v5127 = vrot.slane %v4543, 2
    %v5128 = vsel %vm5110, %v5126, %v5127
    %v5129 = vrot.slane %v4544, 2
    %v5130 = vsel %vm5110, %v5127, %v5129
    %v5131 = vrot.slane %v4545, 2
    %v5132 = vrot.slane %v4546, 2
    %v5133 = vsel %vm5110, %v5131, %v5132
    %v5134 = vrot.slane %v4547, 2
    %v5135 = vsel %vm5110, %v5132, %v5134
    %v5136 = vrot.slane %v4548, 2
    %v5137 = vrot.slane %v4549, 2
    %v5138 = vsel %vm5110, %v5136, %v5137
    %v5139 = vrot.slane %v4550, 2
    %v5140 = vsel %vm5110, %v5137, %v5139
    %v5141 = vrot.slane %v4551, 2
    %v5142 = vrot.slane %v4552, 2
    %v5143 = vsel %vm5110, %v5141, %v5142
    %v5144 = vrot.slane %v4553, 2
    %v5145 = vsel %vm5110, %v5142, %v5144
    %v5146 = vrot.slane %v4554, 2
    %v5147 = vrot.slane %v4555, 2
    %v5148 = vsel %vm5110, %v5146, %v5147
    %v5149 = vrot.slane %v4556, 2
    %v5150 = vsel %vm5110, %v5147, %v5149
    %v5151 = vrot.slane %v4557, 2
    %v5152 = vrot.slane %v4558, 2
    %v5153 = vsel %vm5110, %v5151, %v5152
    %v5154 = vrot.slane %v4559, 2
    %v5155 = vsel %vm5110, %v5152, %v5154
    %v5156 = vrot.slane %v4560, 2
    %v5157 = vrot.slane %v4561, 2
    %v5158 = vsel %vm5110, %v5156, %v5157
    %v5159 = vrot.slane %v4562, 2
    %v5160 = vsel %vm5110, %v5157, %v5159
    %v5161 = vrot.slane %v4563, 2
    %v5162 = vrot.slane %v4564, 2
    %v5163 = vsel %vm5110, %v5161, %v5162
    %v5164 = vrot.slane %v4565, 2
    %v5165 = vsel %vm5110, %v5162, %v5164
    %v5166 = vrot.slane %v4566, 2
    %v5167 = vrot.slane %v4567, 2
    %v5168 = vsel %vm5110, %v5166, %v5167
    %v5169 = vrot.slane %v4568, 2
    %v5170 = vsel %vm5110, %v5167, %v5169
    %v5171 = vrot.slane %v4569, 2
    %v5172 = vrot.slane %v4570, 2
    %v5173 = vsel %vm5110, %v5171, %v5172
    %v5174 = vrot.slane %v4571, 2
    %v5175 = vsel %vm5110, %v5172, %v5174
    %v5176 = vrot.slane %v4572, 2
    %v5177 = vrot.slane %v4573, 2
    %v5178 = vsel %vm5110, %v5176, %v5177
    %v5179 = vrot.slane %v4574, 2
    %v5180 = vsel %vm5110, %v5177, %v5179
    %v5181 = vrot.slane %v4575, 2
    %v5182 = vrot.slane %v4576, 2
    %v5183 = vsel %vm5110, %v5181, %v5182
    %v5184 = vrot.slane %v4577, 2
    %v5185 = vsel %vm5110, %v5182, %v5184
    %v5186 = vrot.slane %v4578, 2
    %v5187 = vrot.slane %v4579, 2
    %v5188 = vsel %vm5110, %v5186, %v5187
    %v5189 = vrot.slane %v4580, 2
    %v5190 = vsel %vm5110, %v5187, %v5189
    %v5191 = vrot.slane %v4581, 2
    %v5192 = vrot.slane %v4582, 2
    %v5193 = vsel %vm5110, %v5191, %v5192
    %v5194 = vrot.slane %v4583, 2
    %v5195 = vsel %vm5110, %v5192, %v5194
    %v5196 = vrot.slane %v4584, 2
    %v5197 = vrot.slane %v4585, 2
    %v5198 = vsel %vm5110, %v5196, %v5197
    %v5199 = vrot.slane %v4586, 2
    %v5200 = vsel %vm5110, %v5197, %v5199
    %v5201 = vrot.slane %v4587, 2
    %v5202 = vrot.slane %v4588, 2
    %v5203 = vsel %vm5110, %v5201, %v5202
    %v5204 = vrot.slane %v4589, 2
    %v5205 = vsel %vm5110, %v5202, %v5204
    %v5206 = vrot.slane %v4590, 2
    %v5207 = vrot.slane %v4591, 2
    %v5208 = vsel %vm5110, %v5206, %v5207
    %v5209 = vrot.slane %v4592, 2
    %v5210 = vsel %vm5110, %v5207, %v5209
    %v5211 = vrot.slane %v4593, 2
    %v5212 = vrot.slane %v4594, 2
    %v5213 = vsel %vm5110, %v5211, %v5212
    %v5214 = vrot.slane %v4595, 2
    %v5215 = vsel %vm5110, %v5212, %v5214
    %v5216 = vrot.slane %v4596, 2
    %v5217 = vrot.slane %v4597, 2
    %v5218 = vsel %vm5110, %v5216, %v5217
    %v5219 = vrot.slane %v4598, 2
    %v5220 = vsel %vm5110, %v5217, %v5219
    %v5221 = vrot.slane %v4599, 2
    %v5222 = vrot.slane %v4600, 2
    %v5223 = vsel %vm5110, %v5221, %v5222
    %v5224 = vrot.slane %v4601, 2
    %v5225 = vsel %vm5110, %v5222, %v5224
    %v5226 = vrot.slane %v4602, 2
    %v5227 = vrot.slane %v4603, 2
    %v5228 = vsel %vm5110, %v5226, %v5227
    %v5229 = vrot.slane %v4604, 2
    %v5230 = vsel %vm5110, %v5227, %v5229
    %v5231 = vrot.slane %v4605, 2
    %v5232 = vrot.slane %v4606, 2
    %v5233 = vsel %vm5110, %v5231, %v5232
    %v5234 = vrot.slane %v4607, 2
    %v5235 = vsel %vm5110, %v5232, %v5234
    %v5236 = vrot.slane %v4608, 2
    %v5237 = vrot.slane %v4609, 2
    %v5238 = vsel %vm5110, %v5236, %v5237
    %v5239 = vrot.slane %v4610, 2
    %v5240 = vsel %vm5110, %v5237, %v5239
    %v5241 = vrot.slane %v4611, 2
    %v5242 = vrot.slane %v4612, 2
    %v5243 = vsel %vm5110, %v5241, %v5242
    %v5244 = vrot.slane %v4613, 2
    %v5245 = vsel %vm5110, %v5242, %v5244
    %v5246 = vrot.slane %v4614, 2
    %v5247 = vrot.slane %v4615, 2
    %v5248 = vsel %vm5110, %v5246, %v5247
    %v5249 = vrot.slane %v4616, 2
    %v5250 = vsel %vm5110, %v5247, %v5249
    %v5251 = vrot.slane %v4617, 2
    %v5252 = vrot.slane %v4618, 2
    %v5253 = vsel %vm5110, %v5251, %v5252
    %v5254 = vrot.slane %v4619, 2
    %v5255 = vsel %vm5110, %v5252, %v5254
    %v5256 = vrot.slane %v4620, 2
    %v5257 = vrot.slane %v4621, 2
    %v5258 = vsel %vm5110, %v5256, %v5257
    %v5259 = vrot.slane %v4622, 2
    %v5260 = vsel %vm5110, %v5257, %v5259
    %v5261 = vrot.slane %v4623, 2
    %v5262 = vrot.slane %v4624, 2
    %v5263 = vsel %vm5110, %v5261, %v5262
    %v5264 = vrot.slane %v4625, 2
    %v5265 = vsel %vm5110, %v5262, %v5264
    %v5266 = vrot.slane %v4626, 2
    %v5267 = vrot.slane %v4627, 2
    %v5268 = vsel %vm5110, %v5266, %v5267
    %v5269 = vrot.slane %v4628, 2
    %v5270 = vsel %vm5110, %v5267, %v5269
    %v5335 = vadd.f32 %v4950, %v5113
    %v5336 = vadd.f32 %v4951, %v5115
    %v5337 = vadd.f32 %v4952, %v5118
    %v5338 = vadd.f32 %v4953, %v5120
    %v5339 = vadd.f32 %v4954, %v5123
    %v5340 = vadd.f32 %v4955, %v5125
    %v5341 = vadd.f32 %v4956, %v5128
    %v5342 = vadd.f32 %v4957, %v5130
    %v5343 = vadd.f32 %v4958, %v5133
    %v5344 = vadd.f32 %v4959, %v5135
    %v5345 = vadd.f32 %v4960, %v5138
    %v5346 = vadd.f32 %v4961, %v5140
    %v5347 = vadd.f32 %v4962, %v5143
    %v5348 = vadd.f32 %v4963, %v5145
    %v5349 = vadd.f32 %v4964, %v5148
    %v5350 = vadd.f32 %v4965, %v5150
    %v5351 = vadd.f32 %v4966, %v5153
    %v5352 = vadd.f32 %v4967, %v5155
    %v5353 = vadd.f32 %v4968, %v5158
    %v5354 = vadd.f32 %v4969, %v5160
    %v5355 = vadd.f32 %v4970, %v5163
    %v5356 = vadd.f32 %v4971, %v5165
    %v5357 = vadd.f32 %v4972, %v5168
    %v5358 = vadd.f32 %v4973, %v5170
    %v5359 = vadd.f32 %v4974, %v5173
    %v5360 = vadd.f32 %v4975, %v5175
    %v5361 = vadd.f32 %v4976, %v5178
    %v5362 = vadd.f32 %v4977, %v5180
    %v5363 = vadd.f32 %v4978, %v5183
    %v5364 = vadd.f32 %v4979, %v5185
    %v5365 = vadd.f32 %v4980, %v5188
    %v5366 = vadd.f32 %v4981, %v5190
    %v5367 = vadd.f32 %v4982, %v5193
    %v5368 = vadd.f32 %v4983, %v5195
    %v5369 = vadd.f32 %v4984, %v5198
    %v5370 = vadd.f32 %v4985, %v5200
    %v5371 = vadd.f32 %v4986, %v5203
    %v5372 = vadd.f32 %v4987, %v5205
    %v5373 = vadd.f32 %v4988, %v5208
    %v5374 = vadd.f32 %v4989, %v5210
    %v5375 = vadd.f32 %v4990, %v5213
    %v5376 = vadd.f32 %v4991, %v5215
    %v5377 = vadd.f32 %v4992, %v5218
    %v5378 = vadd.f32 %v4993, %v5220
    %v5379 = vadd.f32 %v4994, %v5223
    %v5380 = vadd.f32 %v4995, %v5225
    %v5381 = vadd.f32 %v4996, %v5228
    %v5382 = vadd.f32 %v4997, %v5230
    %v5383 = vadd.f32 %v4998, %v5233
    %v5384 = vadd.f32 %v4999, %v5235
    %v5385 = vadd.f32 %v5000, %v5238
    %v5386 = vadd.f32 %v5001, %v5240
    %v5387 = vadd.f32 %v5002, %v5243
    %v5388 = vadd.f32 %v5003, %v5245
    %v5389 = vadd.f32 %v5004, %v5248
    %v5390 = vadd.f32 %v5005, %v5250
    %v5391 = vadd.f32 %v5006, %v5253
    %v5392 = vadd.f32 %v5007, %v5255
    %v5393 = vadd.f32 %v5008, %v5258
    %v5394 = vadd.f32 %v5009, %v5260
    %v5395 = vadd.f32 %v5010, %v5263
    %v5396 = vadd.f32 %v5011, %v5265
    %v5397 = vadd.f32 %v5012, %v5268
    %v5398 = vadd.f32 %v5013, %v5270
    %v5399 = vld [vmem:[%s3] sm:$0x1]
    %v5401 = vperm.slane %v5399, 0
    %v5403 = vadd.f32 %v5335, %v5401
    %v5404 = vadd.f32 %v5336, %v5401
    %v5405 = vadd.f32 %v5337, %v5401
    %v5406 = vadd.f32 %v5338, %v5401
    %v5407 = vadd.f32 %v5339, %v5401
    %v5408 = vadd.f32 %v5340, %v5401
    %v5409 = vadd.f32 %v5341, %v5401
    %v5410 = vadd.f32 %v5342, %v5401
    %v5411 = vadd.f32 %v5343, %v5401
    %v5412 = vadd.f32 %v5344, %v5401
    %v5413 = vadd.f32 %v5345, %v5401
    %v5414 = vadd.f32 %v5346, %v5401
    %v5415 = vadd.f32 %v5347, %v5401
    %v5416 = vadd.f32 %v5348, %v5401
    %v5417 = vadd.f32 %v5349, %v5401
    %v5418 = vadd.f32 %v5350, %v5401
    %v5419 = vadd.f32 %v5351, %v5401
    %v5420 = vadd.f32 %v5352, %v5401
    %v5421 = vadd.f32 %v5353, %v5401
    %v5422 = vadd.f32 %v5354, %v5401
    %v5423 = vadd.f32 %v5355, %v5401
    %v5424 = vadd.f32 %v5356, %v5401
    %v5425 = vadd.f32 %v5357, %v5401
    %v5426 = vadd.f32 %v5358, %v5401
    %v5427 = vadd.f32 %v5359, %v5401
    %v5428 = vadd.f32 %v5360, %v5401
    %v5429 = vadd.f32 %v5361, %v5401
    %v5430 = vadd.f32 %v5362, %v5401
    %v5431 = vadd.f32 %v5363, %v5401
    %v5432 = vadd.f32 %v5364, %v5401
    %v5433 = vadd.f32 %v5365, %v5401
    %v5434 = vadd.f32 %v5366, %v5401
    %v5435 = vadd.f32 %v5367, %v5401
    %v5436 = vadd.f32 %v5368, %v5401
    %v5437 = vadd.f32 %v5369, %v5401
    %v5438 = vadd.f32 %v5370, %v5401
    %v5439 = vadd.f32 %v5371, %v5401
    %v5440 = vadd.f32 %v5372, %v5401
    %v5441 = vadd.f32 %v5373, %v5401
    %v5442 = vadd.f32 %v5374, %v5401
    %v5443 = vadd.f32 %v5375, %v5401
    %v5444 = vadd.f32 %v5376, %v5401
    %v5445 = vadd.f32 %v5377, %v5401
    %v5446 = vadd.f32 %v5378, %v5401
    %v5447 = vadd.f32 %v5379, %v5401
    %v5448 = vadd.f32 %v5380, %v5401
    %v5449 = vadd.f32 %v5381, %v5401
    %v5450 = vadd.f32 %v5382, %v5401
    %v5451 = vadd.f32 %v5383, %v5401
    %v5452 = vadd.f32 %v5384, %v5401
    %v5453 = vadd.f32 %v5385, %v5401
    %v5454 = vadd.f32 %v5386, %v5401
    %v5455 = vadd.f32 %v5387, %v5401
    %v5456 = vadd.f32 %v5388, %v5401
    %v5457 = vadd.f32 %v5389, %v5401
    %v5458 = vadd.f32 %v5390, %v5401
    %v5459 = vadd.f32 %v5391, %v5401
    %v5460 = vadd.f32 %v5392, %v5401
    %v5461 = vadd.f32 %v5393, %v5401
    %v5462 = vadd.f32 %v5394, %v5401
    %v5463 = vadd.f32 %v5395, %v5401
    %v5464 = vadd.f32 %v5396, %v5401
    %v5465 = vadd.f32 %v5397, %v5401
    %v5466 = vadd.f32 %v5398, %v5401
    %v5467 = vmax.f32 %v5403, 0.0
    %v5468 = vmax.f32 %v5404, 0.0
    %v5469 = vmax.f32 %v5405, 0.0
    %v5470 = vmax.f32 %v5406, 0.0
    %v5471 = vmax.f32 %v5407, 0.0
    %v5472 = vmax.f32 %v5408, 0.0
    %v5473 = vmax.f32 %v5409, 0.0
    %v5474 = vmax.f32 %v5410, 0.0
    %v5475 = vmax.f32 %v5411, 0.0
    %v5476 = vmax.f32 %v5412, 0.0
    %v5477 = vmax.f32 %v5413, 0.0
    %v5478 = vmax.f32 %v5414, 0.0
    %v5479 = vmax.f32 %v5415, 0.0
    %v5480 = vmax.f32 %v5416, 0.0
    %v5481 = vmax.f32 %v5417, 0.0
    %v5482 = vmax.f32 %v5418, 0.0
    %v5483 = vmax.f32 %v5419, 0.0
    %v5484 = vmax.f32 %v5420, 0.0
    %v5485 = vmax.f32 %v5421, 0.0
    %v5486 = vmax.f32 %v5422, 0.0
    %v5487 = vmax.f32 %v5423, 0.0
    %v5488 = vmax.f32 %v5424, 0.0
    %v5489 = vmax.f32 %v5425, 0.0
    %v5490 = vmax.f32 %v5426, 0.0
    %v5491 = vmax.f32 %v5427, 0.0
    %v5492 = vmax.f32 %v5428, 0.0
    %v5493 = vmax.f32 %v5429, 0.0
    %v5494 = vmax.f32 %v5430, 0.0
    %v5495 = vmax.f32 %v5431, 0.0
    %v5496 = vmax.f32 %v5432, 0.0
    %v5497 = vmax.f32 %v5433, 0.0
    %v5498 = vmax.f32 %v5434, 0.0
    %v5499 = vmax.f32 %v5435, 0.0
    %v5500 = vmax.f32 %v5436, 0.0
    %v5501 = vmax.f32 %v5437, 0.0
    %v5502 = vmax.f32 %v5438, 0.0
    %v5503 = vmax.f32 %v5439, 0.0
    %v5504 = vmax.f32 %v5440, 0.0
    %v5505 = vmax.f32 %v5441, 0.0
    %v5506 = vmax.f32 %v5442, 0.0
    %v5507 = vmax.f32 %v5443, 0.0
    %v5508 = vmax.f32 %v5444, 0.0
    %v5509 = vmax.f32 %v5445, 0.0
    %v5510 = vmax.f32 %v5446, 0.0
    %v5511 = vmax.f32 %v5447, 0.0
    %v5512 = vmax.f32 %v5448, 0.0
    %v5513 = vmax.f32 %v5449, 0.0
    %v5514 = vmax.f32 %v5450, 0.0
    %v5515 = vmax.f32 %v5451, 0.0
    %v5516 = vmax.f32 %v5452, 0.0
    %v5517 = vmax.f32 %v5453, 0.0
    %v5518 = vmax.f32 %v5454, 0.0
    %v5519 = vmax.f32 %v5455, 0.0
    %v5520 = vmax.f32 %v5456, 0.0
    %v5521 = vmax.f32 %v5457, 0.0
    %v5522 = vmax.f32 %v5458, 0.0
    %v5523 = vmax.f32 %v5459, 0.0
    %v5524 = vmax.f32 %v5460, 0.0
    %v5525 = vmax.f32 %v5461, 0.0
    %v5526 = vmax.f32 %v5462, 0.0
    %v5527 = vmax.f32 %v5463, 0.0
    %v5528 = vmax.f32 %v5464, 0.0
    %v5529 = vmax.f32 %v5465, 0.0
    %v5530 = vmax.f32 %v5466, 0.0
    %v5531 = vld [vmem:[%s1] sm:$0xff]
    %v5532 = vld [vmem:[%s1 + $0x8] sm:$0xff]
    %v5533 = vld [vmem:[%s1 + $0x10] sm:$0xff]
    %v5534 = vld [vmem:[%s1 + $0x18] sm:$0xff]
    %v5535 = vld [vmem:[%s1 + $0x20] sm:$0xff]
    %v5536 = vld [vmem:[%s1 + $0x28] sm:$0xff]
    %v5537 = vld [vmem:[%s1 + $0x30] sm:$0xff]
    %v5538 = vld [vmem:[%s1 + $0x38] sm:$0xff]
    %v5539 = vld [vmem:[%s1 + $0x40] sm:$0xff]
    %v5540 = vld [vmem:[%s1 + $0x48] sm:$0xff]
    %v5541 = vld [vmem:[%s1 + $0x50] sm:$0xff]
    %v5542 = vld [vmem:[%s1 + $0x58] sm:$0xff]
    %v5543 = vld [vmem:[%s1 + $0x60] sm:$0xff]
    %v5544 = vld [vmem:[%s1 + $0x68] sm:$0xff]
    %v5545 = vld [vmem:[%s1 + $0x70] sm:$0xff]
    %v5546 = vld [vmem:[%s1 + $0x78] sm:$0xff]
    %v5547 = vld [vmem:[%s1 + $0x80] sm:$0xff]
    %v5548 = vld [vmem:[%s1 + $0x88] sm:$0xff]
    %v5549 = vld [vmem:[%s1 + $0x90] sm:$0xff]
    %v5550 = vld [vmem:[%s1 + $0x98] sm:$0xff]
    %v5551 = vld [vmem:[%s1 + $0xa0] sm:$0xff]
    %v5552 = vld [vmem:[%s1 + $0xa8] sm:$0xff]
    %v5553 = vld [vmem:[%s1 + $0xb0] sm:$0xff]
    %v5554 = vld [vmem:[%s1 + $0xb8] sm:$0xff]
    %v5555 = vld [vmem:[%s1 + $0xc0] sm:$0xff]
    %v5556 = vld [vmem:[%s1 + $0xc8] sm:$0xff]
    %v5557 = vld [vmem:[%s1 + $0xd0] sm:$0xff]
    %v5558 = vld [vmem:[%s1 + $0xd8] sm:$0xff]
    %v5559 = vld [vmem:[%s1 + $0xe0] sm:$0xff]
    %v5560 = vld [vmem:[%s1 + $0xe8] sm:$0xff]
    %v5561 = vld [vmem:[%s1 + $0xf0] sm:$0xff]
    %v5562 = vld [vmem:[%s1 + $0xf8] sm:$0xff]
    %v5563 = vld [vmem:[%s1 + $0x100] sm:$0xff]
    %v5564 = vld [vmem:[%s1 + $0x108] sm:$0xff]
    %v5565 = vld [vmem:[%s1 + $0x110] sm:$0xff]
    %v5566 = vld [vmem:[%s1 + $0x118] sm:$0xff]
    %v5567 = vld [vmem:[%s1 + $0x120] sm:$0xff]
    %v5568 = vld [vmem:[%s1 + $0x128] sm:$0xff]
    %v5569 = vld [vmem:[%s1 + $0x130] sm:$0xff]
    %v5570 = vld [vmem:[%s1 + $0x138] sm:$0xff]
    %v5571 = vld [vmem:[%s1 + $0x140] sm:$0xff]
    %v5572 = vld [vmem:[%s1 + $0x148] sm:$0xff]
    %v5573 = vld [vmem:[%s1 + $0x150] sm:$0xff]
    %v5574 = vld [vmem:[%s1 + $0x158] sm:$0xff]
    %v5575 = vld [vmem:[%s1 + $0x160] sm:$0xff]
    %v5576 = vld [vmem:[%s1 + $0x168] sm:$0xff]
    %v5577 = vld [vmem:[%s1 + $0x170] sm:$0xff]
    %v5578 = vld [vmem:[%s1 + $0x178] sm:$0xff]
    %v5579 = vld [vmem:[%s1 + $0x180] sm:$0xff]
    %v5580 = vld [vmem:[%s1 + $0x188] sm:$0xff]
    %v5581 = vld [vmem:[%s1 + $0x190] sm:$0xff]
    %v5582 = vld [vmem:[%s1 + $0x198] sm:$0xff]
    %v5583 = vld [vmem:[%s1 + $0x1a0] sm:$0xff]
    %v5584 = vld [vmem:[%s1 + $0x1a8] sm:$0xff]
    %v5585 = vld [vmem:[%s1 + $0x1b0] sm:$0xff]
    %v5586 = vld [vmem:[%s1 + $0x1b8] sm:$0xff]
    %v5587 = vld [vmem:[%s1 + $0x1c0] sm:$0xff]
    %v5588 = vld [vmem:[%s1 + $0x1c8] sm:$0xff]
    %v5589 = vld [vmem:[%s1 + $0x1d0] sm:$0xff]
    %v5590 = vld [vmem:[%s1 + $0x1d8] sm:$0xff]
    %v5591 = vld [vmem:[%s1 + $0x1e0] sm:$0xff]
    %v5592 = vld [vmem:[%s1 + $0x1e8] sm:$0xff]
    %v5593 = vld [vmem:[%s1 + $0x1f0] sm:$0xff]
    %v5594 = vld [vmem:[%s1 + $0x1f8] sm:$0xff]
    %5595 = vst.msk [vmem:[#allocation2] sm:$0xff] %vm555, %v5531
    %5596 = vst.msk [vmem:[#allocation2 + $0x8] sm:$0xff] %vm555, %v5532
    %5597 = vst.msk [vmem:[#allocation2 + $0x10] sm:$0xff] %vm555, %v5533
    %5598 = vst.msk [vmem:[#allocation2 + $0x18] sm:$0xff] %vm555, %v5534
    %5599 = vst.msk [vmem:[#allocation2 + $0x20] sm:$0xff] %vm555, %v5535
    %5600 = vst.msk [vmem:[#allocation2 + $0x28] sm:$0xff] %vm555, %v5536
    %5601 = vst.msk [vmem:[#allocation2 + $0x30] sm:$0xff] %vm555, %v5537
    %5602 = vst.msk [vmem:[#allocation2 + $0x38] sm:$0xff] %vm555, %v5538
    %5603 = vst.msk [vmem:[#allocation2 + $0x40] sm:$0xff] %vm555, %v5539
    %5604 = vst.msk [vmem:[#allocation2 + $0x48] sm:$0xff] %vm555, %v5540
    %5605 = vst.msk [vmem:[#allocation2 + $0x50] sm:$0xff] %vm555, %v5541
    %5606 = vst.msk [vmem:[#allocation2 + $0x58] sm:$0xff] %vm555, %v5542
    %5607 = vst.msk [vmem:[#allocation2 + $0x60] sm:$0xff] %vm555, %v5543
    %5608 = vst.msk [vmem:[#allocation2 + $0x68] sm:$0xff] %vm555, %v5544
    %5609 = vst.msk [vmem:[#allocation2 + $0x70] sm:$0xff] %vm555, %v5545
    %5610 = vst.msk [vmem:[#allocation2 + $0x78] sm:$0xff] %vm555, %v5546
    %5611 = vst.msk [vmem:[#allocation2 + $0x80] sm:$0xff] %vm555, %v5547
    %5612 = vst.msk [vmem:[#allocation2 + $0x88] sm:$0xff] %vm555, %v5548
    %5613 = vst.msk [vmem:[#allocation2 + $0x90] sm:$0xff] %vm555, %v5549
    %5614 = vst.msk [vmem:[#allocation2 + $0x98] sm:$0xff] %vm555, %v5550
    %5615 = vst.msk [vmem:[#allocation2 + $0xa0] sm:$0xff] %vm555, %v5551
    %5616 = vst.msk [vmem:[#allocation2 + $0xa8] sm:$0xff] %vm555, %v5552
    %5617 = vst.msk [vmem:[#allocation2 + $0xb0] sm:$0xff] %vm555, %v5553
    %5618 = vst.msk [vmem:[#allocation2 + $0xb8] sm:$0xff] %vm555, %v5554
    %5619 = vst.msk [vmem:[#allocation2 + $0xc0] sm:$0xff] %vm555, %v5555
    %5620 = vst.msk [vmem:[#allocation2 + $0xc8] sm:$0xff] %vm555, %v5556
    %5621 = vst.msk [vmem:[#allocation2 + $0xd0] sm:$0xff] %vm555, %v5557
    %5622 = vst.msk [vmem:[#allocation2 + $0xd8] sm:$0xff] %vm555, %v5558
    %5623 = vst.msk [vmem:[#allocation2 + $0xe0] sm:$0xff] %vm555, %v5559
    %5624 = vst.msk [vmem:[#allocation2 + $0xe8] sm:$0xff] %vm555, %v5560
    %5625 = vst.msk [vmem:[#allocation2 + $0xf0] sm:$0xff] %vm555, %v5561
    %5626 = vst.msk [vmem:[#allocation2 + $0xf8] sm:$0xff] %vm555, %v5562
    %5627 = vst.msk [vmem:[#allocation2 + $0x100] sm:$0xff] %vm555, %v5563
    %5628 = vst.msk [vmem:[#allocation2 + $0x108] sm:$0xff] %vm555, %v5564
    %5629 = vst.msk [vmem:[#allocation2 + $0x110] sm:$0xff] %vm555, %v5565
    %5630 = vst.msk [vmem:[#allocation2 + $0x118] sm:$0xff] %vm555, %v5566
    %5631 = vst.msk [vmem:[#allocation2 + $0x120] sm:$0xff] %vm555, %v5567
    %5632 = vst.msk [vmem:[#allocation2 + $0x128] sm:$0xff] %vm555, %v5568
    %5633 = vst.msk [vmem:[#allocation2 + $0x130] sm:$0xff] %vm555, %v5569
    %5634 = vst.msk [vmem:[#allocation2 + $0x138] sm:$0xff] %vm555, %v5570
    %5635 = vst.msk [vmem:[#allocation2 + $0x140] sm:$0xff] %vm555, %v5571
    %5636 = vst.msk [vmem:[#allocation2 + $0x148] sm:$0xff] %vm555, %v5572
    %5637 = vst.msk [vmem:[#allocation2 + $0x150] sm:$0xff] %vm555, %v5573
    %5638 = vst.msk [vmem:[#allocation2 + $0x158] sm:$0xff] %vm555, %v5574
    %5639 = vst.msk [vmem:[#allocation2 + $0x160] sm:$0xff] %vm555, %v5575
    %5640 = vst.msk [vmem:[#allocation2 + $0x168] sm:$0xff] %vm555, %v5576
    %5641 = vst.msk [vmem:[#allocation2 + $0x170] sm:$0xff] %vm555, %v5577
    %5642 = vst.msk [vmem:[#allocation2 + $0x178] sm:$0xff] %vm555, %v5578
    %5643 = vst.msk [vmem:[#allocation2 + $0x180] sm:$0xff] %vm555, %v5579
    %5644 = vst.msk [vmem:[#allocation2 + $0x188] sm:$0xff] %vm555, %v5580
    %5645 = vst.msk [vmem:[#allocation2 + $0x190] sm:$0xff] %vm555, %v5581
    %5646 = vst.msk [vmem:[#allocation2 + $0x198] sm:$0xff] %vm555, %v5582
    %5647 = vst.msk [vmem:[#allocation2 + $0x1a0] sm:$0xff] %vm555, %v5583
    %5648 = vst.msk [vmem:[#allocation2 + $0x1a8] sm:$0xff] %vm555, %v5584
    %5649 = vst.msk [vmem:[#allocation2 + $0x1b0] sm:$0xff] %vm555, %v5585
    %5650 = vst.msk [vmem:[#allocation2 + $0x1b8] sm:$0xff] %vm555, %v5586
    %5651 = vst.msk [vmem:[#allocation2 + $0x1c0] sm:$0xff] %vm555, %v5587
    %5652 = vst.msk [vmem:[#allocation2 + $0x1c8] sm:$0xff] %vm555, %v5588
    %5653 = vst.msk [vmem:[#allocation2 + $0x1d0] sm:$0xff] %vm555, %v5589
    %5654 = vst.msk [vmem:[#allocation2 + $0x1d8] sm:$0xff] %vm555, %v5590
    %5655 = vst.msk [vmem:[#allocation2 + $0x1e0] sm:$0xff] %vm555, %v5591
    %5656 = vst.msk [vmem:[#allocation2 + $0x1e8] sm:$0xff] %vm555, %v5592
    %5657 = vst.msk [vmem:[#allocation2 + $0x1f0] sm:$0xff] %vm555, %v5593
    %5658 = vst.msk [vmem:[#allocation2 + $0x1f8] sm:$0xff] %vm555, %v5594
    %5661 = vrot.lane.b32.xlu0 %v5467, 64
    %v5662 = vpop.permute.xlu0 %5661
    %5663 = vrot.lane.b32.xlu0 %v5468, 64
    %v5664 = vpop.permute.xlu0 %5663
    %vm5667 = vcmask 1048064
    %5668 = vst.msk [vmem:[#allocation2] sm:$0xff] %vm5667, %v5662
    %5669 = vst.msk [vmem:[#allocation2 + $0x8] sm:$0xff] %vm5667, %v5664
    %5672 = vrot.lane.b32.xlu0 %v5469, 64
    %v5673 = vpop.permute.xlu0 %5672
    %5674 = vrot.lane.b32.xlu0 %v5470, 64
    %v5675 = vpop.permute.xlu0 %5674
    %5678 = vst.msk [vmem:[#allocation2 + $0x10] sm:$0xff] %vm5667, %v5673
    %5679 = vst.msk [vmem:[#allocation2 + $0x18] sm:$0xff] %vm5667, %v5675
    %5682 = vrot.lane.b32.xlu0 %v5471, 64
    %v5683 = vpop.permute.xlu0 %5682
    %5684 = vrot.lane.b32.xlu0 %v5472, 64
    %v5685 = vpop.permute.xlu0 %5684
    %5688 = vst.msk [vmem:[#allocation2 + $0x20] sm:$0xff] %vm5667, %v5683
    %5689 = vst.msk [vmem:[#allocation2 + $0x28] sm:$0xff] %vm5667, %v5685
    %5692 = vrot.lane.b32.xlu0 %v5473, 64
    %v5693 = vpop.permute.xlu0 %5692
    %5694 = vrot.lane.b32.xlu0 %v5474, 64
    %v5695 = vpop.permute.xlu0 %5694
    %5698 = vst.msk [vmem:[#allocation2 + $0x30] sm:$0xff] %vm5667, %v5693
    %5699 = vst.msk [vmem:[#allocation2 + $0x38] sm:$0xff] %vm5667, %v5695
    %5702 = vrot.lane.b32.xlu0 %v5475, 64
    %v5703 = vpop.permute.xlu0 %5702
    %5704 = vrot.lane.b32.xlu0 %v5476, 64
    %v5705 = vpop.permute.xlu0 %5704
    %5708 = vst.msk [vmem:[#allocation2 + $0x40] sm:$0xff] %vm5667, %v5703
    %5709 = vst.msk [vmem:[#allocation2 + $0x48] sm:$0xff] %vm5667, %v5705
    %5712 = vrot.lane.b32.xlu0 %v5477, 64
    %v5713 = vpop.permute.xlu0 %5712
    %5714 = vrot.lane.b32.xlu0 %v5478, 64
    %v5715 = vpop.permute.xlu0 %5714
    %5718 = vst.msk [vmem:[#allocation2 + $0x50] sm:$0xff] %vm5667, %v5713
    %5719 = vst.msk [vmem:[#allocation2 + $0x58] sm:$0xff] %vm5667, %v5715
    %5722 = vrot.lane.b32.xlu0 %v5479, 64
    %v5723 = vpop.permute.xlu0 %5722
    %5724 = vrot.lane.b32.xlu0 %v5480, 64
    %v5725 = vpop.permute.xlu0 %5724
    %5728 = vst.msk [vmem:[#allocation2 + $0x60] sm:$0xff] %vm5667, %v5723
    %5729 = vst.msk [vmem:[#allocation2 + $0x68] sm:$0xff] %vm5667, %v5725
    %5732 = vrot.lane.b32.xlu0 %v5481, 64
    %v5733 = vpop.permute.xlu0 %5732
    %5734 = vrot.lane.b32.xlu0 %v5482, 64
    %v5735 = vpop.permute.xlu0 %5734
    %5738 = vst.msk [vmem:[#allocation2 + $0x70] sm:$0xff] %vm5667, %v5733
    %5739 = vst.msk [vmem:[#allocation2 + $0x78] sm:$0xff] %vm5667, %v5735
    %5742 = vrot.lane.b32.xlu0 %v5483, 64
    %v5743 = vpop.permute.xlu0 %5742
    %5744 = vrot.lane.b32.xlu0 %v5484, 64
    %v5745 = vpop.permute.xlu0 %5744
    %5748 = vst.msk [vmem:[#allocation2 + $0x80] sm:$0xff] %vm5667, %v5743
    %5749 = vst.msk [vmem:[#allocation2 + $0x88] sm:$0xff] %vm5667, %v5745
    %5752 = vrot.lane.b32.xlu0 %v5485, 64
    %v5753 = vpop.permute.xlu0 %5752
    %5754 = vrot.lane.b32.xlu0 %v5486, 64
    %v5755 = vpop.permute.xlu0 %5754
    %5758 = vst.msk [vmem:[#allocation2 + $0x90] sm:$0xff] %vm5667, %v5753
    %5759 = vst.msk [vmem:[#allocation2 + $0x98] sm:$0xff] %vm5667, %v5755
    %5762 = vrot.lane.b32.xlu0 %v5487, 64
    %v5763 = vpop.permute.xlu0 %5762
    %5764 = vrot.lane.b32.xlu0 %v5488, 64
    %v5765 = vpop.permute.xlu0 %5764
    %5768 = vst.msk [vmem:[#allocation2 + $0xa0] sm:$0xff] %vm5667, %v5763
    %5769 = vst.msk [vmem:[#allocation2 + $0xa8] sm:$0xff] %vm5667, %v5765
    %5772 = vrot.lane.b32.xlu0 %v5489, 64
    %v5773 = vpop.permute.xlu0 %5772
    %5774 = vrot.lane.b32.xlu0 %v5490, 64
    %v5775 = vpop.permute.xlu0 %5774
    %5778 = vst.msk [vmem:[#allocation2 + $0xb0] sm:$0xff] %vm5667, %v5773
    %5779 = vst.msk [vmem:[#allocation2 + $0xb8] sm:$0xff] %vm5667, %v5775
    %5782 = vrot.lane.b32.xlu0 %v5491, 64
    %v5783 = vpop.permute.xlu0 %5782
    %5784 = vrot.lane.b32.xlu0 %v5492, 64
    %v5785 = vpop.permute.xlu0 %5784
    %5788 = vst.msk [vmem:[#allocation2 + $0xc0] sm:$0xff] %vm5667, %v5783
    %5789 = vst.msk [vmem:[#allocation2 + $0xc8] sm:$0xff] %vm5667, %v5785
    %5792 = vrot.lane.b32.xlu0 %v5493, 64
    %v5793 = vpop.permute.xlu0 %5792
    %5794 = vrot.lane.b32.xlu0 %v5494, 64
    %v5795 = vpop.permute.xlu0 %5794
    %5798 = vst.msk [vmem:[#allocation2 + $0xd0] sm:$0xff] %vm5667, %v5793
    %5799 = vst.msk [vmem:[#allocation2 + $0xd8] sm:$0xff] %vm5667, %v5795
    %5802 = vrot.lane.b32.xlu0 %v5495, 64
    %v5803 = vpop.permute.xlu0 %5802
    %5804 = vrot.lane.b32.xlu0 %v5496, 64
    %v5805 = vpop.permute.xlu0 %5804
    %5808 = vst.msk [vmem:[#allocation2 + $0xe0] sm:$0xff] %vm5667, %v5803
    %5809 = vst.msk [vmem:[#allocation2 + $0xe8] sm:$0xff] %vm5667, %v5805
    %5812 = vrot.lane.b32.xlu0 %v5497, 64
    %v5813 = vpop.permute.xlu0 %5812
    %5814 = vrot.lane.b32.xlu0 %v5498, 64
    %v5815 = vpop.permute.xlu0 %5814
    %5818 = vst.msk [vmem:[#allocation2 + $0xf0] sm:$0xff] %vm5667, %v5813
    %5819 = vst.msk [vmem:[#allocation2 + $0xf8] sm:$0xff] %vm5667, %v5815
    %5822 = vrot.lane.b32.xlu0 %v5499, 64
    %v5823 = vpop.permute.xlu0 %5822
    %5824 = vrot.lane.b32.xlu0 %v5500, 64
    %v5825 = vpop.permute.xlu0 %5824
    %5828 = vst.msk [vmem:[#allocation2 + $0x100] sm:$0xff] %vm5667, %v5823
    %5829 = vst.msk [vmem:[#allocation2 + $0x108] sm:$0xff] %vm5667, %v5825
    %5832 = vrot.lane.b32.xlu0 %v5501, 64
    %v5833 = vpop.permute.xlu0 %5832
    %5834 = vrot.lane.b32.xlu0 %v5502, 64
    %v5835 = vpop.permute.xlu0 %5834
    %5838 = vst.msk [vmem:[#allocation2 + $0x110] sm:$0xff] %vm5667, %v5833
    %5839 = vst.msk [vmem:[#allocation2 + $0x118] sm:$0xff] %vm5667, %v5835
    %5842 = vrot.lane.b32.xlu0 %v5503, 64
    %v5843 = vpop.permute.xlu0 %5842
    %5844 = vrot.lane.b32.xlu0 %v5504, 64
    %v5845 = vpop.permute.xlu0 %5844
    %5848 = vst.msk [vmem:[#allocation2 + $0x120] sm:$0xff] %vm5667, %v5843
    %5849 = vst.msk [vmem:[#allocation2 + $0x128] sm:$0xff] %vm5667, %v5845
    %5852 = vrot.lane.b32.xlu0 %v5505, 64
    %v5853 = vpop.permute.xlu0 %5852
    %5854 = vrot.lane.b32.xlu0 %v5506, 64
    %v5855 = vpop.permute.xlu0 %5854
    %5858 = vst.msk [vmem:[#allocation2 + $0x130] sm:$0xff] %vm5667, %v5853
    %5859 = vst.msk [vmem:[#allocation2 + $0x138] sm:$0xff] %vm5667, %v5855
    %5862 = vrot.lane.b32.xlu0 %v5507, 64
    %v5863 = vpop.permute.xlu0 %5862
    %5864 = vrot.lane.b32.xlu0 %v5508, 64
    %v5865 = vpop.permute.xlu0 %5864
    %5868 = vst.msk [vmem:[#allocation2 + $0x140] sm:$0xff] %vm5667, %v5863
    %5869 = vst.msk [vmem:[#allocation2 + $0x148] sm:$0xff] %vm5667, %v5865
    %5872 = vrot.lane.b32.xlu0 %v5509, 64
    %v5873 = vpop.permute.xlu0 %5872
    %5874 = vrot.lane.b32.xlu0 %v5510, 64
    %v5875 = vpop.permute.xlu0 %5874
    %5878 = vst.msk [vmem:[#allocation2 + $0x150] sm:$0xff] %vm5667, %v5873
    %5879 = vst.msk [vmem:[#allocation2 + $0x158] sm:$0xff] %vm5667, %v5875
    %5882 = vrot.lane.b32.xlu0 %v5511, 64
    %v5883 = vpop.permute.xlu0 %5882
    %5884 = vrot.lane.b32.xlu0 %v5512, 64
    %v5885 = vpop.permute.xlu0 %5884
    %5888 = vst.msk [vmem:[#allocation2 + $0x160] sm:$0xff] %vm5667, %v5883
    %5889 = vst.msk [vmem:[#allocation2 + $0x168] sm:$0xff] %vm5667, %v5885
    %5892 = vrot.lane.b32.xlu0 %v5513, 64
    %v5893 = vpop.permute.xlu0 %5892
    %5894 = vrot.lane.b32.xlu0 %v5514, 64
    %v5895 = vpop.permute.xlu0 %5894
    %5898 = vst.msk [vmem:[#allocation2 + $0x170] sm:$0xff] %vm5667, %v5893
    %5899 = vst.msk [vmem:[#allocation2 + $0x178] sm:$0xff] %vm5667, %v5895
    %5902 = vrot.lane.b32.xlu0 %v5515, 64
    %v5903 = vpop.permute.xlu0 %5902
    %5904 = vrot.lane.b32.xlu0 %v5516, 64
    %v5905 = vpop.permute.xlu0 %5904
    %5908 = vst.msk [vmem:[#allocation2 + $0x180] sm:$0xff] %vm5667, %v5903
    %5909 = vst.msk [vmem:[#allocation2 + $0x188] sm:$0xff] %vm5667, %v5905
    %5912 = vrot.lane.b32.xlu0 %v5517, 64
    %v5913 = vpop.permute.xlu0 %5912
    %5914 = vrot.lane.b32.xlu0 %v5518, 64
    %v5915 = vpop.permute.xlu0 %5914
    %5918 = vst.msk [vmem:[#allocation2 + $0x190] sm:$0xff] %vm5667, %v5913
    %5919 = vst.msk [vmem:[#allocation2 + $0x198] sm:$0xff] %vm5667, %v5915
    %5922 = vrot.lane.b32.xlu0 %v5519, 64
    %v5923 = vpop.permute.xlu0 %5922
    %5924 = vrot.lane.b32.xlu0 %v5520, 64
    %v5925 = vpop.permute.xlu0 %5924
    %5928 = vst.msk [vmem:[#allocation2 + $0x1a0] sm:$0xff] %vm5667, %v5923
    %5929 = vst.msk [vmem:[#allocation2 + $0x1a8] sm:$0xff] %vm5667, %v5925
    %5932 = vrot.lane.b32.xlu0 %v5521, 64
    %v5933 = vpop.permute.xlu0 %5932
    %5934 = vrot.lane.b32.xlu0 %v5522, 64
    %v5935 = vpop.permute.xlu0 %5934
    %5938 = vst.msk [vmem:[#allocation2 + $0x1b0] sm:$0xff] %vm5667, %v5933
    %5939 = vst.msk [vmem:[#allocation2 + $0x1b8] sm:$0xff] %vm5667, %v5935
    %5942 = vrot.lane.b32.xlu0 %v5523, 64
    %v5943 = vpop.permute.xlu0 %5942
    %5944 = vrot.lane.b32.xlu0 %v5524, 64
    %v5945 = vpop.permute.xlu0 %5944
    %5948 = vst.msk [vmem:[#allocation2 + $0x1c0] sm:$0xff] %vm5667, %v5943
    %5949 = vst.msk [vmem:[#allocation2 + $0x1c8] sm:$0xff] %vm5667, %v5945
    %5952 = vrot.lane.b32.xlu0 %v5525, 64
    %v5953 = vpop.permute.xlu0 %5952
    %5954 = vrot.lane.b32.xlu0 %v5526, 64
    %v5955 = vpop.permute.xlu0 %5954
    %5958 = vst.msk [vmem:[#allocation2 + $0x1d0] sm:$0xff] %vm5667, %v5953
    %5959 = vst.msk [vmem:[#allocation2 + $0x1d8] sm:$0xff] %vm5667, %v5955
    %5962 = vrot.lane.b32.xlu0 %v5527, 64
    %v5963 = vpop.permute.xlu0 %5962
    %5964 = vrot.lane.b32.xlu0 %v5528, 64
    %v5965 = vpop.permute.xlu0 %5964
    %5968 = vst.msk [vmem:[#allocation2 + $0x1e0] sm:$0xff] %vm5667, %v5963
    %5969 = vst.msk [vmem:[#allocation2 + $0x1e8] sm:$0xff] %vm5667, %v5965
    %5972 = vrot.lane.b32.xlu0 %v5529, 64
    %v5973 = vpop.permute.xlu0 %5972
    %5974 = vrot.lane.b32.xlu0 %v5530, 64
    %v5975 = vpop.permute.xlu0 %5974
    %5978 = vst.msk [vmem:[#allocation2 + $0x1f0] sm:$0xff] %vm5667, %v5973
    %5979 = vst.msk [vmem:[#allocation2 + $0x1f8] sm:$0xff] %vm5667, %v5975
    // Predicated region
    $region18: #{rdb_conv_forward.1} parent=1 // pred_check
      _
    $region19: #{rdb_conv_forward.1} parent=1 // pred_check_branch
      %5981 = sbr.rel (0) target = $region21
    $region20: #{rdb_conv_forward.1} parent=1 // pred_region
      %5983 = vsyncadd [#allocation3], 0
      %s5984 = sshll.u32 [#allocation2], 4
      %s5985 = int_to_ptr.vmem [resolvable:$true] %s5984
      %s5986 = sshll.u32 %s4, 4
      %s5987 = int_to_ptr.hbm [resolvable:$true] %s5986
      %5992 = dma.vmem_to_hbm [thread:$0]  %s5985, 8192, %s5987, [#allocation3], 128, 128, 8
    $region21: #{rdb_conv_forward.1} parent=1 // pred_fallthru
      _
    // Predicated region
    $region22: #{rdb_conv_forward.1} parent=1 // pred_check
      _
    $region23: #{rdb_conv_forward.1} parent=1 // pred_check_branch
      %5994 = sbr.rel (0) target = $region25
    $region24: #{rdb_conv_forward.1} parent=1 // pred_region
      %5996 = dma.done [#allocation3], 8192
    $region25: #{rdb_conv_forward.1} parent=1 // pred_fallthru
      _
    %5997 = vsyncpa [#allocation3], 1

</llo_original>
